<compile_context>
chip_gen: v5e
topology: v5e:2x2
jax: 0.10.0
libtpu: 0.0.40
codegen_flags: <defaults>
</compile_context>

<pallas_src>
import functools

import jax
import jax.numpy as jnp
from jax.experimental import pallas as pl
from jax.experimental.pallas import tpu as pltpu


# ---------------------------------------------------------------------------
# Kernel 0: node-table precompute  fs = feat @ W1_src,  fd = feat @ W1_dst
# ---------------------------------------------------------------------------
def node_precompute_kernel(feat_ref, w1s_ref, w1d_ref, fs_ref, fd_ref):
    feat = feat_ref[...]
    fs_ref[...] = jnp.dot(feat, w1s_ref[...], preferred_element_type=jnp.float32)
    fd_ref[...] = jnp.dot(feat, w1d_ref[...], preferred_element_type=jnp.float32)


# ---------------------------------------------------------------------------
# Kernel 1: per-edge message network + soft edge gating (tiled over edges)
#   endpoint gather = one-hot(edge_tile, N_pad) @ premultiplied node table (MXU)
# ---------------------------------------------------------------------------
def message_kernel(src_ref, dst_ref, d_ref,
                   fs_ref, fd_ref,
                   w1e_ref, w2_ref, b12_ref,
                   wse_ref, bse_ref,
                   newd_ref, m_ref, *, n_pad):
    d = d_ref[...]
    edge_tile = d.shape[0]

    # On-the-fly gather one-hots (VPU iota+compare; matmul does the gather).
    col = jax.lax.broadcasted_iota(jnp.int32, (edge_tile, n_pad), 1)
    oh_src = (col == src_ref[...]).astype(jnp.float32)        # (edge_tile, N_pad)
    oh_dst = (col == dst_ref[...]).astype(jnp.float32)

    # concat([src, dst, d]) @ W1  ==  feat[src]@W1s + feat[dst]@W1d + d@W1e
    #                            ==  oh_src@fs    + oh_dst@fd     + d@W1e
    h1 = (jnp.dot(oh_src, fs_ref[...], preferred_element_type=jnp.float32)
          + jnp.dot(oh_dst, fd_ref[...], preferred_element_type=jnp.float32)
          + jnp.dot(d, w1e_ref[...], preferred_element_type=jnp.float32)
          + b12_ref[0:1, :])
    h1 = jnp.maximum(h1, 0.0)                                  # mid_activation = relu
    msg = (jnp.dot(h1, w2_ref[...], preferred_element_type=jnp.float32)
           + b12_ref[1:2, :])
    msg = jnp.maximum(msg, 0.0)                                # last_activation = relu
    newd_ref[...] = d + msg                                    # edges.data['d'] += message

    # soft edge gate as an MXU matvec (keeps VPU/XLU off the critical path)
    gate = jax.nn.sigmoid(
        jnp.dot(msg, wse_ref[...], preferred_element_type=jnp.float32)
        + bse_ref[0, 0])
    m_ref[...] = msg * gate                                    # gated message 'm'


# ---------------------------------------------------------------------------
# Kernel 2: scatter-sum reduce (on-the-fly one-hot @ m on the MXU) + update MLP
#   grid = (node-tiles [parallel], edge-tiles [arbitrary reduction])
# ---------------------------------------------------------------------------
def update_kernel(dst_ref, m_ref, feat_ref,
                  wu1_ref, wu2_ref, bu_ref,
                  out_ref, acc_ref, *, node_tile, edge_tile):
    e = pl.program_id(1)

    @pl.when(e == 0)
    def _():
        acc_ref[...] = jnp.zeros_like(acc_ref)

    # (node_tile, edge_tile) slice of the dst-incidence matrix, built on the fly;
    # the scatter-add becomes an MXU matmul and no O(N*E) array ever hits HBM.
    n0 = pl.program_id(0) * node_tile
    row_ids = n0 + jax.lax.broadcasted_iota(jnp.int32, (node_tile, edge_tile), 0)
    onehot = (row_ids == dst_ref[...]).astype(jnp.float32)     # (node_tile, edge_tile)
    acc_ref[...] += jnp.dot(onehot, m_ref[...],
                            preferred_element_type=jnp.float32)

    @pl.when(e == pl.num_programs(1) - 1)
    def _():
        feat = feat_ref[...]
        x = acc_ref[...] + feat
        h = jnp.maximum(
            jnp.dot(x, wu1_ref[...], preferred_element_type=jnp.float32)
            + bu_ref[0:1, :], 0.0)
        h_new = (jnp.dot(h, wu2_ref[...], preferred_element_type=jnp.float32)
                 + bu_ref[1:2, :])
        out_ref[...] = h_new + feat                            # residual: h_new + h


def net3d_layer_pallas(node_feat, edge_d, src_idx, dst_idx, params,
                       *, edge_tile=256, node_tile=128):
    N, H = node_feat.shape
    E = edge_d.shape[0]
    E_pad = pl.cdiv(E, edge_tile) * edge_tile
    N_pad = pl.cdiv(N, node_tile) * node_tile

    # Pad to full tiles (no silent tail drop).  Padded edges: src/dst index 0
    # for the gather (valid, result discarded) and dst sentinel N_pad for the
    # scatter (matches no node row).  Padded node rows are sliced off at the end.
    feat_p = jnp.pad(node_feat, ((0, N_pad - N), (0, 0)))
    d_p = jnp.pad(edge_d, ((0, E_pad - E), (0, 0)))
    src_col = jnp.pad(src_idx.astype(jnp.int32), (0, E_pad - E)).reshape(E_pad, 1)
    dst_col = jnp.pad(dst_idx.astype(jnp.int32), (0, E_pad - E)).reshape(E_pad, 1)
    dst_row = jnp.pad(dst_idx.astype(jnp.int32), (0, E_pad - E),
                      constant_values=N_pad).reshape(1, E_pad)

    b12 = jnp.concatenate([params["b1"], params["b2"]], axis=0)   # (2, H)
    bu = jnp.concatenate([params["bu1"], params["bu2"]], axis=0)  # (2, H)

    # --- Kernel 0: premultiplied node tables (runs once, node-tiled) -----------
    node_spec = lambda: pl.BlockSpec((node_tile, H), lambda i: (i, 0))
    fs, fd = pl.pallas_call(
        node_precompute_kernel,
        out_shape=(jax.ShapeDtypeStruct((N_pad, H), jnp.float32),
                   jax.ShapeDtypeStruct((N_pad, H), jnp.float32)),
        grid=(N_pad // node_tile,),
        in_specs=[node_spec(),
                  pl.BlockSpec((H, H), lambda i: (0, 0)),
                  pl.BlockSpec((H, H), lambda i: (0, 0))],
        out_specs=(node_spec(), node_spec()),
        compiler_params=pltpu.CompilerParams(dimension_semantics=("parallel",)),
    )(feat_p, params["w1s"], params["w1d"])

    # --- Kernel 1: edge messages (edge axis parallel / megacore-shardable) -----
    edge_spec = lambda: pl.BlockSpec((edge_tile, H), lambda i: (i, 0))
    idx_spec = lambda: pl.BlockSpec((edge_tile, 1), lambda i: (i, 0))
    const = lambda shape: pl.BlockSpec(shape, lambda i: (0, 0))

    new_d, m = pl.pallas_call(
        functools.partial(message_kernel, n_pad=N_pad),
        out_shape=(jax.ShapeDtypeStruct((E_pad, H), jnp.float32),
                   jax.ShapeDtypeStruct((E_pad, H), jnp.float32)),
        grid=(E_pad // edge_tile,),
        in_specs=[
            idx_spec(), idx_spec(), edge_spec(),
            const((N_pad, H)), const((N_pad, H)),
            const((H, H)), const((H, H)), const((2, H)),
            const((H, 1)),
            pl.BlockSpec(memory_space=pltpu.MemorySpace.SMEM),   # scalar gate bias
        ],
        out_specs=(edge_spec(), edge_spec()),
        compiler_params=pltpu.CompilerParams(
            dimension_semantics=("parallel",)),
    )(src_col, dst_col, d_p, fs, fd,
      params["w1e"], params["w2"], b12, params["wse"], params["bse"])

    # --- Kernel 2: scatter-sum + update MLP ------------------------------------
    new_feat = pl.pallas_call(
        functools.partial(update_kernel, node_tile=node_tile, edge_tile=edge_tile),
        out_shape=jax.ShapeDtypeStruct((N_pad, H), jnp.float32),
        grid=(N_pad // node_tile, E_pad // edge_tile),
        in_specs=[
            pl.BlockSpec((1, edge_tile), lambda n, e: (0, e)),    # dst ids (lane layout)
            pl.BlockSpec((edge_tile, H), lambda n, e: (e, 0)),    # gated messages m
            pl.BlockSpec((node_tile, H), lambda n, e: (n, 0)),    # node feats
            pl.BlockSpec((H, H), lambda n, e: (0, 0)),            # wu1
            pl.BlockSpec((H, H), lambda n, e: (0, 0)),            # wu2
            pl.BlockSpec((2, H), lambda n, e: (0, 0)),            # (bu1; bu2)
        ],
        out_specs=pl.BlockSpec((node_tile, H), lambda n, e: (n, 0)),
        scratch_shapes=[pltpu.VMEM((node_tile, H), jnp.float32)],
        compiler_params=pltpu.CompilerParams(
            dimension_semantics=("parallel", "arbitrary")),
    )(dst_row, m, feat_p, params["wu1"], params["wu2"], bu)

    return new_feat[:N], new_d[:E]


# ---------------------------------------------------------------------------
# Pure-JAX reference for correctness check
# ---------------------------------------------------------------------------
def net3d_layer_ref(node_feat, edge_d, src_idx, dst_idx, p):
    N, H = node_feat.shape
    src = node_feat[src_idx]
    dst = node_feat[dst_idx]
    h1 = jnp.maximum(src @ p["w1s"] + dst @ p["w1d"] + edge_d @ p["w1e"] + p["b1"], 0.0)
    msg = jnp.maximum(h1 @ p["w2"] + p["b2"], 0.0)
    new_d = edge_d + msg
    gate = jax.nn.sigmoid(msg @ p["wse"] + p["bse"])
    m = msg * gate
    m_sum = jax.ops.segment_sum(m, dst_idx, num_segments=N)
    x = m_sum + node_feat
    h = jnp.maximum(x @ p["wu1"] + p["bu1"], 0.0)
    h_new = h @ p["wu2"] + p["bu2"]
    return h_new + node_feat, new_d


def init_params(key, H):
    ks = jax.random.split(key, 8)
    s = 0.1
    return {
        # message_network: Linear(3H -> H) split row-wise, Linear(H -> H)
        "w1s": s * jax.random.normal(ks[0], (H, H), jnp.float32),
        "w1d": s * jax.random.normal(ks[1], (H, H), jnp.float32),
        "w1e": s * jax.random.normal(ks[2], (H, H), jnp.float32),
        "b1": jnp.zeros((1, H), jnp.float32),
        "w2": s * jax.random.normal(ks[3], (H, H), jnp.float32),
        "b2": jnp.zeros((1, H), jnp.float32),
        # soft_edge_network: Linear(H -> 1)
        "wse": s * jax.random.normal(ks[4], (H, 1), jnp.float32),
        "bse": jnp.zeros((1, 1), jnp.float32),
        # update_network: Linear(H -> H), Linear(H -> H)
        "wu1": s * jax.random.normal(ks[5], (H, H), jnp.float32),
        "bu1": jnp.zeros((1, H), jnp.float32),
        "wu2": s * jax.random.normal(ks[6], (H, H), jnp.float32),
        "bu2": jnp.zeros((1, H), jnp.float32),
    }


if __name__ == "__main__":
    # hidden_dim lane-dense (128); E deliberately not a multiple of edge_tile
    # to exercise the padded tail path.
    N, E, H = 64, 500, 128

    key = jax.random.PRNGKey(0)
    k_feat, k_d, k_src, k_dst, k_param = jax.random.split(key, 5)

    node_feat = jax.random.normal(k_feat, (N, H), jnp.float32)
    edge_d = jax.random.normal(k_d, (E, H), jnp.float32)
    src_idx = jax.random.randint(k_src, (E,), 0, N, dtype=jnp.int32)
    dst_idx = jax.random.randint(k_dst, (E,), 0, N, dtype=jnp.int32)
    params = init_params(k_param, H)

    new_feat, new_d = jax.jit(net3d_layer_pallas)(
        node_feat, edge_d, src_idx, dst_idx, params)
    jax.block_until_ready((new_feat, new_d))

    ref_feat, ref_d = net3d_layer_ref(node_feat, edge_d, src_idx, dst_idx, params)
    assert new_feat.shape == (N, H) and new_d.shape == (E, H)
    assert jnp.allclose(new_feat, ref_feat, atol=1e-2, rtol=1e-2), "node feat mismatch"
    assert jnp.allclose(new_d, ref_d, atol=1e-2, rtol=1e-2), "edge d mismatch"

    print("KERNEL_OK")
</pallas_src>

<mosaic_0001>
module attributes {stable_mosaic.version = 11 : i64} {
  func.func @message_kernel(%arg0: i32, %arg1: memref<256x1xi32, #tpu.memory_space<vmem>>, %arg2: memref<256x1xi32, #tpu.memory_space<vmem>>, %arg3: memref<256x128xf32, #tpu.memory_space<vmem>>, %arg4: memref<128x128xf32, #tpu.memory_space<vmem>>, %arg5: memref<128x128xf32, #tpu.memory_space<vmem>>, %arg6: memref<128x128xf32, #tpu.memory_space<vmem>>, %arg7: memref<128x128xf32, #tpu.memory_space<vmem>>, %arg8: memref<2x128xf32, #tpu.memory_space<vmem>>, %arg9: memref<128x1xf32, #tpu.memory_space<vmem>>, %arg10: memref<1x1xf32, #tpu.memory_space<smem>>, %arg11: memref<256x128xf32, #tpu.memory_space<vmem>>, %arg12: memref<256x128xf32, #tpu.memory_space<vmem>>) attributes {dimension_semantics = [#tpu.dimension_semantics<parallel>], iteration_bounds = array<i64: 2>, scalar_prefetch = 0 : i64, scratch_operands = 0 : i64, tpu.core_type = #tpu.core_type<tc>, window_params = [{transform_indices = @transform_0, window_bounds = array<i64: 256, 1>}, {transform_indices = @transform_1, window_bounds = array<i64: 256, 1>}, {transform_indices = @transform_2, window_bounds = array<i64: 256, 128>}, {pipeline_mode = #tpu.pipeline_mode<synchronous>, transform_indices = @transform_3, window_bounds = array<i64: 128, 128>}, {pipeline_mode = #tpu.pipeline_mode<synchronous>, transform_indices = @transform_4, window_bounds = array<i64: 128, 128>}, {pipeline_mode = #tpu.pipeline_mode<synchronous>, transform_indices = @transform_5, window_bounds = array<i64: 128, 128>}, {pipeline_mode = #tpu.pipeline_mode<synchronous>, transform_indices = @transform_6, window_bounds = array<i64: 128, 128>}, {pipeline_mode = #tpu.pipeline_mode<synchronous>, transform_indices = @transform_7, window_bounds = array<i64: 2, 128>}, {pipeline_mode = #tpu.pipeline_mode<synchronous>, transform_indices = @transform_8, window_bounds = array<i64: 128, 1>}, {transform_indices = @transform_9, window_bounds = array<i64: 1, 1>}, {transform_indices = @transform_10, window_bounds = array<i64: 256, 128>}, {transform_indices = @transform_11, window_bounds = array<i64: 256, 128>}]} {
    %c0 = arith.constant 0 : index
    %c0_0 = arith.constant 0 : index
    %0 = vector.load %arg3[%c0, %c0_0] : memref<256x128xf32, #tpu.memory_space<vmem>>, vector<256x128xf32>
    %1 = tpu.iota {dimensions = array<i32: 1>} : vector<256x128xi32>
    %c0_1 = arith.constant 0 : index
    %c0_2 = arith.constant 0 : index
    %2 = vector.load %arg1[%c0_1, %c0_2] : memref<256x1xi32, #tpu.memory_space<vmem>>, vector<256x1xi32>
    %3 = vector.broadcast %2 : vector<256x1xi32> to vector<256x128xi32>
    %4 = arith.cmpi eq, %1, %3 : vector<256x128xi32>
    %5 = arith.extui %4 : vector<256x128xi1> to vector<256x128xi32>
    %6 = arith.sitofp %5 : vector<256x128xi32> to vector<256x128xf32>
    %c0_3 = arith.constant 0 : index
    %c0_4 = arith.constant 0 : index
    %7 = vector.load %arg2[%c0_3, %c0_4] : memref<256x1xi32, #tpu.memory_space<vmem>>, vector<256x1xi32>
    %8 = vector.broadcast %7 : vector<256x1xi32> to vector<256x128xi32>
    %9 = arith.cmpi eq, %1, %8 : vector<256x128xi32>
    %10 = arith.extui %9 : vector<256x128xi1> to vector<256x128xi32>
    %11 = arith.sitofp %10 : vector<256x128xi32> to vector<256x128xf32>
    %c0_5 = arith.constant 0 : index
    %c0_6 = arith.constant 0 : index
    %12 = vector.load %arg4[%c0_5, %c0_6] : memref<128x128xf32, #tpu.memory_space<vmem>>, vector<128x128xf32>
    %cst = arith.constant dense<0.000000e+00> : vector<256x128xf32>
    %13 = tpu.matmul %6, %12, %cst {dimension_numbers = #tpu.dot_dimension_numbers<[1], [0], [0], [1], [0, 0, 1, 1], [], []>} : vector<256x128xf32>, vector<128x128xf32>, vector<256x128xf32> -> vector<256x128xf32>
    %c0_7 = arith.constant 0 : index
    %c0_8 = arith.constant 0 : index
    %14 = vector.load %arg5[%c0_7, %c0_8] : memref<128x128xf32, #tpu.memory_space<vmem>>, vector<128x128xf32>
    %cst_9 = arith.constant dense<0.000000e+00> : vector<256x128xf32>
    %15 = tpu.matmul %11, %14, %cst_9 {dimension_numbers = #tpu.dot_dimension_numbers<[1], [0], [0], [1], [0, 0, 1, 1], [], []>} : vector<256x128xf32>, vector<128x128xf32>, vector<256x128xf32> -> vector<256x128xf32>
    %16 = arith.addf %13, %15 : vector<256x128xf32>
    %c0_10 = arith.constant 0 : index
    %c0_11 = arith.constant 0 : index
    %17 = vector.load %arg6[%c0_10, %c0_11] : memref<128x128xf32, #tpu.memory_space<vmem>>, vector<128x128xf32>
    %cst_12 = arith.constant dense<0.000000e+00> : vector<256x128xf32>
    %18 = tpu.matmul %0, %17, %cst_12 {dimension_numbers = #tpu.dot_dimension_numbers<[1], [0], [0], [1], [0, 0, 1, 1], [], []>} : vector<256x128xf32>, vector<128x128xf32>, vector<256x128xf32> -> vector<256x128xf32>
    %19 = arith.addf %16, %18 : vector<256x128xf32>
    %c0_13 = arith.constant 0 : index
    %c0_14 = arith.constant 0 : index
    %20 = vector.load %arg8[%c0_13, %c0_14] : memref<2x128xf32, #tpu.memory_space<vmem>>, vector<1x128xf32>
    %21 = vector.broadcast %20 : vector<1x128xf32> to vector<256x128xf32>
    %22 = arith.addf %19, %21 : vector<256x128xf32>
    %cst_15 = arith.constant 0.000000e+00 : f32
    %23 = vector.broadcast %cst_15 : f32 to vector<256x128xf32>
    %24 = arith.maximumf %22, %23 : vector<256x128xf32>
    %c0_16 = arith.constant 0 : index
    %c0_17 = arith.constant 0 : index
    %25 = vector.load %arg7[%c0_16, %c0_17] : memref<128x128xf32, #tpu.memory_space<vmem>>, vector<128x128xf32>
    %cst_18 = arith.constant dense<0.000000e+00> : vector<256x128xf32>
    %26 = tpu.matmul %24, %25, %cst_18 {dimension_numbers = #tpu.dot_dimension_numbers<[1], [0], [0], [1], [0, 0, 1, 1], [], []>} : vector<256x128xf32>, vector<128x128xf32>, vector<256x128xf32> -> vector<256x128xf32>
    %c1 = arith.constant 1 : index
    %c0_19 = arith.constant 0 : index
    %27 = vector.load %arg8[%c1, %c0_19] : memref<2x128xf32, #tpu.memory_space<vmem>>, vector<1x128xf32>
    %28 = vector.broadcast %27 : vector<1x128xf32> to vector<256x128xf32>
    %29 = arith.addf %26, %28 : vector<256x128xf32>
    %cst_20 = arith.constant 0.000000e+00 : f32
    %30 = vector.broadcast %cst_20 : f32 to vector<256x128xf32>
    %31 = arith.maximumf %29, %30 : vector<256x128xf32>
    %32 = arith.addf %0, %31 : vector<256x128xf32>
    %c0_21 = arith.constant 0 : index
    %c0_22 = arith.constant 0 : index
    %33 = vector.load %arg11[%c0_21, %c0_22] : memref<256x128xf32, #tpu.memory_space<vmem>>, vector<256x128xf32>
    tpu.vector_store %arg11[%c0_21, %c0_22], %32 {strides = array<i32>} : memref<256x128xf32, #tpu.memory_space<vmem>>, vector<256x128xf32>,
    %c0_23 = arith.constant 0 : index
    %c0_24 = arith.constant 0 : index
    %34 = vector.load %arg9[%c0_23, %c0_24] : memref<128x1xf32, #tpu.memory_space<vmem>>, vector<128x1xf32>
    %cst_25 = arith.constant dense<0.000000e+00> : vector<256x1xf32>
    %35 = tpu.matmul %31, %34, %cst_25 {dimension_numbers = #tpu.dot_dimension_numbers<[1], [0], [0], [1], [0, 0, 1, 1], [], []>} : vector<256x128xf32>, vector<128x1xf32>, vector<256x1xf32> -> vector<256x1xf32>
    %c0_26 = arith.constant 0 : index
    %c0_27 = arith.constant 0 : index
    %36 = memref.load %arg10[%c0_26, %c0_27] : memref<1x1xf32, #tpu.memory_space<smem>>
    %37 = vector.broadcast %36 : f32 to vector<256x1xf32>
    %38 = arith.addf %35, %37 : vector<256x1xf32>
    %39 = arith.negf %38 : vector<256x1xf32>
    %40 = math.exp %39 : vector<256x1xf32>
    %cst_28 = arith.constant 1.000000e+00 : f32
    %41 = vector.broadcast %cst_28 : f32 to vector<256x1xf32>
    %42 = arith.addf %41, %40 : vector<256x1xf32>
    %43 = arith.divf %41, %42 : vector<256x1xf32>
    %44 = vector.broadcast %43 : vector<256x1xf32> to vector<256x128xf32>
    %45 = arith.mulf %31, %44 : vector<256x128xf32>
    %c0_29 = arith.constant 0 : index
    %c0_30 = arith.constant 0 : index
    %46 = vector.load %arg12[%c0_29, %c0_30] : memref<256x128xf32, #tpu.memory_space<vmem>>, vector<256x128xf32>
    tpu.vector_store %arg12[%c0_29, %c0_30], %45 {strides = array<i32>} : memref<256x128xf32, #tpu.memory_space<vmem>>, vector<256x128xf32>,
    return
  }
  func.func @transform_0(%arg0: i32) -> (i32, i32) {
    %c0_i32 = arith.constant 0 : i32
    %c0_i32_0 = arith.constant 0 : i32
    return %arg0, %c0_i32 : i32, i32
  }
  func.func @transform_1(%arg0: i32) -> (i32, i32) {
    %c0_i32 = arith.constant 0 : i32
    %c0_i32_0 = arith.constant 0 : i32
    return %arg0, %c0_i32 : i32, i32
  }
  func.func @transform_2(%arg0: i32) -> (i32, i32) {
    %c0_i32 = arith.constant 0 : i32
    %c0_i32_0 = arith.constant 0 : i32
    return %arg0, %c0_i32 : i32, i32
  }
  func.func @transform_3(%arg0: i32) -> (i32, i32) {
    %c0_i32 = arith.constant 0 : i32
    %c0_i32_0 = arith.constant 0 : i32
    %c0_i32_1 = arith.constant 0 : i32
    return %c0_i32, %c0_i32_0 : i32, i32
  }
  func.func @transform_4(%arg0: i32) -> (i32, i32) {
    %c0_i32 = arith.constant 0 : i32
    %c0_i32_0 = arith.constant 0 : i32
    %c0_i32_1 = arith.constant 0 : i32
    return %c0_i32, %c0_i32_0 : i32, i32
  }
  func.func @transform_5(%arg0: i32) -> (i32, i32) {
    %c0_i32 = arith.constant 0 : i32
    %c0_i32_0 = arith.constant 0 : i32
    %c0_i32_1 = arith.constant 0 : i32
    return %c0_i32, %c0_i32_0 : i32, i32
  }
  func.func @transform_6(%arg0: i32) -> (i32, i32) {
    %c0_i32 = arith.constant 0 : i32
    %c0_i32_0 = arith.constant 0 : i32
    %c0_i32_1 = arith.constant 0 : i32
    return %c0_i32, %c0_i32_0 : i32, i32
  }
  func.func @transform_7(%arg0: i32) -> (i32, i32) {
    %c0_i32 = arith.constant 0 : i32
    %c0_i32_0 = arith.constant 0 : i32
    %c0_i32_1 = arith.constant 0 : i32
    return %c0_i32, %c0_i32_0 : i32, i32
  }
  func.func @transform_8(%arg0: i32) -> (i32, i32) {
    %c0_i32 = arith.constant 0 : i32
    %c0_i32_0 = arith.constant 0 : i32
    %c0_i32_1 = arith.constant 0 : i32
    return %c0_i32, %c0_i32_0 : i32, i32
  }
  func.func @transform_9(%arg0: i32) -> (i32, i32) {
    %c0_i32 = arith.constant 0 : i32
    %c0_i32_0 = arith.constant 0 : i32
    %c0_i32_1 = arith.constant 0 : i32
    return %c0_i32, %c0_i32_0 : i32, i32
  }
  func.func @transform_10(%arg0: i32) -> (i32, i32) {
    %c0_i32 = arith.constant 0 : i32
    %c0_i32_0 = arith.constant 0 : i32
    return %arg0, %c0_i32 : i32, i32
  }
  func.func @transform_11(%arg0: i32) -> (i32, i32) {
    %c0_i32 = arith.constant 0 : i32
    %c0_i32_0 = arith.constant 0 : i32
    return %arg0, %c0_i32 : i32, i32
  }
}

module attributes {stable_mosaic.version = 11 : i64} {
  func.func @node_precompute_kernel(%arg0: i32, %arg1: memref<128x128xf32, #tpu.memory_space<vmem>>, %arg2: memref<128x128xf32, #tpu.memory_space<vmem>>, %arg3: memref<128x128xf32, #tpu.memory_space<vmem>>, %arg4: memref<128x128xf32, #tpu.memory_space<vmem>>, %arg5: memref<128x128xf32, #tpu.memory_space<vmem>>) attributes {dimension_semantics = [#tpu.dimension_semantics<parallel>], iteration_bounds = array<i64: 1>, scalar_prefetch = 0 : i64, scratch_operands = 0 : i64, tpu.core_type = #tpu.core_type<tc>, window_params = [{transform_indices = @transform_0, window_bounds = array<i64: 128, 128>}, {pipeline_mode = #tpu.pipeline_mode<synchronous>, transform_indices = @transform_1, window_bounds = array<i64: 128, 128>}, {pipeline_mode = #tpu.pipeline_mode<synchronous>, transform_indices = @transform_2, window_bounds = array<i64: 128, 128>}, {transform_indices = @transform_3, window_bounds = array<i64: 128, 128>}, {transform_indices = @transform_4, window_bounds = array<i64: 128, 128>}]} {
    %c0 = arith.constant 0 : index
    %c0_0 = arith.constant 0 : index
    %0 = vector.load %arg1[%c0, %c0_0] : memref<128x128xf32, #tpu.memory_space<vmem>>, vector<128x128xf32>
    %c0_1 = arith.constant 0 : index
    %c0_2 = arith.constant 0 : index
    %1 = vector.load %arg2[%c0_1, %c0_2] : memref<128x128xf32, #tpu.memory_space<vmem>>, vector<128x128xf32>
    %cst = arith.constant dense<0.000000e+00> : vector<128x128xf32>
    %2 = tpu.matmul %0, %1, %cst {dimension_numbers = #tpu.dot_dimension_numbers<[1], [0], [0], [1], [0, 0, 1, 1], [], []>} : vector<128x128xf32>, vector<128x128xf32>, vector<128x128xf32> -> vector<128x128xf32>
    %c0_3 = arith.constant 0 : index
    %c0_4 = arith.constant 0 : index
    %3 = vector.load %arg4[%c0_3, %c0_4] : memref<128x128xf32, #tpu.memory_space<vmem>>, vector<128x128xf32>
    tpu.vector_store %arg4[%c0_3, %c0_4], %2 {strides = array<i32>} : memref<128x128xf32, #tpu.memory_space<vmem>>, vector<128x128xf32>,
    %c0_5 = arith.constant 0 : index
    %c0_6 = arith.constant 0 : index
    %4 = vector.load %arg3[%c0_5, %c0_6] : memref<128x128xf32, #tpu.memory_space<vmem>>, vector<128x128xf32>
    %cst_7 = arith.constant dense<0.000000e+00> : vector<128x128xf32>
    %5 = tpu.matmul %0, %4, %cst_7 {dimension_numbers = #tpu.dot_dimension_numbers<[1], [0], [0], [1], [0, 0, 1, 1], [], []>} : vector<128x128xf32>, vector<128x128xf32>, vector<128x128xf32> -> vector<128x128xf32>
    %c0_8 = arith.constant 0 : index
    %c0_9 = arith.constant 0 : index
    %6 = vector.load %arg5[%c0_8, %c0_9] : memref<128x128xf32, #tpu.memory_space<vmem>>, vector<128x128xf32>
    tpu.vector_store %arg5[%c0_8, %c0_9], %5 {strides = array<i32>} : memref<128x128xf32, #tpu.memory_space<vmem>>, vector<128x128xf32>,
    return
  }
  func.func @transform_0(%arg0: i32) -> (i32, i32) {
    %c0_i32 = arith.constant 0 : i32
    %c0_i32_0 = arith.constant 0 : i32
    return %arg0, %c0_i32 : i32, i32
  }
  func.func @transform_1(%arg0: i32) -> (i32, i32) {
    %c0_i32 = arith.constant 0 : i32
    %c0_i32_0 = arith.constant 0 : i32
    %c0_i32_1 = arith.constant 0 : i32
    return %c0_i32, %c0_i32_0 : i32, i32
  }
  func.func @transform_2(%arg0: i32) -> (i32, i32) {
    %c0_i32 = arith.constant 0 : i32
    %c0_i32_0 = arith.constant 0 : i32
    %c0_i32_1 = arith.constant 0 : i32
    return %c0_i32, %c0_i32_0 : i32, i32
  }
  func.func @transform_3(%arg0: i32) -> (i32, i32) {
    %c0_i32 = arith.constant 0 : i32
    %c0_i32_0 = arith.constant 0 : i32
    return %arg0, %c0_i32 : i32, i32
  }
  func.func @transform_4(%arg0: i32) -> (i32, i32) {
    %c0_i32 = arith.constant 0 : i32
    %c0_i32_0 = arith.constant 0 : i32
    return %arg0, %c0_i32 : i32, i32
  }
}

module attributes {stable_mosaic.version = 11 : i64} {
  func.func @update_kernel(%arg0: i32, %arg1: i32, %arg2: memref<1x256xi32, #tpu.memory_space<vmem>>, %arg3: memref<256x128xf32, #tpu.memory_space<vmem>>, %arg4: memref<128x128xf32, #tpu.memory_space<vmem>>, %arg5: memref<128x128xf32, #tpu.memory_space<vmem>>, %arg6: memref<128x128xf32, #tpu.memory_space<vmem>>, %arg7: memref<2x128xf32, #tpu.memory_space<vmem>>, %arg8: memref<128x128xf32, #tpu.memory_space<vmem>>, %arg9: memref<128x128xf32, #tpu.memory_space<vmem>>) attributes {dimension_semantics = [#tpu.dimension_semantics<parallel>, #tpu.dimension_semantics<arbitrary>], iteration_bounds = array<i64: 1, 2>, scalar_prefetch = 0 : i64, scratch_operands = 1 : i64, tpu.core_type = #tpu.core_type<tc>, window_params = [{transform_indices = @transform_0, window_bounds = array<i64: 1, 256>}, {transform_indices = @transform_1, window_bounds = array<i64: 256, 128>}, {transform_indices = @transform_2, window_bounds = array<i64: 128, 128>}, {pipeline_mode = #tpu.pipeline_mode<synchronous>, transform_indices = @transform_3, window_bounds = array<i64: 128, 128>}, {pipeline_mode = #tpu.pipeline_mode<synchronous>, transform_indices = @transform_4, window_bounds = array<i64: 128, 128>}, {pipeline_mode = #tpu.pipeline_mode<synchronous>, transform_indices = @transform_5, window_bounds = array<i64: 2, 128>}, {transform_indices = @transform_6, window_bounds = array<i64: 128, 128>}]} {
    %c0_i32 = arith.constant 0 : i32
    %0 = arith.cmpi eq, %arg1, %c0_i32 : i32
    %1 = arith.extui %0 : i1 to i32
    %c0_i32_0 = arith.constant 0 : i32
    %2 = arith.cmpi ne, %1, %c0_i32_0 : i32
    scf.if %2 {
      %cst_9 = arith.constant 0.000000e+00 : f32
      %20 = vector.broadcast %cst_9 : f32 to vector<128x128xf32>
      %c0_10 = arith.constant 0 : index
      %c0_11 = arith.constant 0 : index
      %21 = vector.load %arg9[%c0_10, %c0_11] : memref<128x128xf32, #tpu.memory_space<vmem>>, vector<128x128xf32>
      tpu.vector_store %arg9[%c0_10, %c0_11], %20 {strides = array<i32>} : memref<128x128xf32, #tpu.memory_space<vmem>>, vector<128x128xf32>,
    } else {
    }
    %c128_i32 = arith.constant 128 : i32
    %3 = arith.muli %arg0, %c128_i32 : i32
    %4 = tpu.iota {dimensions = array<i32: 0>} : vector<128x256xi32>
    %5 = vector.broadcast %3 : i32 to vector<128x256xi32>
    %6 = arith.addi %5, %4 : vector<128x256xi32>
    %c0 = arith.constant 0 : index
    %c0_1 = arith.constant 0 : index
    %7 = vector.load %arg2[%c0, %c0_1] : memref<1x256xi32, #tpu.memory_space<vmem>>, vector<1x256xi32>
    %8 = vector.broadcast %7 : vector<1x256xi32> to vector<128x256xi32>
    %9 = arith.cmpi eq, %6, %8 : vector<128x256xi32>
    %10 = arith.extui %9 : vector<128x256xi1> to vector<128x256xi32>
    %11 = arith.sitofp %10 : vector<128x256xi32> to vector<128x256xf32>
    %c0_2 = arith.constant 0 : index
    %c0_3 = arith.constant 0 : index
    %12 = vector.load %arg9[%c0_2, %c0_3] : memref<128x128xf32, #tpu.memory_space<vmem>>, vector<128x128xf32>
    %c0_4 = arith.constant 0 : index
    %c0_5 = arith.constant 0 : index
    %13 = vector.load %arg3[%c0_4, %c0_5] : memref<256x128xf32, #tpu.memory_space<vmem>>, vector<256x128xf32>
    %cst = arith.constant dense<0.000000e+00> : vector<128x128xf32>
    %14 = tpu.matmul %11, %13, %cst {dimension_numbers = #tpu.dot_dimension_numbers<[1], [0], [0], [1], [0, 0, 1, 1], [], []>} : vector<128x256xf32>, vector<256x128xf32>, vector<128x128xf32> -> vector<128x128xf32>
    %15 = arith.addf %12, %14 : vector<128x128xf32>
    %c0_6 = arith.constant 0 : index
    %c0_7 = arith.constant 0 : index
    %16 = vector.load %arg9[%c0_6, %c0_7] : memref<128x128xf32, #tpu.memory_space<vmem>>, vector<128x128xf32>
    tpu.vector_store %arg9[%c0_6, %c0_7], %15 {strides = array<i32>} : memref<128x128xf32, #tpu.memory_space<vmem>>, vector<128x128xf32>,
    %c1_i32 = arith.constant 1 : i32
    %17 = arith.cmpi eq, %arg1, %c1_i32 : i32
    %18 = arith.extui %17 : i1 to i32
    %c0_i32_8 = arith.constant 0 : i32
    %19 = arith.cmpi ne, %18, %c0_i32_8 : i32
    scf.if %19 {
      %c0_9 = arith.constant 0 : index
      %c0_10 = arith.constant 0 : index
      %20 = vector.load %arg4[%c0_9, %c0_10] : memref<128x128xf32, #tpu.memory_space<vmem>>, vector<128x128xf32>
      %c0_11 = arith.constant 0 : index
      %c0_12 = arith.constant 0 : index
      %21 = vector.load %arg9[%c0_11, %c0_12] : memref<128x128xf32, #tpu.memory_space<vmem>>, vector<128x128xf32>
      %22 = arith.addf %21, %20 : vector<128x128xf32>
      %c0_13 = arith.constant 0 : index
      %c0_14 = arith.constant 0 : index
      %23 = vector.load %arg5[%c0_13, %c0_14] : memref<128x128xf32, #tpu.memory_space<vmem>>, vector<128x128xf32>
      %cst_15 = arith.constant dense<0.000000e+00> : vector<128x128xf32>
      %24 = tpu.matmul %22, %23, %cst_15 {dimension_numbers = #tpu.dot_dimension_numbers<[1], [0], [0], [1], [0, 0, 1, 1], [], []>} : vector<128x128xf32>, vector<128x128xf32>, vector<128x128xf32> -> vector<128x128xf32>
      %c0_16 = arith.constant 0 : index
      %c0_17 = arith.constant 0 : index
      %25 = vector.load %arg7[%c0_16, %c0_17] : memref<2x128xf32, #tpu.memory_space<vmem>>, vector<1x128xf32>
      %26 = vector.broadcast %25 : vector<1x128xf32> to vector<128x128xf32>
      %27 = arith.addf %24, %26 : vector<128x128xf32>
      %cst_18 = arith.constant 0.000000e+00 : f32
      %28 = vector.broadcast %cst_18 : f32 to vector<128x128xf32>
      %29 = arith.maximumf %27, %28 : vector<128x128xf32>
      %c0_19 = arith.constant 0 : index
      %c0_20 = arith.constant 0 : index
      %30 = vector.load %arg6[%c0_19, %c0_20] : memref<128x128xf32, #tpu.memory_space<vmem>>, vector<128x128xf32>
      %cst_21 = arith.constant dense<0.000000e+00> : vector<128x128xf32>
      %31 = tpu.matmul %29, %30, %cst_21 {dimension_numbers = #tpu.dot_dimension_numbers<[1], [0], [0], [1], [0, 0, 1, 1], [], []>} : vector<128x128xf32>, vector<128x128xf32>, vector<128x128xf32> -> vector<128x128xf32>
      %c1 = arith.constant 1 : index
      %c0_22 = arith.constant 0 : index
      %32 = vector.load %arg7[%c1, %c0_22] : memref<2x128xf32, #tpu.memory_space<vmem>>, vector<1x128xf32>
      %33 = vector.broadcast %32 : vector<1x128xf32> to vector<128x128xf32>
      %34 = arith.addf %31, %33 : vector<128x128xf32>
      %35 = arith.addf %34, %20 : vector<128x128xf32>
      %c0_23 = arith.constant 0 : index
      %c0_24 = arith.constant 0 : index
      %36 = vector.load %arg8[%c0_23, %c0_24] : memref<128x128xf32, #tpu.memory_space<vmem>>, vector<128x128xf32>
      tpu.vector_store %arg8[%c0_23, %c0_24], %35 {strides = array<i32>} : memref<128x128xf32, #tpu.memory_space<vmem>>, vector<128x128xf32>,
    } else {
    }
    return
  }
  func.func @transform_0(%arg0: i32, %arg1: i32) -> (i32, i32) {
    %c0_i32 = arith.constant 0 : i32
    %c0_i32_0 = arith.constant 0 : i32
    return %c0_i32, %arg1 : i32, i32
  }
  func.func @transform_1(%arg0: i32, %arg1: i32) -> (i32, i32) {
    %c0_i32 = arith.constant 0 : i32
    %c0_i32_0 = arith.constant 0 : i32
    return %arg1, %c0_i32 : i32, i32
  }
  func.func @transform_2(%arg0: i32, %arg1: i32) -> (i32, i32) {
    %c0_i32 = arith.constant 0 : i32
    %c0_i32_0 = arith.constant 0 : i32
    return %arg0, %c0_i32 : i32, i32
  }
  func.func @transform_3(%arg0: i32, %arg1: i32) -> (i32, i32) {
    %c0_i32 = arith.constant 0 : i32
    %c0_i32_0 = arith.constant 0 : i32
    %c0_i32_1 = arith.constant 0 : i32
    return %c0_i32, %c0_i32_0 : i32, i32
  }
  func.func @transform_4(%arg0: i32, %arg1: i32) -> (i32, i32) {
    %c0_i32 = arith.constant 0 : i32
    %c0_i32_0 = arith.constant 0 : i32
    %c0_i32_1 = arith.constant 0 : i32
    return %c0_i32, %c0_i32_0 : i32, i32
  }
  func.func @transform_5(%arg0: i32, %arg1: i32) -> (i32, i32) {
    %c0_i32 = arith.constant 0 : i32
    %c0_i32_0 = arith.constant 0 : i32
    %c0_i32_1 = arith.constant 0 : i32
    return %c0_i32, %c0_i32_0 : i32, i32
  }
  func.func @transform_6(%arg0: i32, %arg1: i32) -> (i32, i32) {
    %c0_i32 = arith.constant 0 : i32
    %c0_i32_0 = arith.constant 0 : i32
    return %arg0, %c0_i32 : i32, i32
  }
}

</mosaic_0001>

<llo_original>
// kernel: net3d_layer_pallas.3
$region0: #{net3d_layer_pallas.3}
  #allocation0 [shape = 'u32[]', space=smem, size = 0x4, offset = 0x4, fixed_abs, tag = 'smem constant byte address 0x4 - core index']
  #allocation1 [shape = 'u32[72,128]{1,0:T(1,128)}', space=vmem, size = 0x9000, scoped, tag = 'internal scratch']
  %s0 = inlined_call_operand.vmem [shape: f32[128,128], index: 0, kind: input, shape index: {}]
  %s1 = inlined_call_operand.vmem [shape: f32[128,128], index: 1, kind: input, shape index: {}]
  %s2 = inlined_call_operand.vmem [shape: f32[128,128], index: 2, kind: input, shape index: {}]
  %s3 = inlined_call_operand.vmem [shape: f32[128,128], index: 3, kind: output, shape index: {0}]
  %s4 = inlined_call_operand.vmem [shape: f32[128,128], index: 4, kind: output, shape index: {1}]
  %5 = xla_tuple %s3, %s4
  %s6 = sld [smem:[#allocation0]]
  $region30: #{net3d_layer_pallas.3} parent=0
    _
  %s8 = ssub.s32 1, %s6
  %s9 = scalar_select 0, %s8, %s6
  // Predicated region
  $region2: #{net3d_layer_pallas.3} parent=0 // pred_check
    _
  $region3: #{net3d_layer_pallas.3} parent=0 // pred_check_branch
    %11 = sbr.rel (0) target = $region5
  $region4: #{net3d_layer_pallas.3} parent=0 // pred_region
    _
  $region5: #{net3d_layer_pallas.3} parent=0 // pred_fallthru
    _
  // Predicated region
  $region6: #{net3d_layer_pallas.3} parent=0 // pred_check
    _
  $region7: #{net3d_layer_pallas.3} parent=0 // pred_check_branch
    %13 = sbr.rel (0) target = $region9
  $region8: #{net3d_layer_pallas.3} parent=0 // pred_region
    _
  $region9: #{net3d_layer_pallas.3} parent=0 // pred_fallthru
    _
  // Predicated region
  $region10: #{net3d_layer_pallas.3} parent=0 // pred_check
    _
  $region11: #{net3d_layer_pallas.3} parent=0 // pred_check_branch
    %15 = sbr.rel (0) target = $region13
  $region12: #{net3d_layer_pallas.3} parent=0 // pred_region
    _
  $region13: #{net3d_layer_pallas.3} parent=0 // pred_fallthru
    _
  %v16 = vld [vmem:[%s0] sm:$0xff]
  %v17 = vld [vmem:[%s0 + $0x8] sm:$0xff]
  %v18 = vld [vmem:[%s0 + $0x10] sm:$0xff]
  %v19 = vld [vmem:[%s0 + $0x18] sm:$0xff]
  %v20 = vld [vmem:[%s0 + $0x20] sm:$0xff]
  %v21 = vld [vmem:[%s0 + $0x28] sm:$0xff]
  %v22 = vld [vmem:[%s0 + $0x30] sm:$0xff]
  %v23 = vld [vmem:[%s0 + $0x38] sm:$0xff]
  %v24 = vld [vmem:[%s0 + $0x40] sm:$0xff]
  %v25 = vld [vmem:[%s0 + $0x48] sm:$0xff]
  %v26 = vld [vmem:[%s0 + $0x50] sm:$0xff]
  %v27 = vld [vmem:[%s0 + $0x58] sm:$0xff]
  %v28 = vld [vmem:[%s0 + $0x60] sm:$0xff]
  %v29 = vld [vmem:[%s0 + $0x68] sm:$0xff]
  %v30 = vld [vmem:[%s0 + $0x70] sm:$0xff]
  %v31 = vld [vmem:[%s0 + $0x78] sm:$0xff]
  %v32 = vld [vmem:[%s1] sm:$0xff]
  %v33 = vld [vmem:[%s1 + $0x8] sm:$0xff]
  %v34 = vld [vmem:[%s1 + $0x10] sm:$0xff]
  %v35 = vld [vmem:[%s1 + $0x18] sm:$0xff]
  %v36 = vld [vmem:[%s1 + $0x20] sm:$0xff]
  %v37 = vld [vmem:[%s1 + $0x28] sm:$0xff]
  %v38 = vld [vmem:[%s1 + $0x30] sm:$0xff]
  %v39 = vld [vmem:[%s1 + $0x38] sm:$0xff]
  %v40 = vld [vmem:[%s1 + $0x40] sm:$0xff]
  %v41 = vld [vmem:[%s1 + $0x48] sm:$0xff]
  %v42 = vld [vmem:[%s1 + $0x50] sm:$0xff]
  %v43 = vld [vmem:[%s1 + $0x58] sm:$0xff]
  %v44 = vld [vmem:[%s1 + $0x60] sm:$0xff]
  %v45 = vld [vmem:[%s1 + $0x68] sm:$0xff]
  %v46 = vld [vmem:[%s1 + $0x70] sm:$0xff]
  %v47 = vld [vmem:[%s1 + $0x78] sm:$0xff]
  %48 = vmatpush.msra.mxu0 %v47
  %49 = vmatpush.msra.mxu0 %v46
  %50 = vmatpush.msra.mxu0 %v45
  %51 = vmatpush.msra.mxu0 %v44
  %52 = vmatpush.msra.mxu0 %v43
  %53 = vmatpush.msra.mxu0 %v42
  %54 = vmatpush.msra.mxu0 %v41
  %55 = vmatpush.msra.mxu0 %v40
  %56 = vmatpush.msra.mxu0 %v39
  %57 = vmatpush.msra.mxu0 %v38
  %58 = vmatpush.msra.mxu0 %v37
  %59 = vmatpush.msra.mxu0 %v36
  %60 = vmatpush.msra.mxu0 %v35
  %61 = vmatpush.msra.mxu0 %v34
  %62 = vmatpush.msra.mxu0 %v33
  %63 = vmatpush.msra.mxu0 %v32
  %64 = vmatmul.f32.gmra.mxu0 %v16
  %v65 = vpop.f32.mrf.mxu0
  %v66 = vadd.f32 0.0, %v65
  %67 = vmatmul.f32.gmra.mxu0 %v17
  %v68 = vpop.f32.mrf.mxu0
  %v69 = vadd.f32 0.0, %v68
  %70 = vmatmul.f32.gmra.mxu0 %v18
  %v71 = vpop.f32.mrf.mxu0
  %v72 = vadd.f32 0.0, %v71
  %73 = vmatmul.f32.gmra.mxu0 %v19
  %v74 = vpop.f32.mrf.mxu0
  %v75 = vadd.f32 0.0, %v74
  %76 = vmatmul.f32.gmra.mxu0 %v20
  %v77 = vpop.f32.mrf.mxu0
  %v78 = vadd.f32 0.0, %v77
  %79 = vmatmul.f32.gmra.mxu0 %v21
  %v80 = vpop.f32.mrf.mxu0
  %v81 = vadd.f32 0.0, %v80
  %82 = vmatmul.f32.gmra.mxu0 %v22
  %v83 = vpop.f32.mrf.mxu0
  %v84 = vadd.f32 0.0, %v83
  %85 = vmatmul.f32.gmra.mxu0 %v23
  %v86 = vpop.f32.mrf.mxu0
  %v87 = vadd.f32 0.0, %v86
  %88 = vmatmul.f32.gmra.mxu0 %v24
  %v89 = vpop.f32.mrf.mxu0
  %v90 = vadd.f32 0.0, %v89
  %91 = vmatmul.f32.gmra.mxu0 %v25
  %v92 = vpop.f32.mrf.mxu0
  %v93 = vadd.f32 0.0, %v92
  %94 = vmatmul.f32.gmra.mxu0 %v26
  %v95 = vpop.f32.mrf.mxu0
  %v96 = vadd.f32 0.0, %v95
  %97 = vmatmul.f32.gmra.mxu0 %v27
  %v98 = vpop.f32.mrf.mxu0
  %v99 = vadd.f32 0.0, %v98
  %100 = vmatmul.f32.gmra.mxu0 %v28
  %v101 = vpop.f32.mrf.mxu0
  %v102 = vadd.f32 0.0, %v101
  %103 = vmatmul.f32.gmra.mxu0 %v29
  %v104 = vpop.f32.mrf.mxu0
  %v105 = vadd.f32 0.0, %v104
  %106 = vmatmul.f32.gmra.mxu0 %v30
  %v107 = vpop.f32.mrf.mxu0
  %v108 = vadd.f32 0.0, %v107
  %109 = vmatmul.f32.gmra.mxu0 %v31
  %v110 = vpop.f32.mrf.mxu0
  %v111 = vadd.f32 0.0, %v110
  %112 = vdwg.mxu0
  %113 = vst [vmem:[%s3] sm:$0xff] %v66
  %114 = vst [vmem:[%s3 + $0x8] sm:$0xff] %v69
  %115 = vst [vmem:[%s3 + $0x10] sm:$0xff] %v72
  %116 = vst [vmem:[%s3 + $0x18] sm:$0xff] %v75
  %117 = vst [vmem:[%s3 + $0x20] sm:$0xff] %v78
  %118 = vst [vmem:[%s3 + $0x28] sm:$0xff] %v81
  %119 = vst [vmem:[%s3 + $0x30] sm:$0xff] %v84
  %120 = vst [vmem:[%s3 + $0x38] sm:$0xff] %v87
  %121 = vst [vmem:[%s3 + $0x40] sm:$0xff] %v90
  %122 = vst [vmem:[%s3 + $0x48] sm:$0xff] %v93
  %123 = vst [vmem:[%s3 + $0x50] sm:$0xff] %v96
  %124 = vst [vmem:[%s3 + $0x58] sm:$0xff] %v99
  %125 = vst [vmem:[%s3 + $0x60] sm:$0xff] %v102
  %126 = vst [vmem:[%s3 + $0x68] sm:$0xff] %v105
  %127 = vst [vmem:[%s3 + $0x70] sm:$0xff] %v108
  %128 = vst [vmem:[%s3 + $0x78] sm:$0xff] %v111
  %v129 = vld [vmem:[%s2] sm:$0xff]
  %v130 = vld [vmem:[%s2 + $0x8] sm:$0xff]
  %v131 = vld [vmem:[%s2 + $0x10] sm:$0xff]
  %v132 = vld [vmem:[%s2 + $0x18] sm:$0xff]
  %v133 = vld [vmem:[%s2 + $0x20] sm:$0xff]
  %v134 = vld [vmem:[%s2 + $0x28] sm:$0xff]
  %v135 = vld [vmem:[%s2 + $0x30] sm:$0xff]
  %v136 = vld [vmem:[%s2 + $0x38] sm:$0xff]
  %v137 = vld [vmem:[%s2 + $0x40] sm:$0xff]
  %v138 = vld [vmem:[%s2 + $0x48] sm:$0xff]
  %v139 = vld [vmem:[%s2 + $0x50] sm:$0xff]
  %v140 = vld [vmem:[%s2 + $0x58] sm:$0xff]
  %v141 = vld [vmem:[%s2 + $0x60] sm:$0xff]
  %v142 = vld [vmem:[%s2 + $0x68] sm:$0xff]
  %v143 = vld [vmem:[%s2 + $0x70] sm:$0xff]
  %v144 = vld [vmem:[%s2 + $0x78] sm:$0xff]
  %145 = vmatpush.msra.mxu0 %v144
  %146 = vmatpush.msra.mxu0 %v143
  %147 = vmatpush.msra.mxu0 %v142
  %148 = vmatpush.msra.mxu0 %v141
  %149 = vmatpush.msra.mxu0 %v140
  %150 = vmatpush.msra.mxu0 %v139
  %151 = vmatpush.msra.mxu0 %v138
  %152 = vmatpush.msra.mxu0 %v137
  %153 = vmatpush.msra.mxu0 %v136
  %154 = vmatpush.msra.mxu0 %v135
  %155 = vmatpush.msra.mxu0 %v134
  %156 = vmatpush.msra.mxu0 %v133
  %157 = vmatpush.msra.mxu0 %v132
  %158 = vmatpush.msra.mxu0 %v131
  %159 = vmatpush.msra.mxu0 %v130
  %160 = vmatpush.msra.mxu0 %v129
  %161 = vmatmul.f32.gmra.mxu0 %v16
  %v162 = vpop.f32.mrf.mxu0
  %v163 = vadd.f32 0.0, %v162
  %164 = vmatmul.f32.gmra.mxu0 %v17
  %v165 = vpop.f32.mrf.mxu0
  %v166 = vadd.f32 0.0, %v165
  %167 = vmatmul.f32.gmra.mxu0 %v18
  %v168 = vpop.f32.mrf.mxu0
  %v169 = vadd.f32 0.0, %v168
  %170 = vmatmul.f32.gmra.mxu0 %v19
  %v171 = vpop.f32.mrf.mxu0
  %v172 = vadd.f32 0.0, %v171
  %173 = vmatmul.f32.gmra.mxu0 %v20
  %v174 = vpop.f32.mrf.mxu0
  %v175 = vadd.f32 0.0, %v174
  %176 = vmatmul.f32.gmra.mxu0 %v21
  %v177 = vpop.f32.mrf.mxu0
  %v178 = vadd.f32 0.0, %v177
  %179 = vmatmul.f32.gmra.mxu0 %v22
  %v180 = vpop.f32.mrf.mxu0
  %v181 = vadd.f32 0.0, %v180
  %182 = vmatmul.f32.gmra.mxu0 %v23
  %v183 = vpop.f32.mrf.mxu0
  %v184 = vadd.f32 0.0, %v183
  %185 = vmatmul.f32.gmra.mxu0 %v24
  %v186 = vpop.f32.mrf.mxu0
  %v187 = vadd.f32 0.0, %v186
  %188 = vmatmul.f32.gmra.mxu0 %v25
  %v189 = vpop.f32.mrf.mxu0
  %v190 = vadd.f32 0.0, %v189
  %191 = vmatmul.f32.gmra.mxu0 %v26
  %v192 = vpop.f32.mrf.mxu0
  %v193 = vadd.f32 0.0, %v192
  %194 = vmatmul.f32.gmra.mxu0 %v27
  %v195 = vpop.f32.mrf.mxu0
  %v196 = vadd.f32 0.0, %v195
  %197 = vmatmul.f32.gmra.mxu0 %v28
  %v198 = vpop.f32.mrf.mxu0
  %v199 = vadd.f32 0.0, %v198
  %200 = vmatmul.f32.gmra.mxu0 %v29
  %v201 = vpop.f32.mrf.mxu0
  %v202 = vadd.f32 0.0, %v201
  %203 = vmatmul.f32.gmra.mxu0 %v30
  %v204 = vpop.f32.mrf.mxu0
  %v205 = vadd.f32 0.0, %v204
  %206 = vmatmul.f32.gmra.mxu0 %v31
  %v207 = vpop.f32.mrf.mxu0
  %v208 = vadd.f32 0.0, %v207
  %209 = vdwg.mxu0
  %210 = vst [vmem:[%s4] sm:$0xff] %v163
  %211 = vst [vmem:[%s4 + $0x8] sm:$0xff] %v166
  %212 = vst [vmem:[%s4 + $0x10] sm:$0xff] %v169
  %213 = vst [vmem:[%s4 + $0x18] sm:$0xff] %v172
  %214 = vst [vmem:[%s4 + $0x20] sm:$0xff] %v175
  %215 = vst [vmem:[%s4 + $0x28] sm:$0xff] %v178
  %216 = vst [vmem:[%s4 + $0x30] sm:$0xff] %v181
  %217 = vst [vmem:[%s4 + $0x38] sm:$0xff] %v184
  %218 = vst [vmem:[%s4 + $0x40] sm:$0xff] %v187
  %219 = vst [vmem:[%s4 + $0x48] sm:$0xff] %v190
  %220 = vst [vmem:[%s4 + $0x50] sm:$0xff] %v193
  %221 = vst [vmem:[%s4 + $0x58] sm:$0xff] %v196
  %222 = vst [vmem:[%s4 + $0x60] sm:$0xff] %v199
  %223 = vst [vmem:[%s4 + $0x68] sm:$0xff] %v202
  %224 = vst [vmem:[%s4 + $0x70] sm:$0xff] %v205
  %225 = vst [vmem:[%s4 + $0x78] sm:$0xff] %v208
  // Predicated region
  $region14: #{net3d_layer_pallas.3} parent=0 // pred_check
    _
  $region15: #{net3d_layer_pallas.3} parent=0 // pred_check_branch
    %227 = sbr.rel (0) target = $region17
  $region16: #{net3d_layer_pallas.3} parent=0 // pred_region
    _
  $region17: #{net3d_layer_pallas.3} parent=0 // pred_fallthru
    _
  // Predicated region
  $region18: #{net3d_layer_pallas.3} parent=0 // pred_check
    _
  $region19: #{net3d_layer_pallas.3} parent=0 // pred_check_branch
    %229 = sbr.rel (0) target = $region21
  $region20: #{net3d_layer_pallas.3} parent=0 // pred_region
    _
  $region21: #{net3d_layer_pallas.3} parent=0 // pred_fallthru
    _
  // Predicated region
  $region22: #{net3d_layer_pallas.3} parent=0 // pred_check
    _
  $region23: #{net3d_layer_pallas.3} parent=0 // pred_check_branch
    %231 = sbr.rel (0) target = $region25
  $region24: #{net3d_layer_pallas.3} parent=0 // pred_region
    _
  $region25: #{net3d_layer_pallas.3} parent=0 // pred_fallthru
    _
  // Predicated region
  $region26: #{net3d_layer_pallas.3} parent=0 // pred_check
    _
  $region27: #{net3d_layer_pallas.3} parent=0 // pred_check_branch
    %233 = sbr.rel (0) target = $region29
  $region28: #{net3d_layer_pallas.3} parent=0 // pred_region
    _
  $region29: #{net3d_layer_pallas.3} parent=0 // pred_fallthru
    _

// kernel: net3d_layer_pallas.4
$region0: #{net3d_layer_pallas.4}
  #allocation0 [shape = 'u32[]', space=smem, size = 0x4, offset = 0x4, fixed_abs, tag = 'smem constant byte address 0x4 - core index']
  #allocation1 [shape = 'u32[72,128]{1,0:T(1,128)}', space=vmem, size = 0x9000, scoped, tag = 'internal scratch']
  #allocation2 [shape = 'f32[1,1]{1,0:T(1,128)S(6)}', space=smem, size = 0x200, scoped, tag = 'scoped memory for net3d_layer_pallas.4']
  %s0 = inlined_call_operand.vmem [shape: s32[512,1], index: 0, kind: input, shape index: {}]
  %s1 = inlined_call_operand.vmem [shape: s32[512,1], index: 1, kind: input, shape index: {}]
  %s2 = inlined_call_operand.vmem [shape: f32[512,128], index: 2, kind: input, shape index: {}]
  %s3 = inlined_call_operand.vmem [shape: f32[128,128], index: 3, kind: input, shape index: {}]
  %s4 = inlined_call_operand.vmem [shape: f32[128,128], index: 4, kind: input, shape index: {}]
  %s5 = inlined_call_operand.vmem [shape: f32[128,128], index: 5, kind: input, shape index: {}]
  %s6 = inlined_call_operand.vmem [shape: f32[128,128], index: 6, kind: input, shape index: {}]
  %s7 = inlined_call_operand.vmem [shape: f32[2,128], index: 7, kind: input, shape index: {}]
  %s8 = inlined_call_operand.vmem [shape: f32[128,1], index: 8, kind: input, shape index: {}]
  %s9 = inlined_call_operand.<no memory space> [shape: f32[1,1], index: 9, kind: input, shape index: {}]
  %s10 = inlined_call_operand.vmem [shape: f32[512,128], index: 10, kind: output, shape index: {0}]
  %s11 = inlined_call_operand.vmem [shape: f32[512,128], index: 11, kind: output, shape index: {1}]
  %12 = xla_tuple %s10, %s11
  %s13 = sld [smem:[#allocation0]]
  $region81: #{net3d_layer_pallas.4} parent=0
    _
  %s15 = ssub.s32 1, %s13
  %s16 = scalar_select 0, %s15, %s13
  %17 = sst [smem:[#allocation2]] %s9
  loop: start=0, step=1, limit=4
  $region2: #{net3d_layer_pallas.4} parent=0 // loop_pre_header
    _
  $region3: #{net3d_layer_pallas.4} parent=0 // loop_header
    %s19 = sphi 0, %s23
    %p20 = scmp.ge.s32.totalorder %s19, 4
    %s29 = sphi 0, %s31
    %s32 = sphi 0, %s29
    %s33 = sphi 0, %s32
    %s49 = sphi 0, %s33
    %s55 = sphi 0, %s57
    %s58 = sphi 0, %s55
    %s59 = sphi 0, %s58
    %s75 = sphi 0, %s59
    %s81 = sphi 0, %s83
    %s84 = sphi 0, %s81
    %s85 = sphi 0, %s84
    %s101 = sphi 0, %s85
    %s105 = sphi 0, %s105
    %s107 = sphi 0, %s105
    %s108 = sphi 0, %s107
    %s122 = sphi 0, %s108
    %s126 = sphi 0, %s126
    %s128 = sphi 0, %s126
    %s129 = sphi 0, %s128
    %s143 = sphi 0, %s129
    %s147 = sphi 0, %s147
    %s149 = sphi 0, %s147
    %s150 = sphi 0, %s149
    %s164 = sphi 0, %s150
    %s168 = sphi 0, %s168
    %s170 = sphi 0, %s168
    %s171 = sphi 0, %s170
    %s185 = sphi 0, %s171
    %s189 = sphi 0, %s189
    %s191 = sphi 0, %s189
    %s192 = sphi 0, %s191
    %s206 = sphi 0, %s192
    %s210 = sphi 0, %s210
    %s212 = sphi 0, %s210
    %s213 = sphi 0, %s212
    %s227 = sphi 0, %s213
    %s231 = sphi 0, %s231
    %s233 = sphi 0, %s231
    %s234 = sphi 0, %s233
    %s248 = sphi 0, %s234
    %s254 = sphi 0, %s256
    %s257 = sphi 0, %s254
    %s258 = sphi 0, %s257
    %s274 = sphi 0, %s258
    %s280 = sphi 0, %s282
    %s283 = sphi 0, %s280
    %s284 = sphi 0, %s283
    %s300 = sphi 0, %s284
  $region4: #{net3d_layer_pallas.4} parent=0 // loop_header_branch
    %22 = sbr.rel (%p20) target = $region8
  $region5: #{net3d_layer_pallas.4} parent=0 // loop_body
    %s24 = ssub.s32 %s19, 1
    %s25 = ssub.s32 %s19, 2
    %s26 = sadd.s32 %s19, 1
    %s27 = ssub.s32 %s19, %s26
    %p28 = scmp.eq.s32.totalorder %s27, 0
    %s30 = sadd.s32 %s29, 1
    %s31 = scalar_select %p28, %s29, %s30
    %p34 = pneg %p28
    %p35 = scmp.eq.s32.totalorder %s19, 1
    %p36 = por %p34, %p35
    %p37 = scmp.ne.s32.totalorder %s29, %s32
    %p38 = scmp.eq.s32.totalorder %s19, 0
    %p39 = por %p37, %p38
    %p40 = scmp.ne.s32.totalorder %s29, %s32
    %p41 = scmp.eq.s32.totalorder %s24, 1
    %p42 = por %p40, %p41
    %p43 = scmp.ne.s32.totalorder %s32, %s33
    %p44 = scmp.eq.s32.totalorder %s24, 0
    %p45 = por %p43, %p44
    %p46 = scmp.ne.s32.totalorder %s32, %s33
    %p47 = scmp.eq.s32.totalorder %s25, 1
    %p48 = por %p46, %p47
    %p50 = scmp.ne.s32.totalorder %s33, %s49
    %p51 = scmp.eq.s32.totalorder %s25, 0
    %p52 = por %p50, %p51
    %s53 = ssub.s32 %s19, %s26
    %p54 = scmp.eq.s32.totalorder %s53, 0
    %s56 = sadd.s32 %s55, 1
    %s57 = scalar_select %p54, %s55, %s56
    %p60 = pneg %p54
    %p61 = scmp.eq.s32.totalorder %s19, 1
    %p62 = por %p60, %p61
    %p63 = scmp.ne.s32.totalorder %s55, %s58
    %p64 = scmp.eq.s32.totalorder %s19, 0
    %p65 = por %p63, %p64
    %p66 = scmp.ne.s32.totalorder %s55, %s58
    %p67 = scmp.eq.s32.totalorder %s24, 1
    %p68 = por %p66, %p67
    %p69 = scmp.ne.s32.totalorder %s58, %s59
    %p70 = scmp.eq.s32.totalorder %s24, 0
    %p71 = por %p69, %p70
    %p72 = scmp.ne.s32.totalorder %s58, %s59
    %p73 = scmp.eq.s32.totalorder %s25, 1
    %p74 = por %p72, %p73
    %p76 = scmp.ne.s32.totalorder %s59, %s75
    %p77 = scmp.eq.s32.totalorder %s25, 0
    %p78 = por %p76, %p77
    %s79 = ssub.s32 %s19, %s26
    %p80 = scmp.eq.s32.totalorder %s79, 0
    %s82 = sadd.s32 %s81, 1
    %s83 = scalar_select %p80, %s81, %s82
    %p86 = pneg %p80
    %p87 = scmp.eq.s32.totalorder %s19, 1
    %p88 = por %p86, %p87
    %p89 = scmp.ne.s32.totalorder %s81, %s84
    %p90 = scmp.eq.s32.totalorder %s19, 0
    %p91 = por %p89, %p90
    %p92 = scmp.ne.s32.totalorder %s81, %s84
    %p93 = scmp.eq.s32.totalorder %s24, 1
    %p94 = por %p92, %p93
    %p95 = scmp.ne.s32.totalorder %s84, %s85
    %p96 = scmp.eq.s32.totalorder %s24, 0
    %p97 = por %p95, %p96
    %p98 = scmp.ne.s32.totalorder %s84, %s85
    %p99 = scmp.eq.s32.totalorder %s25, 1
    %p100 = por %p98, %p99
    %p102 = scmp.ne.s32.totalorder %s85, %s101
    %p103 = scmp.eq.s32.totalorder %s25, 0
    %p104 = por %p102, %p103
    %s106 = sadd.s32 %s105, 1
    %p109 = scmp.eq.s32.totalorder %s19, 1
    %p110 = scmp.ne.s32.totalorder %s105, %s107
    %p111 = scmp.eq.s32.totalorder %s19, 0
    %p112 = por %p110, %p111
    %p113 = scmp.ne.s32.totalorder %s105, %s107
    %p114 = scmp.eq.s32.totalorder %s24, 1
    %p115 = por %p113, %p114
    %p116 = scmp.ne.s32.totalorder %s107, %s108
    %p117 = scmp.eq.s32.totalorder %s24, 0
    %p118 = por %p116, %p117
    %p119 = scmp.ne.s32.totalorder %s107, %s108
    %p120 = scmp.eq.s32.totalorder %s25, 1
    %p121 = por %p119, %p120
    %p123 = scmp.ne.s32.totalorder %s108, %s122
    %p124 = scmp.eq.s32.totalorder %s25, 0
    %p125 = por %p123, %p124
    %s127 = sadd.s32 %s126, 1
    %p130 = scmp.eq.s32.totalorder %s19, 1
    %p131 = scmp.ne.s32.totalorder %s126, %s128
    %p132 = scmp.eq.s32.totalorder %s19, 0
    %p133 = por %p131, %p132
    %p134 = scmp.ne.s32.totalorder %s126, %s128
    %p135 = scmp.eq.s32.totalorder %s24, 1
    %p136 = por %p134, %p135
    %p137 = scmp.ne.s32.totalorder %s128, %s129
    %p138 = scmp.eq.s32.totalorder %s24, 0
    %p139 = por %p137, %p138
    %p140 = scmp.ne.s32.totalorder %s128, %s129
    %p141 = scmp.eq.s32.totalorder %s25, 1
    %p142 = por %p140, %p141
    %p144 = scmp.ne.s32.totalorder %s129, %s143
    %p145 = scmp.eq.s32.totalorder %s25, 0
    %p146 = por %p144, %p145
    %s148 = sadd.s32 %s147, 1
    %p151 = scmp.eq.s32.totalorder %s19, 1
    %p152 = scmp.ne.s32.totalorder %s147, %s149
    %p153 = scmp.eq.s32.totalorder %s19, 0
    %p154 = por %p152, %p153
    %p155 = scmp.ne.s32.totalorder %s147, %s149
    %p156 = scmp.eq.s32.totalorder %s24, 1
    %p157 = por %p155, %p156
    %p158 = scmp.ne.s32.totalorder %s149, %s150
    %p159 = scmp.eq.s32.totalorder %s24, 0
    %p160 = por %p158, %p159
    %p161 = scmp.ne.s32.totalorder %s149, %s150
    %p162 = scmp.eq.s32.totalorder %s25, 1
    %p163 = por %p161, %p162
    %p165 = scmp.ne.s32.totalorder %s150, %s164
    %p166 = scmp.eq.s32.totalorder %s25, 0
    %p167 = por %p165, %p166
    %s169 = sadd.s32 %s168, 1
    %p172 = scmp.eq.s32.totalorder %s19, 1
    %p173 = scmp.ne.s32.totalorder %s168, %s170
    %p174 = scmp.eq.s32.totalorder %s19, 0
    %p175 = por %p173, %p174
    %p176 = scmp.ne.s32.totalorder %s168, %s170
    %p177 = scmp.eq.s32.totalorder %s24, 1
    %p178 = por %p176, %p177
    %p179 = scmp.ne.s32.totalorder %s170, %s171
    %p180 = scmp.eq.s32.totalorder %s24, 0
    %p181 = por %p179, %p180
    %p182 = scmp.ne.s32.totalorder %s170, %s171
    %p183 = scmp.eq.s32.totalorder %s25, 1
    %p184 = por %p182, %p183
    %p186 = scmp.ne.s32.totalorder %s171, %s185
    %p187 = scmp.eq.s32.totalorder %s25, 0
    %p188 = por %p186, %p187
    %s190 = sadd.s32 %s189, 1
    %p193 = scmp.eq.s32.totalorder %s19, 1
    %p194 = scmp.ne.s32.totalorder %s189, %s191
    %p195 = scmp.eq.s32.totalorder %s19, 0
    %p196 = por %p194, %p195
    %p197 = scmp.ne.s32.totalorder %s189, %s191
    %p198 = scmp.eq.s32.totalorder %s24, 1
    %p199 = por %p197, %p198
    %p200 = scmp.ne.s32.totalorder %s191, %s192
    %p201 = scmp.eq.s32.totalorder %s24, 0
    %p202 = por %p200, %p201
    %p203 = scmp.ne.s32.totalorder %s191, %s192
    %p204 = scmp.eq.s32.totalorder %s25, 1
    %p205 = por %p203, %p204
    %p207 = scmp.ne.s32.totalorder %s192, %s206
    %p208 = scmp.eq.s32.totalorder %s25, 0
    %p209 = por %p207, %p208
    %s211 = sadd.s32 %s210, 1
    %p214 = scmp.eq.s32.totalorder %s19, 1
    %p215 = scmp.ne.s32.totalorder %s210, %s212
    %p216 = scmp.eq.s32.totalorder %s19, 0
    %p217 = por %p215, %p216
    %p218 = scmp.ne.s32.totalorder %s210, %s212
    %p219 = scmp.eq.s32.totalorder %s24, 1
    %p220 = por %p218, %p219
    %p221 = scmp.ne.s32.totalorder %s212, %s213
    %p222 = scmp.eq.s32.totalorder %s24, 0
    %p223 = por %p221, %p222
    %p224 = scmp.ne.s32.totalorder %s212, %s213
    %p225 = scmp.eq.s32.totalorder %s25, 1
    %p226 = por %p224, %p225
    %p228 = scmp.ne.s32.totalorder %s213, %s227
    %p229 = scmp.eq.s32.totalorder %s25, 0
    %p230 = por %p228, %p229
    %s232 = sadd.s32 %s231, 1
    %p235 = scmp.eq.s32.totalorder %s19, 1
    %p236 = scmp.ne.s32.totalorder %s231, %s233
    %p237 = scmp.eq.s32.totalorder %s19, 0
    %p238 = por %p236, %p237
    %p239 = scmp.ne.s32.totalorder %s231, %s233
    %p240 = scmp.eq.s32.totalorder %s24, 1
    %p241 = por %p239, %p240
    %p242 = scmp.ne.s32.totalorder %s233, %s234
    %p243 = scmp.eq.s32.totalorder %s24, 0
    %p244 = por %p242, %p243
    %p245 = scmp.ne.s32.totalorder %s233, %s234
    %p246 = scmp.eq.s32.totalorder %s25, 1
    %p247 = por %p245, %p246
    %p249 = scmp.ne.s32.totalorder %s234, %s248
    %p250 = scmp.eq.s32.totalorder %s25, 0
    %p251 = por %p249, %p250
    %s252 = ssub.s32 %s19, %s26
    %p253 = scmp.eq.s32.totalorder %s252, 0
    %s255 = sadd.s32 %s254, 1
    %s256 = scalar_select %p253, %s254, %s255
    %p259 = pneg %p253
    %p260 = scmp.eq.s32.totalorder %s19, 1
    %p261 = por %p259, %p260
    %p262 = scmp.ne.s32.totalorder %s254, %s257
    %p263 = scmp.eq.s32.totalorder %s19, 0
    %p264 = por %p262, %p263
    %p265 = scmp.ne.s32.totalorder %s254, %s257
    %p266 = scmp.eq.s32.totalorder %s24, 1
    %p267 = por %p265, %p266
    %p268 = scmp.ne.s32.totalorder %s257, %s258
    %p269 = scmp.eq.s32.totalorder %s24, 0
    %p270 = por %p268, %p269
    %p271 = scmp.ne.s32.totalorder %s257, %s258
    %p272 = scmp.eq.s32.totalorder %s25, 1
    %p273 = por %p271, %p272
    %p275 = scmp.ne.s32.totalorder %s258, %s274
    %p276 = scmp.eq.s32.totalorder %s25, 0
    %p277 = por %p275, %p276
    %s278 = ssub.s32 %s19, %s26
    %p279 = scmp.eq.s32.totalorder %s278, 0
    %s281 = sadd.s32 %s280, 1
    %s282 = scalar_select %p279, %s280, %s281
    %p285 = pneg %p279
    %p286 = scmp.eq.s32.totalorder %s19, 1
    %p287 = por %p285, %p286
    %p288 = scmp.ne.s32.totalorder %s280, %s283
    %p289 = scmp.eq.s32.totalorder %s19, 0
    %p290 = por %p288, %p289
    %p291 = scmp.ne.s32.totalorder %s280, %s283
    %p292 = scmp.eq.s32.totalorder %s24, 1
    %p293 = por %p291, %p292
    %p294 = scmp.ne.s32.totalorder %s283, %s284
    %p295 = scmp.eq.s32.totalorder %s24, 0
    %p296 = por %p294, %p295
    %p297 = scmp.ne.s32.totalorder %s283, %s284
    %p298 = scmp.eq.s32.totalorder %s25, 1
    %p299 = por %p297, %p298
    %p301 = scmp.ne.s32.totalorder %s284, %s300
    %p302 = scmp.eq.s32.totalorder %s25, 0
    %p303 = por %p301, %p302
    %p304 = scmp.le.s32.totalorder 1, %s19
    %p305 = scmp.lt.s32.totalorder %s19, 3
    %p306 = pnand %p304, %p305
    %p307 = pneg %p306
    // Predicated region
    $region9: #{net3d_layer_pallas.4} parent=5 // pred_check
      _
    $region10: #{net3d_layer_pallas.4} parent=5 // pred_check_branch
      %309 = sbr.rel (%p306) target = $region12
    $region11: #{net3d_layer_pallas.4} parent=5 // pred_region
      %s310 = ssub.s32 %s19, 1
      // Predicated region
      $region13: #{net3d_layer_pallas.4} parent=11 // pred_check
        %p311 = pneg %p118
      $region14: #{net3d_layer_pallas.4} parent=11 // pred_check_branch
        %313 = sbr.rel (%p311) target = $region16
      $region15: #{net3d_layer_pallas.4} parent=11 // pred_region
        _
      $region16: #{net3d_layer_pallas.4} parent=11 // pred_fallthru
        _
      // Predicated region
      $region17: #{net3d_layer_pallas.4} parent=11 // pred_check
        %p314 = pneg %p139
      $region18: #{net3d_layer_pallas.4} parent=11 // pred_check_branch
        %316 = sbr.rel (%p314) target = $region20
      $region19: #{net3d_layer_pallas.4} parent=11 // pred_region
        _
      $region20: #{net3d_layer_pallas.4} parent=11 // pred_fallthru
        _
      // Predicated region
      $region21: #{net3d_layer_pallas.4} parent=11 // pred_check
        %p317 = pneg %p160
      $region22: #{net3d_layer_pallas.4} parent=11 // pred_check_branch
        %319 = sbr.rel (%p317) target = $region24
      $region23: #{net3d_layer_pallas.4} parent=11 // pred_region
        _
      $region24: #{net3d_layer_pallas.4} parent=11 // pred_fallthru
        _
      // Predicated region
      $region25: #{net3d_layer_pallas.4} parent=11 // pred_check
        %p320 = pneg %p181
      $region26: #{net3d_layer_pallas.4} parent=11 // pred_check_branch
        %322 = sbr.rel (%p320) target = $region28
      $region27: #{net3d_layer_pallas.4} parent=11 // pred_region
        _
      $region28: #{net3d_layer_pallas.4} parent=11 // pred_fallthru
        _
      // Predicated region
      $region29: #{net3d_layer_pallas.4} parent=11 // pred_check
        %p323 = pneg %p202
      $region30: #{net3d_layer_pallas.4} parent=11 // pred_check_branch
        %325 = sbr.rel (%p323) target = $region32
      $region31: #{net3d_layer_pallas.4} parent=11 // pred_region
        _
      $region32: #{net3d_layer_pallas.4} parent=11 // pred_fallthru
        _
      // Predicated region
      $region33: #{net3d_layer_pallas.4} parent=11 // pred_check
        %p326 = pneg %p223
      $region34: #{net3d_layer_pallas.4} parent=11 // pred_check_branch
        %328 = sbr.rel (%p326) target = $region36
      $region35: #{net3d_layer_pallas.4} parent=11 // pred_region
        _
      $region36: #{net3d_layer_pallas.4} parent=11 // pred_fallthru
        _
      // Predicated region
      $region37: #{net3d_layer_pallas.4} parent=11 // pred_check
        %p329 = pneg %p244
      $region38: #{net3d_layer_pallas.4} parent=11 // pred_check_branch
        %331 = sbr.rel (%p329) target = $region40
      $region39: #{net3d_layer_pallas.4} parent=11 // pred_region
        _
      $region40: #{net3d_layer_pallas.4} parent=11 // pred_fallthru
        _
    $region12: #{net3d_layer_pallas.4} parent=5 // pred_fallthru
      _
    %p332 = scmp.lt.s32.totalorder %s19, 2
    // Predicated region
    $region41: #{net3d_layer_pallas.4} parent=5 // pred_check
      %p333 = pneg %p332
    $region42: #{net3d_layer_pallas.4} parent=5 // pred_check_branch
      %335 = sbr.rel (%p333) target = $region44
    $region43: #{net3d_layer_pallas.4} parent=5 // pred_region
      // Predicated region
      $region45: #{net3d_layer_pallas.4} parent=43 // pred_check
        %p336 = pneg %p39
      $region46: #{net3d_layer_pallas.4} parent=43 // pred_check_branch
        %338 = sbr.rel (%p336) target = $region48
      $region47: #{net3d_layer_pallas.4} parent=43 // pred_region
        %s339 = smul.u32 32, %s19
        %p340 = scmp.lt.s32.totalorder %s339, 63
        %s341 = scalar_select %p340, %s339, 63
        %s342 = smul.addr %s341, 8
        %s343 = scalar_lea.vmem %s0, %s342
        %s344 = smul.u32 32, %s19
      $region48: #{net3d_layer_pallas.4} parent=43 // pred_fallthru
        _
      // Predicated region
      $region49: #{net3d_layer_pallas.4} parent=43 // pred_check
        %p345 = pneg %p65
      $region50: #{net3d_layer_pallas.4} parent=43 // pred_check_branch
        %347 = sbr.rel (%p345) target = $region52
      $region51: #{net3d_layer_pallas.4} parent=43 // pred_region
        %s348 = smul.u32 32, %s19
        %p349 = scmp.lt.s32.totalorder %s348, 63
        %s350 = scalar_select %p349, %s348, 63
        %s351 = smul.addr %s350, 8
        %s352 = scalar_lea.vmem %s1, %s351
        %s353 = smul.u32 32, %s19
      $region52: #{net3d_layer_pallas.4} parent=43 // pred_fallthru
        _
      // Predicated region
      $region53: #{net3d_layer_pallas.4} parent=43 // pred_check
        %p354 = pneg %p91
      $region54: #{net3d_layer_pallas.4} parent=43 // pred_check_branch
        %356 = sbr.rel (%p354) target = $region56
      $region55: #{net3d_layer_pallas.4} parent=43 // pred_region
        %s357 = smul.u32 32, %s19
        %p358 = scmp.lt.s32.totalorder %s357, 63
        %s359 = scalar_select %p358, %s357, 63
        %s360 = smul.addr %s359, 8
        %s361 = scalar_lea.vmem %s2, %s360
        %s362 = smul.u32 32, %s19
      $region56: #{net3d_layer_pallas.4} parent=43 // pred_fallthru
        _
    $region44: #{net3d_layer_pallas.4} parent=5 // pred_fallthru
      _
    %p363 = scmp.le.s32.totalorder 1, %s19
    %p364 = scmp.lt.s32.totalorder %s19, 3
    %p365 = pnand %p363, %p364
    %p366 = pneg %p365
    // Predicated region
    $region57: #{net3d_layer_pallas.4} parent=5 // pred_check
      _
    $region58: #{net3d_layer_pallas.4} parent=5 // pred_check_branch
      %368 = sbr.rel (%p365) target = $region60
    $region59: #{net3d_layer_pallas.4} parent=5 // pred_region
      %s369 = ssub.s32 %s19, 1
      %s370 = smul.u32 32, %s24
      %p371 = scmp.lt.s32.totalorder %s370, 63
      %s372 = scalar_select %p371, %s370, 63
      %s373 = smul.addr %s372, 8
      %s374 = scalar_lea.vmem %s0, %s373
      %p375 = pneg %p45
      %p376 = pneg %p42
      %s377 = smul.u32 32, %s24
      %p378 = scmp.lt.s32.totalorder %s377, 63
      %s379 = scalar_select %p378, %s377, 63
      %s380 = smul.addr %s379, 8
      %s381 = scalar_lea.vmem %s1, %s380
      %p382 = pneg %p71
      %p383 = pneg %p68
      %s384 = smul.u32 32, %s24
      %p385 = scmp.lt.s32.totalorder %s384, 63
      %s386 = scalar_select %p385, %s384, 63
      %s387 = smul.addr %s386, 8
      %s388 = scalar_lea.vmem %s2, %s387
      %p389 = pneg %p97
      %p390 = pneg %p94
      %p391 = pneg %p118
      %p392 = pneg %p115
      %p393 = pneg %p139
      %p394 = pneg %p136
      %p395 = pneg %p160
      %p396 = pneg %p157
      %p397 = pneg %p181
      %p398 = pneg %p178
      %p399 = pneg %p202
      %p400 = pneg %p199
      %p401 = pneg %p223
      %p402 = pneg %p220
      %p403 = pneg %p244
      %p404 = pneg %p241
      %p405 = pneg %p270
      %p406 = pneg %p267
      %s407 = smul.u32 32, %s24
      %p408 = scmp.lt.s32.totalorder %s407, 63
      %s409 = scalar_select %p408, %s407, 63
      %s410 = smul.addr %s409, 8
      %s411 = scalar_lea.vmem %s10, %s410
      %p412 = pneg %p296
      %p413 = pneg %p293
      %s414 = smul.u32 32, %s24
      %p415 = scmp.lt.s32.totalorder %s414, 63
      %s416 = scalar_select %p415, %s414, 63
      %s417 = smul.addr %s416, 8
      %s418 = scalar_lea.vmem %s11, %s417
      %s419 = smul.u32 32, %s24
      %p420 = scmp.lt.s32.totalorder %s419, 63
      %s421 = scalar_select %p420, %s419, 63
      %s422 = smul.addr %s421, 8
      %s423 = scalar_lea.vmem %s0, %s422
      %s424 = smul.u32 32, %s24
      %s425 = smul.u32 32, %s24
      %p426 = scmp.lt.s32.totalorder %s425, 63
      %s427 = scalar_select %p426, %s425, 63
      %s428 = smul.addr %s427, 8
      %s429 = scalar_lea.vmem %s1, %s428
      %s430 = smul.u32 32, %s24
      %s431 = smul.u32 32, %s24
      %p432 = scmp.lt.s32.totalorder %s431, 63
      %s433 = scalar_select %p432, %s431, 63
      %s434 = smul.addr %s433, 8
      %s435 = scalar_lea.vmem %s2, %s434
      %s436 = smul.u32 32, %s24
      %s437 = smul.u32 32, %s24
      %p438 = scmp.lt.s32.totalorder %s437, 63
      %s439 = scalar_select %p438, %s437, 63
      %s440 = smul.addr %s439, 8
      %s441 = scalar_lea.vmem %s10, %s440
      %s442 = smul.u32 32, %s24
      %s443 = smul.u32 32, %s24
      %p444 = scmp.lt.s32.totalorder %s443, 63
      %s445 = scalar_select %p444, %s443, 63
      %s446 = smul.addr %s445, 8
      %s447 = scalar_lea.vmem %s11, %s446
      %s448 = smul.u32 32, %s24
      %v449 = vld [vmem:[%s435] sm:$0xff]
      %v450 = vld [vmem:[%s435 + $0x8] sm:$0xff]
      %v451 = vld [vmem:[%s435 + $0x10] sm:$0xff]
      %v452 = vld [vmem:[%s435 + $0x18] sm:$0xff]
      %v453 = vld [vmem:[%s435 + $0x20] sm:$0xff]
      %v454 = vld [vmem:[%s435 + $0x28] sm:$0xff]
      %v455 = vld [vmem:[%s435 + $0x30] sm:$0xff]
      %v456 = vld [vmem:[%s435 + $0x38] sm:$0xff]
      %v457 = vld [vmem:[%s435 + $0x40] sm:$0xff]
      %v458 = vld [vmem:[%s435 + $0x48] sm:$0xff]
      %v459 = vld [vmem:[%s435 + $0x50] sm:$0xff]
      %v460 = vld [vmem:[%s435 + $0x58] sm:$0xff]
      %v461 = vld [vmem:[%s435 + $0x60] sm:$0xff]
      %v462 = vld [vmem:[%s435 + $0x68] sm:$0xff]
      %v463 = vld [vmem:[%s435 + $0x70] sm:$0xff]
      %v464 = vld [vmem:[%s435 + $0x78] sm:$0xff]
      %v465 = vld [vmem:[%s435 + $0x80] sm:$0xff]
      %v466 = vld [vmem:[%s435 + $0x88] sm:$0xff]
      %v467 = vld [vmem:[%s435 + $0x90] sm:$0xff]
      %v468 = vld [vmem:[%s435 + $0x98] sm:$0xff]
      %v469 = vld [vmem:[%s435 + $0xa0] sm:$0xff]
      %v470 = vld [vmem:[%s435 + $0xa8] sm:$0xff]
      %v471 = vld [vmem:[%s435 + $0xb0] sm:$0xff]
      %v472 = vld [vmem:[%s435 + $0xb8] sm:$0xff]
      %v473 = vld [vmem:[%s435 + $0xc0] sm:$0xff]
      %v474 = vld [vmem:[%s435 + $0xc8] sm:$0xff]
      %v475 = vld [vmem:[%s435 + $0xd0] sm:$0xff]
      %v476 = vld [vmem:[%s435 + $0xd8] sm:$0xff]
      %v477 = vld [vmem:[%s435 + $0xe0] sm:$0xff]
      %v478 = vld [vmem:[%s435 + $0xe8] sm:$0xff]
      %v479 = vld [vmem:[%s435 + $0xf0] sm:$0xff]
      %v480 = vld [vmem:[%s435 + $0xf8] sm:$0xff]
      %v481 = vlaneseq
      %v482 = vand.u32 %v481, 127
      %v483 = vld [vmem:[%s423] sm:$0xff]
      %v484 = vld [vmem:[%s423 + $0x8] sm:$0xff]
      %v485 = vld [vmem:[%s423 + $0x10] sm:$0xff]
      %v486 = vld [vmem:[%s423 + $0x18] sm:$0xff]
      %v487 = vld [vmem:[%s423 + $0x20] sm:$0xff]
      %v488 = vld [vmem:[%s423 + $0x28] sm:$0xff]
      %v489 = vld [vmem:[%s423 + $0x30] sm:$0xff]
      %v490 = vld [vmem:[%s423 + $0x38] sm:$0xff]
      %v491 = vld [vmem:[%s423 + $0x40] sm:$0xff]
      %v492 = vld [vmem:[%s423 + $0x48] sm:$0xff]
      %v493 = vld [vmem:[%s423 + $0x50] sm:$0xff]
      %v494 = vld [vmem:[%s423 + $0x58] sm:$0xff]
      %v495 = vld [vmem:[%s423 + $0x60] sm:$0xff]
      %v496 = vld [vmem:[%s423 + $0x68] sm:$0xff]
      %v497 = vld [vmem:[%s423 + $0x70] sm:$0xff]
      %v498 = vld [vmem:[%s423 + $0x78] sm:$0xff]
      %v499 = vld [vmem:[%s423 + $0x80] sm:$0xff]
      %v500 = vld [vmem:[%s423 + $0x88] sm:$0xff]
      %v501 = vld [vmem:[%s423 + $0x90] sm:$0xff]
      %v502 = vld [vmem:[%s423 + $0x98] sm:$0xff]
      %v503 = vld [vmem:[%s423 + $0xa0] sm:$0xff]
      %v504 = vld [vmem:[%s423 + $0xa8] sm:$0xff]
      %v505 = vld [vmem:[%s423 + $0xb0] sm:$0xff]
      %v506 = vld [vmem:[%s423 + $0xb8] sm:$0xff]
      %v507 = vld [vmem:[%s423 + $0xc0] sm:$0xff]
      %v508 = vld [vmem:[%s423 + $0xc8] sm:$0xff]
      %v509 = vld [vmem:[%s423 + $0xd0] sm:$0xff]
      %v510 = vld [vmem:[%s423 + $0xd8] sm:$0xff]
      %v511 = vld [vmem:[%s423 + $0xe0] sm:$0xff]
      %v512 = vld [vmem:[%s423 + $0xe8] sm:$0xff]
      %v513 = vld [vmem:[%s423 + $0xf0] sm:$0xff]
      %v514 = vld [vmem:[%s423 + $0xf8] sm:$0xff]
      %515 = vset.pattern.permute.xlu0 0
      %516 = vperm.xlu0 %515, %v483
      %v517 = vpop.permute.xlu0 %516
      %518 = vset.pattern.permute.xlu0 0
      %519 = vperm.xlu0 %518, %v484
      %v520 = vpop.permute.xlu0 %519
      %521 = vset.pattern.permute.xlu0 0
      %522 = vperm.xlu0 %521, %v485
      %v523 = vpop.permute.xlu0 %522
      %524 = vset.pattern.permute.xlu0 0
      %525 = vperm.xlu0 %524, %v486
      %v526 = vpop.permute.xlu0 %525
      %527 = vset.pattern.permute.xlu0 0
      %528 = vperm.xlu0 %527, %v487
      %v529 = vpop.permute.xlu0 %528
      %530 = vset.pattern.permute.xlu0 0
      %531 = vperm.xlu0 %530, %v488
      %v532 = vpop.permute.xlu0 %531
      %533 = vset.pattern.permute.xlu0 0
      %534 = vperm.xlu0 %533, %v489
      %v535 = vpop.permute.xlu0 %534
      %536 = vset.pattern.permute.xlu0 0
      %537 = vperm.xlu0 %536, %v490
      %v538 = vpop.permute.xlu0 %537
      %539 = vset.pattern.permute.xlu0 0
      %540 = vperm.xlu0 %539, %v491
      %v541 = vpop.permute.xlu0 %540
      %542 = vset.pattern.permute.xlu0 0
      %543 = vperm.xlu0 %542, %v492
      %v544 = vpop.permute.xlu0 %543
      %545 = vset.pattern.permute.xlu0 0
      %546 = vperm.xlu0 %545, %v493
      %v547 = vpop.permute.xlu0 %546
      %548 = vset.pattern.permute.xlu0 0
      %549 = vperm.xlu0 %548, %v494
      %v550 = vpop.permute.xlu0 %549
      %551 = vset.pattern.permute.xlu0 0
      %552 = vperm.xlu0 %551, %v495
      %v553 = vpop.permute.xlu0 %552
      %554 = vset.pattern.permute.xlu0 0
      %555 = vperm.xlu0 %554, %v496
      %v556 = vpop.permute.xlu0 %555
      %557 = vset.pattern.permute.xlu0 0
      %558 = vperm.xlu0 %557, %v497
      %v559 = vpop.permute.xlu0 %558
      %560 = vset.pattern.permute.xlu0 0
      %561 = vperm.xlu0 %560, %v498
      %v562 = vpop.permute.xlu0 %561
      %563 = vset.pattern.permute.xlu0 0
      %564 = vperm.xlu0 %563, %v499
      %v565 = vpop.permute.xlu0 %564
      %566 = vset.pattern.permute.xlu0 0
      %567 = vperm.xlu0 %566, %v500
      %v568 = vpop.permute.xlu0 %567
      %569 = vset.pattern.permute.xlu0 0
      %570 = vperm.xlu0 %569, %v501
      %v571 = vpop.permute.xlu0 %570
      %572 = vset.pattern.permute.xlu0 0
      %573 = vperm.xlu0 %572, %v502
      %v574 = vpop.permute.xlu0 %573
      %575 = vset.pattern.permute.xlu0 0
      %576 = vperm.xlu0 %575, %v503
      %v577 = vpop.permute.xlu0 %576
      %578 = vset.pattern.permute.xlu0 0
      %579 = vperm.xlu0 %578, %v504
      %v580 = vpop.permute.xlu0 %579
      %581 = vset.pattern.permute.xlu0 0
      %582 = vperm.xlu0 %581, %v505
      %v583 = vpop.permute.xlu0 %582
      %584 = vset.pattern.permute.xlu0 0
      %585 = vperm.xlu0 %584, %v506
      %v586 = vpop.permute.xlu0 %585
      %587 = vset.pattern.permute.xlu0 0
      %588 = vperm.xlu0 %587, %v507
      %v589 = vpop.permute.xlu0 %588
      %590 = vset.pattern.permute.xlu0 0
      %591 = vperm.xlu0 %590, %v508
      %v592 = vpop.permute.xlu0 %591
      %593 = vset.pattern.permute.xlu0 0
      %594 = vperm.xlu0 %593, %v509
      %v595 = vpop.permute.xlu0 %594
      %596 = vset.pattern.permute.xlu0 0
      %597 = vperm.xlu0 %596, %v510
      %v598 = vpop.permute.xlu0 %597
      %599 = vset.pattern.permute.xlu0 0
      %600 = vperm.xlu0 %599, %v511
      %v601 = vpop.permute.xlu0 %600
      %602 = vset.pattern.permute.xlu0 0
      %603 = vperm.xlu0 %602, %v512
      %v604 = vpop.permute.xlu0 %603
      %605 = vset.pattern.permute.xlu0 0
      %606 = vperm.xlu0 %605, %v513
      %v607 = vpop.permute.xlu0 %606
      %608 = vset.pattern.permute.xlu0 0
      %609 = vperm.xlu0 %608, %v514
      %v610 = vpop.permute.xlu0 %609
      %vm611 = vcmp.eq.s32.totalorder %v482, %v517
      %vm612 = vcmp.eq.s32.totalorder %v482, %v520
      %vm613 = vcmp.eq.s32.totalorder %v482, %v523
      %vm614 = vcmp.eq.s32.totalorder %v482, %v526
      %vm615 = vcmp.eq.s32.totalorder %v482, %v529
      %vm616 = vcmp.eq.s32.totalorder %v482, %v532
      %vm617 = vcmp.eq.s32.totalorder %v482, %v535
      %vm618 = vcmp.eq.s32.totalorder %v482, %v538
      %vm619 = vcmp.eq.s32.totalorder %v482, %v541
      %vm620 = vcmp.eq.s32.totalorder %v482, %v544
      %vm621 = vcmp.eq.s32.totalorder %v482, %v547
      %vm622 = vcmp.eq.s32.totalorder %v482, %v550
      %vm623 = vcmp.eq.s32.totalorder %v482, %v553
      %vm624 = vcmp.eq.s32.totalorder %v482, %v556
      %vm625 = vcmp.eq.s32.totalorder %v482, %v559
      %vm626 = vcmp.eq.s32.totalorder %v482, %v562
      %vm627 = vcmp.eq.s32.totalorder %v482, %v565
      %vm628 = vcmp.eq.s32.totalorder %v482, %v568
      %vm629 = vcmp.eq.s32.totalorder %v482, %v571
      %vm630 = vcmp.eq.s32.totalorder %v482, %v574
      %vm631 = vcmp.eq.s32.totalorder %v482, %v577
      %vm632 = vcmp.eq.s32.totalorder %v482, %v580
      %vm633 = vcmp.eq.s32.totalorder %v482, %v583
      %vm634 = vcmp.eq.s32.totalorder %v482, %v586
      %vm635 = vcmp.eq.s32.totalorder %v482, %v589
      %vm636 = vcmp.eq.s32.totalorder %v482, %v592
      %vm637 = vcmp.eq.s32.totalorder %v482, %v595
      %vm638 = vcmp.eq.s32.totalorder %v482, %v598
      %vm639 = vcmp.eq.s32.totalorder %v482, %v601
      %vm640 = vcmp.eq.s32.totalorder %v482, %v604
      %vm641 = vcmp.eq.s32.totalorder %v482, %v607
      %vm642 = vcmp.eq.s32.totalorder %v482, %v610
      %v643 = vsel %vm611, 1, 0
      %v644 = vsel %vm612, 1, 0
      %v645 = vsel %vm613, 1, 0
      %v646 = vsel %vm614, 1, 0
      %v647 = vsel %vm615, 1, 0
      %v648 = vsel %vm616, 1, 0
      %v649 = vsel %vm617, 1, 0
      %v650 = vsel %vm618, 1, 0
      %v651 = vsel %vm619, 1, 0
      %v652 = vsel %vm620, 1, 0
      %v653 = vsel %vm621, 1, 0
      %v654 = vsel %vm622, 1, 0
      %v655 = vsel %vm623, 1, 0
      %v656 = vsel %vm624, 1, 0
      %v657 = vsel %vm625, 1, 0
      %v658 = vsel %vm626, 1, 0
      %v659 = vsel %vm627, 1, 0
      %v660 = vsel %vm628, 1, 0
      %v661 = vsel %vm629, 1, 0
      %v662 = vsel %vm630, 1, 0
      %v663 = vsel %vm631, 1, 0
      %v664 = vsel %vm632, 1, 0
      %v665 = vsel %vm633, 1, 0
      %v666 = vsel %vm634, 1, 0
      %v667 = vsel %vm635, 1, 0
      %v668 = vsel %vm636, 1, 0
      %v669 = vsel %vm637, 1, 0
      %v670 = vsel %vm638, 1, 0
      %v671 = vsel %vm639, 1, 0
      %v672 = vsel %vm640, 1, 0
      %v673 = vsel %vm641, 1, 0
      %v674 = vsel %vm642, 1, 0
      %v675 = vcvt.s32.f32 %v643
      %v676 = vcvt.s32.f32 %v644
      %v677 = vcvt.s32.f32 %v645
      %v678 = vcvt.s32.f32 %v646
      %v679 = vcvt.s32.f32 %v647
      %v680 = vcvt.s32.f32 %v648
      %v681 = vcvt.s32.f32 %v649
      %v682 = vcvt.s32.f32 %v650
      %v683 = vcvt.s32.f32 %v651
      %v684 = vcvt.s32.f32 %v652
      %v685 = vcvt.s32.f32 %v653
      %v686 = vcvt.s32.f32 %v654
      %v687 = vcvt.s32.f32 %v655
      %v688 = vcvt.s32.f32 %v656
      %v689 = vcvt.s32.f32 %v657
      %v690 = vcvt.s32.f32 %v658
      %v691 = vcvt.s32.f32 %v659
      %v692 = vcvt.s32.f32 %v660
      %v693 = vcvt.s32.f32 %v661
      %v694 = vcvt.s32.f32 %v662
      %v695 = vcvt.s32.f32 %v663
      %v696 = vcvt.s32.f32 %v664
      %v697 = vcvt.s32.f32 %v665
      %v698 = vcvt.s32.f32 %v666
      %v699 = vcvt.s32.f32 %v667
      %v700 = vcvt.s32.f32 %v668
      %v701 = vcvt.s32.f32 %v669
      %v702 = vcvt.s32.f32 %v670
      %v703 = vcvt.s32.f32 %v671
      %v704 = vcvt.s32.f32 %v672
      %v705 = vcvt.s32.f32 %v673
      %v706 = vcvt.s32.f32 %v674
      %v707 = vld [vmem:[%s429] sm:$0xff]
      %v708 = vld [vmem:[%s429 + $0x8] sm:$0xff]
      %v709 = vld [vmem:[%s429 + $0x10] sm:$0xff]
      %v710 = vld [vmem:[%s429 + $0x18] sm:$0xff]
      %v711 = vld [vmem:[%s429 + $0x20] sm:$0xff]
      %v712 = vld [vmem:[%s429 + $0x28] sm:$0xff]
      %v713 = vld [vmem:[%s429 + $0x30] sm:$0xff]
      %v714 = vld [vmem:[%s429 + $0x38] sm:$0xff]
      %v715 = vld [vmem:[%s429 + $0x40] sm:$0xff]
      %v716 = vld [vmem:[%s429 + $0x48] sm:$0xff]
      %v717 = vld [vmem:[%s429 + $0x50] sm:$0xff]
      %v718 = vld [vmem:[%s429 + $0x58] sm:$0xff]
      %v719 = vld [vmem:[%s429 + $0x60] sm:$0xff]
      %v720 = vld [vmem:[%s429 + $0x68] sm:$0xff]
      %v721 = vld [vmem:[%s429 + $0x70] sm:$0xff]
      %v722 = vld [vmem:[%s429 + $0x78] sm:$0xff]
      %v723 = vld [vmem:[%s429 + $0x80] sm:$0xff]
      %v724 = vld [vmem:[%s429 + $0x88] sm:$0xff]
      %v725 = vld [vmem:[%s429 + $0x90] sm:$0xff]
      %v726 = vld [vmem:[%s429 + $0x98] sm:$0xff]
      %v727 = vld [vmem:[%s429 + $0xa0] sm:$0xff]
      %v728 = vld [vmem:[%s429 + $0xa8] sm:$0xff]
      %v729 = vld [vmem:[%s429 + $0xb0] sm:$0xff]
      %v730 = vld [vmem:[%s429 + $0xb8] sm:$0xff]
      %v731 = vld [vmem:[%s429 + $0xc0] sm:$0xff]
      %v732 = vld [vmem:[%s429 + $0xc8] sm:$0xff]
      %v733 = vld [vmem:[%s429 + $0xd0] sm:$0xff]
      %v734 = vld [vmem:[%s429 + $0xd8] sm:$0xff]
      %v735 = vld [vmem:[%s429 + $0xe0] sm:$0xff]
      %v736 = vld [vmem:[%s429 + $0xe8] sm:$0xff]
      %v737 = vld [vmem:[%s429 + $0xf0] sm:$0xff]
      %v738 = vld [vmem:[%s429 + $0xf8] sm:$0xff]
      %739 = vset.pattern.permute.xlu0 0
      %740 = vperm.xlu0 %739, %v707
      %v741 = vpop.permute.xlu0 %740
      %742 = vset.pattern.permute.xlu0 0
      %743 = vperm.xlu0 %742, %v708
      %v744 = vpop.permute.xlu0 %743
      %745 = vset.pattern.permute.xlu0 0
      %746 = vperm.xlu0 %745, %v709
      %v747 = vpop.permute.xlu0 %746
      %748 = vset.pattern.permute.xlu0 0
      %749 = vperm.xlu0 %748, %v710
      %v750 = vpop.permute.xlu0 %749
      %751 = vset.pattern.permute.xlu0 0
      %752 = vperm.xlu0 %751, %v711
      %v753 = vpop.permute.xlu0 %752
      %754 = vset.pattern.permute.xlu0 0
      %755 = vperm.xlu0 %754, %v712
      %v756 = vpop.permute.xlu0 %755
      %757 = vset.pattern.permute.xlu0 0
      %758 = vperm.xlu0 %757, %v713
      %v759 = vpop.permute.xlu0 %758
      %760 = vset.pattern.permute.xlu0 0
      %761 = vperm.xlu0 %760, %v714
      %v762 = vpop.permute.xlu0 %761
      %763 = vset.pattern.permute.xlu0 0
      %764 = vperm.xlu0 %763, %v715
      %v765 = vpop.permute.xlu0 %764
      %766 = vset.pattern.permute.xlu0 0
      %767 = vperm.xlu0 %766, %v716
      %v768 = vpop.permute.xlu0 %767
      %769 = vset.pattern.permute.xlu0 0
      %770 = vperm.xlu0 %769, %v717
      %v771 = vpop.permute.xlu0 %770
      %772 = vset.pattern.permute.xlu0 0
      %773 = vperm.xlu0 %772, %v718
      %v774 = vpop.permute.xlu0 %773
      %775 = vset.pattern.permute.xlu0 0
      %776 = vperm.xlu0 %775, %v719
      %v777 = vpop.permute.xlu0 %776
      %778 = vset.pattern.permute.xlu0 0
      %779 = vperm.xlu0 %778, %v720
      %v780 = vpop.permute.xlu0 %779
      %781 = vset.pattern.permute.xlu0 0
      %782 = vperm.xlu0 %781, %v721
      %v783 = vpop.permute.xlu0 %782
      %784 = vset.pattern.permute.xlu0 0
      %785 = vperm.xlu0 %784, %v722
      %v786 = vpop.permute.xlu0 %785
      %787 = vset.pattern.permute.xlu0 0
      %788 = vperm.xlu0 %787, %v723
      %v789 = vpop.permute.xlu0 %788
      %790 = vset.pattern.permute.xlu0 0
      %791 = vperm.xlu0 %790, %v724
      %v792 = vpop.permute.xlu0 %791
      %793 = vset.pattern.permute.xlu0 0
      %794 = vperm.xlu0 %793, %v725
      %v795 = vpop.permute.xlu0 %794
      %796 = vset.pattern.permute.xlu0 0
      %797 = vperm.xlu0 %796, %v726
      %v798 = vpop.permute.xlu0 %797
      %799 = vset.pattern.permute.xlu0 0
      %800 = vperm.xlu0 %799, %v727
      %v801 = vpop.permute.xlu0 %800
      %802 = vset.pattern.permute.xlu0 0
      %803 = vperm.xlu0 %802, %v728
      %v804 = vpop.permute.xlu0 %803
      %805 = vset.pattern.permute.xlu0 0
      %806 = vperm.xlu0 %805, %v729
      %v807 = vpop.permute.xlu0 %806
      %808 = vset.pattern.permute.xlu0 0
      %809 = vperm.xlu0 %808, %v730
      %v810 = vpop.permute.xlu0 %809
      %811 = vset.pattern.permute.xlu0 0
      %812 = vperm.xlu0 %811, %v731
      %v813 = vpop.permute.xlu0 %812
      %814 = vset.pattern.permute.xlu0 0
      %815 = vperm.xlu0 %814, %v732
      %v816 = vpop.permute.xlu0 %815
      %817 = vset.pattern.permute.xlu0 0
      %818 = vperm.xlu0 %817, %v733
      %v819 = vpop.permute.xlu0 %818
      %820 = vset.pattern.permute.xlu0 0
      %821 = vperm.xlu0 %820, %v734
      %v822 = vpop.permute.xlu0 %821
      %823 = vset.pattern.permute.xlu0 0
      %824 = vperm.xlu0 %823, %v735
      %v825 = vpop.permute.xlu0 %824
      %826 = vset.pattern.permute.xlu0 0
      %827 = vperm.xlu0 %826, %v736
      %v828 = vpop.permute.xlu0 %827
      %829 = vset.pattern.permute.xlu0 0
      %830 = vperm.xlu0 %829, %v737
      %v831 = vpop.permute.xlu0 %830
      %832 = vset.pattern.permute.xlu0 0
      %833 = vperm.xlu0 %832, %v738
      %v834 = vpop.permute.xlu0 %833
      %vm835 = vcmp.eq.s32.totalorder %v482, %v741
      %vm836 = vcmp.eq.s32.totalorder %v482, %v744
      %vm837 = vcmp.eq.s32.totalorder %v482, %v747
      %vm838 = vcmp.eq.s32.totalorder %v482, %v750
      %vm839 = vcmp.eq.s32.totalorder %v482, %v753
      %vm840 = vcmp.eq.s32.totalorder %v482, %v756
      %vm841 = vcmp.eq.s32.totalorder %v482, %v759
      %vm842 = vcmp.eq.s32.totalorder %v482, %v762
      %vm843 = vcmp.eq.s32.totalorder %v482, %v765
      %vm844 = vcmp.eq.s32.totalorder %v482, %v768
      %vm845 = vcmp.eq.s32.totalorder %v482, %v771
      %vm846 = vcmp.eq.s32.totalorder %v482, %v774
      %vm847 = vcmp.eq.s32.totalorder %v482, %v777
      %vm848 = vcmp.eq.s32.totalorder %v482, %v780
      %vm849 = vcmp.eq.s32.totalorder %v482, %v783
      %vm850 = vcmp.eq.s32.totalorder %v482, %v786
      %vm851 = vcmp.eq.s32.totalorder %v482, %v789
      %vm852 = vcmp.eq.s32.totalorder %v482, %v792
      %vm853 = vcmp.eq.s32.totalorder %v482, %v795
      %vm854 = vcmp.eq.s32.totalorder %v482, %v798
      %vm855 = vcmp.eq.s32.totalorder %v482, %v801
      %vm856 = vcmp.eq.s32.totalorder %v482, %v804
      %vm857 = vcmp.eq.s32.totalorder %v482, %v807
      %vm858 = vcmp.eq.s32.totalorder %v482, %v810
      %vm859 = vcmp.eq.s32.totalorder %v482, %v813
      %vm860 = vcmp.eq.s32.totalorder %v482, %v816
      %vm861 = vcmp.eq.s32.totalorder %v482, %v819
      %vm862 = vcmp.eq.s32.totalorder %v482, %v822
      %vm863 = vcmp.eq.s32.totalorder %v482, %v825
      %vm864 = vcmp.eq.s32.totalorder %v482, %v828
      %vm865 = vcmp.eq.s32.totalorder %v482, %v831
      %vm866 = vcmp.eq.s32.totalorder %v482, %v834
      %v867 = vsel %vm835, 1, 0
      %v868 = vsel %vm836, 1, 0
      %v869 = vsel %vm837, 1, 0
      %v870 = vsel %vm838, 1, 0
      %v871 = vsel %vm839, 1, 0
      %v872 = vsel %vm840, 1, 0
      %v873 = vsel %vm841, 1, 0
      %v874 = vsel %vm842, 1, 0
      %v875 = vsel %vm843, 1, 0
      %v876 = vsel %vm844, 1, 0
      %v877 = vsel %vm845, 1, 0
      %v878 = vsel %vm846, 1, 0
      %v879 = vsel %vm847, 1, 0
      %v880 = vsel %vm848, 1, 0
      %v881 = vsel %vm849, 1, 0
      %v882 = vsel %vm850, 1, 0
      %v883 = vsel %vm851, 1, 0
      %v884 = vsel %vm852, 1, 0
      %v885 = vsel %vm853, 1, 0
      %v886 = vsel %vm854, 1, 0
      %v887 = vsel %vm855, 1, 0
      %v888 = vsel %vm856, 1, 0
      %v889 = vsel %vm857, 1, 0
      %v890 = vsel %vm858, 1, 0
      %v891 = vsel %vm859, 1, 0
      %v892 = vsel %vm860, 1, 0
      %v893 = vsel %vm861, 1, 0
      %v894 = vsel %vm862, 1, 0
      %v895 = vsel %vm863, 1, 0
      %v896 = vsel %vm864, 1, 0
      %v897 = vsel %vm865, 1, 0
      %v898 = vsel %vm866, 1, 0
      %v899 = vcvt.s32.f32 %v867
      %v900 = vcvt.s32.f32 %v868
      %v901 = vcvt.s32.f32 %v869
      %v902 = vcvt.s32.f32 %v870
      %v903 = vcvt.s32.f32 %v871
      %v904 = vcvt.s32.f32 %v872
      %v905 = vcvt.s32.f32 %v873
      %v906 = vcvt.s32.f32 %v874
      %v907 = vcvt.s32.f32 %v875
      %v908 = vcvt.s32.f32 %v876
      %v909 = vcvt.s32.f32 %v877
      %v910 = vcvt.s32.f32 %v878
      %v911 = vcvt.s32.f32 %v879
      %v912 = vcvt.s32.f32 %v880
      %v913 = vcvt.s32.f32 %v881
      %v914 = vcvt.s32.f32 %v882
      %v915 = vcvt.s32.f32 %v883
      %v916 = vcvt.s32.f32 %v884
      %v917 = vcvt.s32.f32 %v885
      %v918 = vcvt.s32.f32 %v886
      %v919 = vcvt.s32.f32 %v887
      %v920 = vcvt.s32.f32 %v888
      %v921 = vcvt.s32.f32 %v889
      %v922 = vcvt.s32.f32 %v890
      %v923 = vcvt.s32.f32 %v891
      %v924 = vcvt.s32.f32 %v892
      %v925 = vcvt.s32.f32 %v893
      %v926 = vcvt.s32.f32 %v894
      %v927 = vcvt.s32.f32 %v895
      %v928 = vcvt.s32.f32 %v896
      %v929 = vcvt.s32.f32 %v897
      %v930 = vcvt.s32.f32 %v898
      %v931 = vld [vmem:[%s3] sm:$0xff]
      %v932 = vld [vmem:[%s3 + $0x8] sm:$0xff]
      %v933 = vld [vmem:[%s3 + $0x10] sm:$0xff]
      %v934 = vld [vmem:[%s3 + $0x18] sm:$0xff]
      %v935 = vld [vmem:[%s3 + $0x20] sm:$0xff]
      %v936 = vld [vmem:[%s3 + $0x28] sm:$0xff]
      %v937 = vld [vmem:[%s3 + $0x30] sm:$0xff]
      %v938 = vld [vmem:[%s3 + $0x38] sm:$0xff]
      %v939 = vld [vmem:[%s3 + $0x40] sm:$0xff]
      %v940 = vld [vmem:[%s3 + $0x48] sm:$0xff]
      %v941 = vld [vmem:[%s3 + $0x50] sm:$0xff]
      %v942 = vld [vmem:[%s3 + $0x58] sm:$0xff]
      %v943 = vld [vmem:[%s3 + $0x60] sm:$0xff]
      %v944 = vld [vmem:[%s3 + $0x68] sm:$0xff]
      %v945 = vld [vmem:[%s3 + $0x70] sm:$0xff]
      %v946 = vld [vmem:[%s3 + $0x78] sm:$0xff]
      %v947 = vld [vmem:[%s4] sm:$0xff]
      %v948 = vld [vmem:[%s4 + $0x8] sm:$0xff]
      %v949 = vld [vmem:[%s4 + $0x10] sm:$0xff]
      %v950 = vld [vmem:[%s4 + $0x18] sm:$0xff]
      %v951 = vld [vmem:[%s4 + $0x20] sm:$0xff]
      %v952 = vld [vmem:[%s4 + $0x28] sm:$0xff]
      %v953 = vld [vmem:[%s4 + $0x30] sm:$0xff]
      %v954 = vld [vmem:[%s4 + $0x38] sm:$0xff]
      %v955 = vld [vmem:[%s4 + $0x40] sm:$0xff]
      %v956 = vld [vmem:[%s4 + $0x48] sm:$0xff]
      %v957 = vld [vmem:[%s4 + $0x50] sm:$0xff]
      %v958 = vld [vmem:[%s4 + $0x58] sm:$0xff]
      %v959 = vld [vmem:[%s4 + $0x60] sm:$0xff]
      %v960 = vld [vmem:[%s4 + $0x68] sm:$0xff]
      %v961 = vld [vmem:[%s4 + $0x70] sm:$0xff]
      %v962 = vld [vmem:[%s4 + $0x78] sm:$0xff]
      %963 = vmatpush.msra.mxu0 %v962
      %964 = vmatpush.msra.mxu0 %v961
      %965 = vmatpush.msra.mxu0 %v960
      %966 = vmatpush.msra.mxu0 %v959
      %967 = vmatpush.msra.mxu0 %v958
      %968 = vmatpush.msra.mxu0 %v957
      %969 = vmatpush.msra.mxu0 %v956
      %970 = vmatpush.msra.mxu0 %v955
      %971 = vmatpush.msra.mxu0 %v954
      %972 = vmatpush.msra.mxu0 %v953
      %973 = vmatpush.msra.mxu0 %v952
      %974 = vmatpush.msra.mxu0 %v951
      %975 = vmatpush.msra.mxu0 %v950
      %976 = vmatpush.msra.mxu0 %v949
      %977 = vmatpush.msra.mxu0 %v948
      %978 = vmatpush.msra.mxu0 %v947
      %979 = vmatmul.f32.gmra.mxu0 %v899
      %v980 = vpop.f32.mrf.mxu0
      %v981 = vadd.f32 0.0, %v980
      %982 = vmatmul.f32.gmra.mxu0 %v900
      %v983 = vpop.f32.mrf.mxu0
      %v984 = vadd.f32 0.0, %v983
      %985 = vmatmul.f32.gmra.mxu0 %v901
      %v986 = vpop.f32.mrf.mxu0
      %v987 = vadd.f32 0.0, %v986
      %988 = vmatmul.f32.gmra.mxu0 %v902
      %v989 = vpop.f32.mrf.mxu0
      %v990 = vadd.f32 0.0, %v989
      %991 = vmatmul.f32.gmra.mxu0 %v903
      %v992 = vpop.f32.mrf.mxu0
      %v993 = vadd.f32 0.0, %v992
      %994 = vmatmul.f32.gmra.mxu0 %v904
      %v995 = vpop.f32.mrf.mxu0
      %v996 = vadd.f32 0.0, %v995
      %997 = vmatmul.f32.gmra.mxu0 %v905
      %v998 = vpop.f32.mrf.mxu0
      %v999 = vadd.f32 0.0, %v998
      %1000 = vmatmul.f32.gmra.mxu0 %v906
      %v1001 = vpop.f32.mrf.mxu0
      %v1002 = vadd.f32 0.0, %v1001
      %1003 = vmatmul.f32.gmra.mxu0 %v907
      %v1004 = vpop.f32.mrf.mxu0
      %v1005 = vadd.f32 0.0, %v1004
      %1006 = vmatmul.f32.gmra.mxu0 %v908
      %v1007 = vpop.f32.mrf.mxu0
      %v1008 = vadd.f32 0.0, %v1007
      %1009 = vmatmul.f32.gmra.mxu0 %v909
      %v1010 = vpop.f32.mrf.mxu0
      %v1011 = vadd.f32 0.0, %v1010
      %1012 = vmatmul.f32.gmra.mxu0 %v910
      %v1013 = vpop.f32.mrf.mxu0
      %v1014 = vadd.f32 0.0, %v1013
      %1015 = vmatmul.f32.gmra.mxu0 %v911
      %v1016 = vpop.f32.mrf.mxu0
      %v1017 = vadd.f32 0.0, %v1016
      %1018 = vmatmul.f32.gmra.mxu0 %v912
      %v1019 = vpop.f32.mrf.mxu0
      %v1020 = vadd.f32 0.0, %v1019
      %1021 = vmatmul.f32.gmra.mxu0 %v913
      %v1022 = vpop.f32.mrf.mxu0
      %v1023 = vadd.f32 0.0, %v1022
      %1024 = vmatmul.f32.gmra.mxu0 %v914
      %v1025 = vpop.f32.mrf.mxu0
      %v1026 = vadd.f32 0.0, %v1025
      %1027 = vmatmul.f32.gmra.mxu0 %v915
      %v1028 = vpop.f32.mrf.mxu0
      %v1029 = vadd.f32 0.0, %v1028
      %1030 = vmatmul.f32.gmra.mxu0 %v916
      %v1031 = vpop.f32.mrf.mxu0
      %v1032 = vadd.f32 0.0, %v1031
      %1033 = vmatmul.f32.gmra.mxu0 %v917
      %v1034 = vpop.f32.mrf.mxu0
      %v1035 = vadd.f32 0.0, %v1034
      %1036 = vmatmul.f32.gmra.mxu0 %v918
      %v1037 = vpop.f32.mrf.mxu0
      %v1038 = vadd.f32 0.0, %v1037
      %1039 = vmatmul.f32.gmra.mxu0 %v919
      %v1040 = vpop.f32.mrf.mxu0
      %v1041 = vadd.f32 0.0, %v1040
      %1042 = vmatmul.f32.gmra.mxu0 %v920
      %v1043 = vpop.f32.mrf.mxu0
      %v1044 = vadd.f32 0.0, %v1043
      %1045 = vmatmul.f32.gmra.mxu0 %v921
      %v1046 = vpop.f32.mrf.mxu0
      %v1047 = vadd.f32 0.0, %v1046
      %1048 = vmatmul.f32.gmra.mxu0 %v922
      %v1049 = vpop.f32.mrf.mxu0
      %v1050 = vadd.f32 0.0, %v1049
      %1051 = vmatmul.f32.gmra.mxu0 %v923
      %v1052 = vpop.f32.mrf.mxu0
      %v1053 = vadd.f32 0.0, %v1052
      %1054 = vmatmul.f32.gmra.mxu0 %v924
      %v1055 = vpop.f32.mrf.mxu0
      %v1056 = vadd.f32 0.0, %v1055
      %1057 = vmatmul.f32.gmra.mxu0 %v925
      %v1058 = vpop.f32.mrf.mxu0
      %v1059 = vadd.f32 0.0, %v1058
      %1060 = vmatmul.f32.gmra.mxu0 %v926
      %v1061 = vpop.f32.mrf.mxu0
      %v1062 = vadd.f32 0.0, %v1061
      %1063 = vmatmul.f32.gmra.mxu0 %v927
      %v1064 = vpop.f32.mrf.mxu0
      %v1065 = vadd.f32 0.0, %v1064
      %1066 = vmatmul.f32.gmra.mxu0 %v928
      %v1067 = vpop.f32.mrf.mxu0
      %v1068 = vadd.f32 0.0, %v1067
      %1069 = vmatmul.f32.gmra.mxu0 %v929
      %v1070 = vpop.f32.mrf.mxu0
      %v1071 = vadd.f32 0.0, %v1070
      %1072 = vmatmul.f32.gmra.mxu0 %v930
      %v1073 = vpop.f32.mrf.mxu0
      %v1074 = vadd.f32 0.0, %v1073
      %1075 = vdwg.mxu0
      %1076 = vmatpush.msra.mxu0 %v946
      %1077 = vmatpush.msra.mxu0 %v945
      %1078 = vmatpush.msra.mxu0 %v944
      %1079 = vmatpush.msra.mxu0 %v943
      %1080 = vmatpush.msra.mxu0 %v942
      %1081 = vmatpush.msra.mxu0 %v941
      %1082 = vmatpush.msra.mxu0 %v940
      %1083 = vmatpush.msra.mxu0 %v939
      %1084 = vmatpush.msra.mxu0 %v938
      %1085 = vmatpush.msra.mxu0 %v937
      %1086 = vmatpush.msra.mxu0 %v936
      %1087 = vmatpush.msra.mxu0 %v935
      %1088 = vmatpush.msra.mxu0 %v934
      %1089 = vmatpush.msra.mxu0 %v933
      %1090 = vmatpush.msra.mxu0 %v932
      %1091 = vmatpush.msra.mxu0 %v931
      %1092 = vmatmul.f32.gmra.mxu0 %v675
      %v1093 = vpop.f32.mrf.mxu0
      %v1094 = vadd.f32 %v981, %v1093
      %1095 = vmatmul.f32.gmra.mxu0 %v676
      %v1096 = vpop.f32.mrf.mxu0
      %v1097 = vadd.f32 %v984, %v1096
      %1098 = vmatmul.f32.gmra.mxu0 %v677
      %v1099 = vpop.f32.mrf.mxu0
      %v1100 = vadd.f32 %v987, %v1099
      %1101 = vmatmul.f32.gmra.mxu0 %v678
      %v1102 = vpop.f32.mrf.mxu0
      %v1103 = vadd.f32 %v990, %v1102
      %1104 = vmatmul.f32.gmra.mxu0 %v679
      %v1105 = vpop.f32.mrf.mxu0
      %v1106 = vadd.f32 %v993, %v1105
      %1107 = vmatmul.f32.gmra.mxu0 %v680
      %v1108 = vpop.f32.mrf.mxu0
      %v1109 = vadd.f32 %v996, %v1108
      %1110 = vmatmul.f32.gmra.mxu0 %v681
      %v1111 = vpop.f32.mrf.mxu0
      %v1112 = vadd.f32 %v999, %v1111
      %1113 = vmatmul.f32.gmra.mxu0 %v682
      %v1114 = vpop.f32.mrf.mxu0
      %v1115 = vadd.f32 %v1002, %v1114
      %1116 = vmatmul.f32.gmra.mxu0 %v683
      %v1117 = vpop.f32.mrf.mxu0
      %v1118 = vadd.f32 %v1005, %v1117
      %1119 = vmatmul.f32.gmra.mxu0 %v684
      %v1120 = vpop.f32.mrf.mxu0
      %v1121 = vadd.f32 %v1008, %v1120
      %1122 = vmatmul.f32.gmra.mxu0 %v685
      %v1123 = vpop.f32.mrf.mxu0
      %v1124 = vadd.f32 %v1011, %v1123
      %1125 = vmatmul.f32.gmra.mxu0 %v686
      %v1126 = vpop.f32.mrf.mxu0
      %v1127 = vadd.f32 %v1014, %v1126
      %1128 = vmatmul.f32.gmra.mxu0 %v687
      %v1129 = vpop.f32.mrf.mxu0
      %v1130 = vadd.f32 %v1017, %v1129
      %1131 = vmatmul.f32.gmra.mxu0 %v688
      %v1132 = vpop.f32.mrf.mxu0
      %v1133 = vadd.f32 %v1020, %v1132
      %1134 = vmatmul.f32.gmra.mxu0 %v689
      %v1135 = vpop.f32.mrf.mxu0
      %v1136 = vadd.f32 %v1023, %v1135
      %1137 = vmatmul.f32.gmra.mxu0 %v690
      %v1138 = vpop.f32.mrf.mxu0
      %v1139 = vadd.f32 %v1026, %v1138
      %1140 = vmatmul.f32.gmra.mxu0 %v691
      %v1141 = vpop.f32.mrf.mxu0
      %v1142 = vadd.f32 %v1029, %v1141
      %1143 = vmatmul.f32.gmra.mxu0 %v692
      %v1144 = vpop.f32.mrf.mxu0
      %v1145 = vadd.f32 %v1032, %v1144
      %1146 = vmatmul.f32.gmra.mxu0 %v693
      %v1147 = vpop.f32.mrf.mxu0
      %v1148 = vadd.f32 %v1035, %v1147
      %1149 = vmatmul.f32.gmra.mxu0 %v694
      %v1150 = vpop.f32.mrf.mxu0
      %v1151 = vadd.f32 %v1038, %v1150
      %1152 = vmatmul.f32.gmra.mxu0 %v695
      %v1153 = vpop.f32.mrf.mxu0
      %v1154 = vadd.f32 %v1041, %v1153
      %1155 = vmatmul.f32.gmra.mxu0 %v696
      %v1156 = vpop.f32.mrf.mxu0
      %v1157 = vadd.f32 %v1044, %v1156
      %1158 = vmatmul.f32.gmra.mxu0 %v697
      %v1159 = vpop.f32.mrf.mxu0
      %v1160 = vadd.f32 %v1047, %v1159
      %1161 = vmatmul.f32.gmra.mxu0 %v698
      %v1162 = vpop.f32.mrf.mxu0
      %v1163 = vadd.f32 %v1050, %v1162
      %1164 = vmatmul.f32.gmra.mxu0 %v699
      %v1165 = vpop.f32.mrf.mxu0
      %v1166 = vadd.f32 %v1053, %v1165
      %1167 = vmatmul.f32.gmra.mxu0 %v700
      %v1168 = vpop.f32.mrf.mxu0
      %v1169 = vadd.f32 %v1056, %v1168
      %1170 = vmatmul.f32.gmra.mxu0 %v701
      %v1171 = vpop.f32.mrf.mxu0
      %v1172 = vadd.f32 %v1059, %v1171
      %1173 = vmatmul.f32.gmra.mxu0 %v702
      %v1174 = vpop.f32.mrf.mxu0
      %v1175 = vadd.f32 %v1062, %v1174
      %1176 = vmatmul.f32.gmra.mxu0 %v703
      %v1177 = vpop.f32.mrf.mxu0
      %v1178 = vadd.f32 %v1065, %v1177
      %1179 = vmatmul.f32.gmra.mxu0 %v704
      %v1180 = vpop.f32.mrf.mxu0
      %v1181 = vadd.f32 %v1068, %v1180
      %1182 = vmatmul.f32.gmra.mxu0 %v705
      %v1183 = vpop.f32.mrf.mxu0
      %v1184 = vadd.f32 %v1071, %v1183
      %1185 = vmatmul.f32.gmra.mxu0 %v706
      %v1186 = vpop.f32.mrf.mxu0
      %v1187 = vadd.f32 %v1074, %v1186
      %1188 = vdwg.mxu0
      %v1189 = vld [vmem:[%s5] sm:$0xff]
      %v1190 = vld [vmem:[%s5 + $0x8] sm:$0xff]
      %v1191 = vld [vmem:[%s5 + $0x10] sm:$0xff]
      %v1192 = vld [vmem:[%s5 + $0x18] sm:$0xff]
      %v1193 = vld [vmem:[%s5 + $0x20] sm:$0xff]
      %v1194 = vld [vmem:[%s5 + $0x28] sm:$0xff]
      %v1195 = vld [vmem:[%s5 + $0x30] sm:$0xff]
      %v1196 = vld [vmem:[%s5 + $0x38] sm:$0xff]
      %v1197 = vld [vmem:[%s5 + $0x40] sm:$0xff]
      %v1198 = vld [vmem:[%s5 + $0x48] sm:$0xff]
      %v1199 = vld [vmem:[%s5 + $0x50] sm:$0xff]
      %v1200 = vld [vmem:[%s5 + $0x58] sm:$0xff]
      %v1201 = vld [vmem:[%s5 + $0x60] sm:$0xff]
      %v1202 = vld [vmem:[%s5 + $0x68] sm:$0xff]
      %v1203 = vld [vmem:[%s5 + $0x70] sm:$0xff]
      %v1204 = vld [vmem:[%s5 + $0x78] sm:$0xff]
      %1205 = vmatpush.msra.mxu0 %v1204
      %1206 = vmatpush.msra.mxu0 %v1203
      %1207 = vmatpush.msra.mxu0 %v1202
      %1208 = vmatpush.msra.mxu0 %v1201
      %1209 = vmatpush.msra.mxu0 %v1200
      %1210 = vmatpush.msra.mxu0 %v1199
      %1211 = vmatpush.msra.mxu0 %v1198
      %1212 = vmatpush.msra.mxu0 %v1197
      %1213 = vmatpush.msra.mxu0 %v1196
      %1214 = vmatpush.msra.mxu0 %v1195
      %1215 = vmatpush.msra.mxu0 %v1194
      %1216 = vmatpush.msra.mxu0 %v1193
      %1217 = vmatpush.msra.mxu0 %v1192
      %1218 = vmatpush.msra.mxu0 %v1191
      %1219 = vmatpush.msra.mxu0 %v1190
      %1220 = vmatpush.msra.mxu0 %v1189
      %1221 = vmatmul.f32.gmra.mxu0 %v449
      %v1222 = vpop.f32.mrf.mxu0
      %v1223 = vadd.f32 0.0, %v1222
      %1224 = vmatmul.f32.gmra.mxu0 %v450
      %v1225 = vpop.f32.mrf.mxu0
      %v1226 = vadd.f32 0.0, %v1225
      %1227 = vmatmul.f32.gmra.mxu0 %v451
      %v1228 = vpop.f32.mrf.mxu0
      %v1229 = vadd.f32 0.0, %v1228
      %1230 = vmatmul.f32.gmra.mxu0 %v452
      %v1231 = vpop.f32.mrf.mxu0
      %v1232 = vadd.f32 0.0, %v1231
      %1233 = vmatmul.f32.gmra.mxu0 %v453
      %v1234 = vpop.f32.mrf.mxu0
      %v1235 = vadd.f32 0.0, %v1234
      %1236 = vmatmul.f32.gmra.mxu0 %v454
      %v1237 = vpop.f32.mrf.mxu0
      %v1238 = vadd.f32 0.0, %v1237
      %1239 = vmatmul.f32.gmra.mxu0 %v455
      %v1240 = vpop.f32.mrf.mxu0
      %v1241 = vadd.f32 0.0, %v1240
      %1242 = vmatmul.f32.gmra.mxu0 %v456
      %v1243 = vpop.f32.mrf.mxu0
      %v1244 = vadd.f32 0.0, %v1243
      %1245 = vmatmul.f32.gmra.mxu0 %v457
      %v1246 = vpop.f32.mrf.mxu0
      %v1247 = vadd.f32 0.0, %v1246
      %1248 = vmatmul.f32.gmra.mxu0 %v458
      %v1249 = vpop.f32.mrf.mxu0
      %v1250 = vadd.f32 0.0, %v1249
      %1251 = vmatmul.f32.gmra.mxu0 %v459
      %v1252 = vpop.f32.mrf.mxu0
      %v1253 = vadd.f32 0.0, %v1252
      %1254 = vmatmul.f32.gmra.mxu0 %v460
      %v1255 = vpop.f32.mrf.mxu0
      %v1256 = vadd.f32 0.0, %v1255
      %1257 = vmatmul.f32.gmra.mxu0 %v461
      %v1258 = vpop.f32.mrf.mxu0
      %v1259 = vadd.f32 0.0, %v1258
      %1260 = vmatmul.f32.gmra.mxu0 %v462
      %v1261 = vpop.f32.mrf.mxu0
      %v1262 = vadd.f32 0.0, %v1261
      %1263 = vmatmul.f32.gmra.mxu0 %v463
      %v1264 = vpop.f32.mrf.mxu0
      %v1265 = vadd.f32 0.0, %v1264
      %1266 = vmatmul.f32.gmra.mxu0 %v464
      %v1267 = vpop.f32.mrf.mxu0
      %v1268 = vadd.f32 0.0, %v1267
      %1269 = vmatmul.f32.gmra.mxu0 %v465
      %v1270 = vpop.f32.mrf.mxu0
      %v1271 = vadd.f32 0.0, %v1270
      %1272 = vmatmul.f32.gmra.mxu0 %v466
      %v1273 = vpop.f32.mrf.mxu0
      %v1274 = vadd.f32 0.0, %v1273
      %1275 = vmatmul.f32.gmra.mxu0 %v467
      %v1276 = vpop.f32.mrf.mxu0
      %v1277 = vadd.f32 0.0, %v1276
      %1278 = vmatmul.f32.gmra.mxu0 %v468
      %v1279 = vpop.f32.mrf.mxu0
      %v1280 = vadd.f32 0.0, %v1279
      %1281 = vmatmul.f32.gmra.mxu0 %v469
      %v1282 = vpop.f32.mrf.mxu0
      %v1283 = vadd.f32 0.0, %v1282
      %1284 = vmatmul.f32.gmra.mxu0 %v470
      %v1285 = vpop.f32.mrf.mxu0
      %v1286 = vadd.f32 0.0, %v1285
      %1287 = vmatmul.f32.gmra.mxu0 %v471
      %v1288 = vpop.f32.mrf.mxu0
      %v1289 = vadd.f32 0.0, %v1288
      %1290 = vmatmul.f32.gmra.mxu0 %v472
      %v1291 = vpop.f32.mrf.mxu0
      %v1292 = vadd.f32 0.0, %v1291
      %1293 = vmatmul.f32.gmra.mxu0 %v473
      %v1294 = vpop.f32.mrf.mxu0
      %v1295 = vadd.f32 0.0, %v1294
      %1296 = vmatmul.f32.gmra.mxu0 %v474
      %v1297 = vpop.f32.mrf.mxu0
      %v1298 = vadd.f32 0.0, %v1297
      %1299 = vmatmul.f32.gmra.mxu0 %v475
      %v1300 = vpop.f32.mrf.mxu0
      %v1301 = vadd.f32 0.0, %v1300
      %1302 = vmatmul.f32.gmra.mxu0 %v476
      %v1303 = vpop.f32.mrf.mxu0
      %v1304 = vadd.f32 0.0, %v1303
      %1305 = vmatmul.f32.gmra.mxu0 %v477
      %v1306 = vpop.f32.mrf.mxu0
      %v1307 = vadd.f32 0.0, %v1306
      %1308 = vmatmul.f32.gmra.mxu0 %v478
      %v1309 = vpop.f32.mrf.mxu0
      %v1310 = vadd.f32 0.0, %v1309
      %1311 = vmatmul.f32.gmra.mxu0 %v479
      %v1312 = vpop.f32.mrf.mxu0
      %v1313 = vadd.f32 0.0, %v1312
      %1314 = vmatmul.f32.gmra.mxu0 %v480
      %v1315 = vpop.f32.mrf.mxu0
      %v1316 = vadd.f32 0.0, %v1315
      %1317 = vdwg.mxu0
      %v1318 = vadd.f32 %v1094, %v1223
      %v1319 = vadd.f32 %v1097, %v1226
      %v1320 = vadd.f32 %v1100, %v1229
      %v1321 = vadd.f32 %v1103, %v1232
      %v1322 = vadd.f32 %v1106, %v1235
      %v1323 = vadd.f32 %v1109, %v1238
      %v1324 = vadd.f32 %v1112, %v1241
      %v1325 = vadd.f32 %v1115, %v1244
      %v1326 = vadd.f32 %v1118, %v1247
      %v1327 = vadd.f32 %v1121, %v1250
      %v1328 = vadd.f32 %v1124, %v1253
      %v1329 = vadd.f32 %v1127, %v1256
      %v1330 = vadd.f32 %v1130, %v1259
      %v1331 = vadd.f32 %v1133, %v1262
      %v1332 = vadd.f32 %v1136, %v1265
      %v1333 = vadd.f32 %v1139, %v1268
      %v1334 = vadd.f32 %v1142, %v1271
      %v1335 = vadd.f32 %v1145, %v1274
      %v1336 = vadd.f32 %v1148, %v1277
      %v1337 = vadd.f32 %v1151, %v1280
      %v1338 = vadd.f32 %v1154, %v1283
      %v1339 = vadd.f32 %v1157, %v1286
      %v1340 = vadd.f32 %v1160, %v1289
      %v1341 = vadd.f32 %v1163, %v1292
      %v1342 = vadd.f32 %v1166, %v1295
      %v1343 = vadd.f32 %v1169, %v1298
      %v1344 = vadd.f32 %v1172, %v1301
      %v1345 = vadd.f32 %v1175, %v1304
      %v1346 = vadd.f32 %v1178, %v1307
      %v1347 = vadd.f32 %v1181, %v1310
      %v1348 = vadd.f32 %v1184, %v1313
      %v1349 = vadd.f32 %v1187, %v1316
      %v1350 = vld [vmem:[%s7] sm:$0x1]
      %v1351 = vperm.slane %v1350, 0
      %v1352 = vadd.f32 %v1318, %v1351
      %v1353 = vadd.f32 %v1319, %v1351
      %v1354 = vadd.f32 %v1320, %v1351
      %v1355 = vadd.f32 %v1321, %v1351
      %v1356 = vadd.f32 %v1322, %v1351
      %v1357 = vadd.f32 %v1323, %v1351
      %v1358 = vadd.f32 %v1324, %v1351
      %v1359 = vadd.f32 %v1325, %v1351
      %v1360 = vadd.f32 %v1326, %v1351
      %v1361 = vadd.f32 %v1327, %v1351
      %v1362 = vadd.f32 %v1328, %v1351
      %v1363 = vadd.f32 %v1329, %v1351
      %v1364 = vadd.f32 %v1330, %v1351
      %v1365 = vadd.f32 %v1331, %v1351
      %v1366 = vadd.f32 %v1332, %v1351
      %v1367 = vadd.f32 %v1333, %v1351
      %v1368 = vadd.f32 %v1334, %v1351
      %v1369 = vadd.f32 %v1335, %v1351
      %v1370 = vadd.f32 %v1336, %v1351
      %v1371 = vadd.f32 %v1337, %v1351
      %v1372 = vadd.f32 %v1338, %v1351
      %v1373 = vadd.f32 %v1339, %v1351
      %v1374 = vadd.f32 %v1340, %v1351
      %v1375 = vadd.f32 %v1341, %v1351
      %v1376 = vadd.f32 %v1342, %v1351
      %v1377 = vadd.f32 %v1343, %v1351
      %v1378 = vadd.f32 %v1344, %v1351
      %v1379 = vadd.f32 %v1345, %v1351
      %v1380 = vadd.f32 %v1346, %v1351
      %v1381 = vadd.f32 %v1347, %v1351
      %v1382 = vadd.f32 %v1348, %v1351
      %v1383 = vadd.f32 %v1349, %v1351
      %v1384 = vmax.f32 %v1352, 0.0
      %v1385 = vmax.f32 %v1353, 0.0
      %v1386 = vmax.f32 %v1354, 0.0
      %v1387 = vmax.f32 %v1355, 0.0
      %v1388 = vmax.f32 %v1356, 0.0
      %v1389 = vmax.f32 %v1357, 0.0
      %v1390 = vmax.f32 %v1358, 0.0
      %v1391 = vmax.f32 %v1359, 0.0
      %v1392 = vmax.f32 %v1360, 0.0
      %v1393 = vmax.f32 %v1361, 0.0
      %v1394 = vmax.f32 %v1362, 0.0
      %v1395 = vmax.f32 %v1363, 0.0
      %v1396 = vmax.f32 %v1364, 0.0
      %v1397 = vmax.f32 %v1365, 0.0
      %v1398 = vmax.f32 %v1366, 0.0
      %v1399 = vmax.f32 %v1367, 0.0
      %v1400 = vmax.f32 %v1368, 0.0
      %v1401 = vmax.f32 %v1369, 0.0
      %v1402 = vmax.f32 %v1370, 0.0
      %v1403 = vmax.f32 %v1371, 0.0
      %v1404 = vmax.f32 %v1372, 0.0
      %v1405 = vmax.f32 %v1373, 0.0
      %v1406 = vmax.f32 %v1374, 0.0
      %v1407 = vmax.f32 %v1375, 0.0
      %v1408 = vmax.f32 %v1376, 0.0
      %v1409 = vmax.f32 %v1377, 0.0
      %v1410 = vmax.f32 %v1378, 0.0
      %v1411 = vmax.f32 %v1379, 0.0
      %v1412 = vmax.f32 %v1380, 0.0
      %v1413 = vmax.f32 %v1381, 0.0
      %v1414 = vmax.f32 %v1382, 0.0
      %v1415 = vmax.f32 %v1383, 0.0
      %v1416 = vld [vmem:[%s6] sm:$0xff]
      %v1417 = vld [vmem:[%s6 + $0x8] sm:$0xff]
      %v1418 = vld [vmem:[%s6 + $0x10] sm:$0xff]
      %v1419 = vld [vmem:[%s6 + $0x18] sm:$0xff]
      %v1420 = vld [vmem:[%s6 + $0x20] sm:$0xff]
      %v1421 = vld [vmem:[%s6 + $0x28] sm:$0xff]
      %v1422 = vld [vmem:[%s6 + $0x30] sm:$0xff]
      %v1423 = vld [vmem:[%s6 + $0x38] sm:$0xff]
      %v1424 = vld [vmem:[%s6 + $0x40] sm:$0xff]
      %v1425 = vld [vmem:[%s6 + $0x48] sm:$0xff]
      %v1426 = vld [vmem:[%s6 + $0x50] sm:$0xff]
      %v1427 = vld [vmem:[%s6 + $0x58] sm:$0xff]
      %v1428 = vld [vmem:[%s6 + $0x60] sm:$0xff]
      %v1429 = vld [vmem:[%s6 + $0x68] sm:$0xff]
      %v1430 = vld [vmem:[%s6 + $0x70] sm:$0xff]
      %v1431 = vld [vmem:[%s6 + $0x78] sm:$0xff]
      %v1432 = vld [vmem:[%s7 + $0x1] sm:$0x1]
      %v1433 = vperm.slane %v1432, 0
      %1434 = vmatpush.msra.mxu0 %v1431
      %1435 = vmatpush.msra.mxu0 %v1430
      %1436 = vmatpush.msra.mxu0 %v1429
      %1437 = vmatpush.msra.mxu0 %v1428
      %1438 = vmatpush.msra.mxu0 %v1427
      %1439 = vmatpush.msra.mxu0 %v1426
      %1440 = vmatpush.msra.mxu0 %v1425
      %1441 = vmatpush.msra.mxu0 %v1424
      %1442 = vmatpush.msra.mxu0 %v1423
      %1443 = vmatpush.msra.mxu0 %v1422
      %1444 = vmatpush.msra.mxu0 %v1421
      %1445 = vmatpush.msra.mxu0 %v1420
      %1446 = vmatpush.msra.mxu0 %v1419
      %1447 = vmatpush.msra.mxu0 %v1418
      %1448 = vmatpush.msra.mxu0 %v1417
      %1449 = vmatpush.msra.mxu0 %v1416
      %1450 = vmatmul.f32.gmra.mxu0 %v1384
      %v1451 = vpop.f32.mrf.mxu0
      %v1452 = vadd.f32 %v1433, %v1451
      %1453 = vmatmul.f32.gmra.mxu0 %v1385
      %v1454 = vpop.f32.mrf.mxu0
      %v1455 = vadd.f32 %v1433, %v1454
      %1456 = vmatmul.f32.gmra.mxu0 %v1386
      %v1457 = vpop.f32.mrf.mxu0
      %v1458 = vadd.f32 %v1433, %v1457
      %1459 = vmatmul.f32.gmra.mxu0 %v1387
      %v1460 = vpop.f32.mrf.mxu0
      %v1461 = vadd.f32 %v1433, %v1460
      %1462 = vmatmul.f32.gmra.mxu0 %v1388
      %v1463 = vpop.f32.mrf.mxu0
      %v1464 = vadd.f32 %v1433, %v1463
      %1465 = vmatmul.f32.gmra.mxu0 %v1389
      %v1466 = vpop.f32.mrf.mxu0
      %v1467 = vadd.f32 %v1433, %v1466
      %1468 = vmatmul.f32.gmra.mxu0 %v1390
      %v1469 = vpop.f32.mrf.mxu0
      %v1470 = vadd.f32 %v1433, %v1469
      %1471 = vmatmul.f32.gmra.mxu0 %v1391
      %v1472 = vpop.f32.mrf.mxu0
      %v1473 = vadd.f32 %v1433, %v1472
      %1474 = vmatmul.f32.gmra.mxu0 %v1392
      %v1475 = vpop.f32.mrf.mxu0
      %v1476 = vadd.f32 %v1433, %v1475
      %1477 = vmatmul.f32.gmra.mxu0 %v1393
      %v1478 = vpop.f32.mrf.mxu0
      %v1479 = vadd.f32 %v1433, %v1478
      %1480 = vmatmul.f32.gmra.mxu0 %v1394
      %v1481 = vpop.f32.mrf.mxu0
      %v1482 = vadd.f32 %v1433, %v1481
      %1483 = vmatmul.f32.gmra.mxu0 %v1395
      %v1484 = vpop.f32.mrf.mxu0
      %v1485 = vadd.f32 %v1433, %v1484
      %1486 = vmatmul.f32.gmra.mxu0 %v1396
      %v1487 = vpop.f32.mrf.mxu0
      %v1488 = vadd.f32 %v1433, %v1487
      %1489 = vmatmul.f32.gmra.mxu0 %v1397
      %v1490 = vpop.f32.mrf.mxu0
      %v1491 = vadd.f32 %v1433, %v1490
      %1492 = vmatmul.f32.gmra.mxu0 %v1398
      %v1493 = vpop.f32.mrf.mxu0
      %v1494 = vadd.f32 %v1433, %v1493
      %1495 = vmatmul.f32.gmra.mxu0 %v1399
      %v1496 = vpop.f32.mrf.mxu0
      %v1497 = vadd.f32 %v1433, %v1496
      %1498 = vmatmul.f32.gmra.mxu0 %v1400
      %v1499 = vpop.f32.mrf.mxu0
      %v1500 = vadd.f32 %v1433, %v1499
      %1501 = vmatmul.f32.gmra.mxu0 %v1401
      %v1502 = vpop.f32.mrf.mxu0
      %v1503 = vadd.f32 %v1433, %v1502
      %1504 = vmatmul.f32.gmra.mxu0 %v1402
      %v1505 = vpop.f32.mrf.mxu0
      %v1506 = vadd.f32 %v1433, %v1505
      %1507 = vmatmul.f32.gmra.mxu0 %v1403
      %v1508 = vpop.f32.mrf.mxu0
      %v1509 = vadd.f32 %v1433, %v1508
      %1510 = vmatmul.f32.gmra.mxu0 %v1404
      %v1511 = vpop.f32.mrf.mxu0
      %v1512 = vadd.f32 %v1433, %v1511
      %1513 = vmatmul.f32.gmra.mxu0 %v1405
      %v1514 = vpop.f32.mrf.mxu0
      %v1515 = vadd.f32 %v1433, %v1514
      %1516 = vmatmul.f32.gmra.mxu0 %v1406
      %v1517 = vpop.f32.mrf.mxu0
      %v1518 = vadd.f32 %v1433, %v1517
      %1519 = vmatmul.f32.gmra.mxu0 %v1407
      %v1520 = vpop.f32.mrf.mxu0
      %v1521 = vadd.f32 %v1433, %v1520
      %1522 = vmatmul.f32.gmra.mxu0 %v1408
      %v1523 = vpop.f32.mrf.mxu0
      %v1524 = vadd.f32 %v1433, %v1523
      %1525 = vmatmul.f32.gmra.mxu0 %v1409
      %v1526 = vpop.f32.mrf.mxu0
      %v1527 = vadd.f32 %v1433, %v1526
      %1528 = vmatmul.f32.gmra.mxu0 %v1410
      %v1529 = vpop.f32.mrf.mxu0
      %v1530 = vadd.f32 %v1433, %v1529
      %1531 = vmatmul.f32.gmra.mxu0 %v1411
      %v1532 = vpop.f32.mrf.mxu0
      %v1533 = vadd.f32 %v1433, %v1532
      %1534 = vmatmul.f32.gmra.mxu0 %v1412
      %v1535 = vpop.f32.mrf.mxu0
      %v1536 = vadd.f32 %v1433, %v1535
      %1537 = vmatmul.f32.gmra.mxu0 %v1413
      %v1538 = vpop.f32.mrf.mxu0
      %v1539 = vadd.f32 %v1433, %v1538
      %1540 = vmatmul.f32.gmra.mxu0 %v1414
      %v1541 = vpop.f32.mrf.mxu0
      %v1542 = vadd.f32 %v1433, %v1541
      %1543 = vmatmul.f32.gmra.mxu0 %v1415
      %v1544 = vpop.f32.mrf.mxu0
      %v1545 = vadd.f32 %v1433, %v1544
      %1546 = vdwg.mxu0
      %v1547 = vmax.f32 %v1452, 0.0
      %v1548 = vmax.f32 %v1455, 0.0
      %v1549 = vmax.f32 %v1458, 0.0
      %v1550 = vmax.f32 %v1461, 0.0
      %v1551 = vmax.f32 %v1464, 0.0
      %v1552 = vmax.f32 %v1467, 0.0
      %v1553 = vmax.f32 %v1470, 0.0
      %v1554 = vmax.f32 %v1473, 0.0
      %v1555 = vmax.f32 %v1476, 0.0
      %v1556 = vmax.f32 %v1479, 0.0
      %v1557 = vmax.f32 %v1482, 0.0
      %v1558 = vmax.f32 %v1485, 0.0
      %v1559 = vmax.f32 %v1488, 0.0
      %v1560 = vmax.f32 %v1491, 0.0
      %v1561 = vmax.f32 %v1494, 0.0
      %v1562 = vmax.f32 %v1497, 0.0
      %v1563 = vmax.f32 %v1500, 0.0
      %v1564 = vmax.f32 %v1503, 0.0
      %v1565 = vmax.f32 %v1506, 0.0
      %v1566 = vmax.f32 %v1509, 0.0
      %v1567 = vmax.f32 %v1512, 0.0
      %v1568 = vmax.f32 %v1515, 0.0
      %v1569 = vmax.f32 %v1518, 0.0
      %v1570 = vmax.f32 %v1521, 0.0
      %v1571 = vmax.f32 %v1524, 0.0
      %v1572 = vmax.f32 %v1527, 0.0
      %v1573 = vmax.f32 %v1530, 0.0
      %v1574 = vmax.f32 %v1533, 0.0
      %v1575 = vmax.f32 %v1536, 0.0
      %v1576 = vmax.f32 %v1539, 0.0
      %v1577 = vmax.f32 %v1542, 0.0
      %v1578 = vmax.f32 %v1545, 0.0
      %v1579 = vadd.f32 %v449, %v1547
      %v1580 = vadd.f32 %v450, %v1548
      %v1581 = vadd.f32 %v451, %v1549
      %v1582 = vadd.f32 %v452, %v1550
      %v1583 = vadd.f32 %v453, %v1551
      %v1584 = vadd.f32 %v454, %v1552
      %v1585 = vadd.f32 %v455, %v1553
      %v1586 = vadd.f32 %v456, %v1554
      %v1587 = vadd.f32 %v457, %v1555
      %v1588 = vadd.f32 %v458, %v1556
      %v1589 = vadd.f32 %v459, %v1557
      %v1590 = vadd.f32 %v460, %v1558
      %v1591 = vadd.f32 %v461, %v1559
      %v1592 = vadd.f32 %v462, %v1560
      %v1593 = vadd.f32 %v463, %v1561
      %v1594 = vadd.f32 %v464, %v1562
      %v1595 = vadd.f32 %v465, %v1563
      %v1596 = vadd.f32 %v466, %v1564
      %v1597 = vadd.f32 %v467, %v1565
      %v1598 = vadd.f32 %v468, %v1566
      %v1599 = vadd.f32 %v469, %v1567
      %v1600 = vadd.f32 %v470, %v1568
      %v1601 = vadd.f32 %v471, %v1569
      %v1602 = vadd.f32 %v472, %v1570
      %v1603 = vadd.f32 %v473, %v1571
      %v1604 = vadd.f32 %v474, %v1572
      %v1605 = vadd.f32 %v475, %v1573
      %v1606 = vadd.f32 %v476, %v1574
      %v1607 = vadd.f32 %v477, %v1575
      %v1608 = vadd.f32 %v478, %v1576
      %v1609 = vadd.f32 %v479, %v1577
      %v1610 = vadd.f32 %v480, %v1578
      %1611 = vst [vmem:[%s441] sm:$0xff] %v1579
      %1612 = vst [vmem:[%s441 + $0x8] sm:$0xff] %v1580
      %1613 = vst [vmem:[%s441 + $0x10] sm:$0xff] %v1581
      %1614 = vst [vmem:[%s441 + $0x18] sm:$0xff] %v1582
      %1615 = vst [vmem:[%s441 + $0x20] sm:$0xff] %v1583
      %1616 = vst [vmem:[%s441 + $0x28] sm:$0xff] %v1584
      %1617 = vst [vmem:[%s441 + $0x30] sm:$0xff] %v1585
      %1618 = vst [vmem:[%s441 + $0x38] sm:$0xff] %v1586
      %1619 = vst [vmem:[%s441 + $0x40] sm:$0xff] %v1587
      %1620 = vst [vmem:[%s441 + $0x48] sm:$0xff] %v1588
      %1621 = vst [vmem:[%s441 + $0x50] sm:$0xff] %v1589
      %1622 = vst [vmem:[%s441 + $0x58] sm:$0xff] %v1590
      %1623 = vst [vmem:[%s441 + $0x60] sm:$0xff] %v1591
      %1624 = vst [vmem:[%s441 + $0x68] sm:$0xff] %v1592
      %1625 = vst [vmem:[%s441 + $0x70] sm:$0xff] %v1593
      %1626 = vst [vmem:[%s441 + $0x78] sm:$0xff] %v1594
      %1627 = vst [vmem:[%s441 + $0x80] sm:$0xff] %v1595
      %1628 = vst [vmem:[%s441 + $0x88] sm:$0xff] %v1596
      %1629 = vst [vmem:[%s441 + $0x90] sm:$0xff] %v1597
      %1630 = vst [vmem:[%s441 + $0x98] sm:$0xff] %v1598
      %1631 = vst [vmem:[%s441 + $0xa0] sm:$0xff] %v1599
      %1632 = vst [vmem:[%s441 + $0xa8] sm:$0xff] %v1600
      %1633 = vst [vmem:[%s441 + $0xb0] sm:$0xff] %v1601
      %1634 = vst [vmem:[%s441 + $0xb8] sm:$0xff] %v1602
      %1635 = vst [vmem:[%s441 + $0xc0] sm:$0xff] %v1603
      %1636 = vst [vmem:[%s441 + $0xc8] sm:$0xff] %v1604
      %1637 = vst [vmem:[%s441 + $0xd0] sm:$0xff] %v1605
      %1638 = vst [vmem:[%s441 + $0xd8] sm:$0xff] %v1606
      %1639 = vst [vmem:[%s441 + $0xe0] sm:$0xff] %v1607
      %1640 = vst [vmem:[%s441 + $0xe8] sm:$0xff] %v1608
      %1641 = vst [vmem:[%s441 + $0xf0] sm:$0xff] %v1609
      %1642 = vst [vmem:[%s441 + $0xf8] sm:$0xff] %v1610
      %v1643 = vld [vmem:[%s8] sm:$0xff]
      %v1644 = vld [vmem:[%s8 + $0x8] sm:$0xff]
      %v1645 = vld [vmem:[%s8 + $0x10] sm:$0xff]
      %v1646 = vld [vmem:[%s8 + $0x18] sm:$0xff]
      %v1647 = vld [vmem:[%s8 + $0x20] sm:$0xff]
      %v1648 = vld [vmem:[%s8 + $0x28] sm:$0xff]
      %v1649 = vld [vmem:[%s8 + $0x30] sm:$0xff]
      %v1650 = vld [vmem:[%s8 + $0x38] sm:$0xff]
      %v1651 = vld [vmem:[%s8 + $0x40] sm:$0xff]
      %v1652 = vld [vmem:[%s8 + $0x48] sm:$0xff]
      %v1653 = vld [vmem:[%s8 + $0x50] sm:$0xff]
      %v1654 = vld [vmem:[%s8 + $0x58] sm:$0xff]
      %v1655 = vld [vmem:[%s8 + $0x60] sm:$0xff]
      %v1656 = vld [vmem:[%s8 + $0x68] sm:$0xff]
      %v1657 = vld [vmem:[%s8 + $0x70] sm:$0xff]
      %v1658 = vld [vmem:[%s8 + $0x78] sm:$0xff]
      %s1659 = sld [smem:[#allocation2]]
      %v1660 = vstv %s1659
      %1661 = vmatpush.msra.mxu0 %v1658
      %1662 = vmatpush.msra.mxu0 %v1657
      %1663 = vmatpush.msra.mxu0 %v1656
      %1664 = vmatpush.msra.mxu0 %v1655
      %1665 = vmatpush.msra.mxu0 %v1654
      %1666 = vmatpush.msra.mxu0 %v1653
      %1667 = vmatpush.msra.mxu0 %v1652
      %1668 = vmatpush.msra.mxu0 %v1651
      %1669 = vmatpush.msra.mxu0 %v1650
      %1670 = vmatpush.msra.mxu0 %v1649
      %1671 = vmatpush.msra.mxu0 %v1648
      %1672 = vmatpush.msra.mxu0 %v1647
      %1673 = vmatpush.msra.mxu0 %v1646
      %1674 = vmatpush.msra.mxu0 %v1645
      %1675 = vmatpush.msra.mxu0 %v1644
      %1676 = vmatpush.msra.mxu0 %v1643
      %1677 = vmatmul.f32.gmra.mxu0 %v1547
      %v1678 = vpop.f32.mrf.mxu0
      %v1679 = vadd.f32 %v1660, %v1678
      %1680 = vmatmul.f32.gmra.mxu0 %v1548
      %v1681 = vpop.f32.mrf.mxu0
      %v1682 = vadd.f32 %v1660, %v1681
      %1683 = vmatmul.f32.gmra.mxu0 %v1549
      %v1684 = vpop.f32.mrf.mxu0
      %v1685 = vadd.f32 %v1660, %v1684
      %1686 = vmatmul.f32.gmra.mxu0 %v1550
      %v1687 = vpop.f32.mrf.mxu0
      %v1688 = vadd.f32 %v1660, %v1687
      %1689 = vmatmul.f32.gmra.mxu0 %v1551
      %v1690 = vpop.f32.mrf.mxu0
      %v1691 = vadd.f32 %v1660, %v1690
      %1692 = vmatmul.f32.gmra.mxu0 %v1552
      %v1693 = vpop.f32.mrf.mxu0
      %v1694 = vadd.f32 %v1660, %v1693
      %1695 = vmatmul.f32.gmra.mxu0 %v1553
      %v1696 = vpop.f32.mrf.mxu0
      %v1697 = vadd.f32 %v1660, %v1696
      %1698 = vmatmul.f32.gmra.mxu0 %v1554
      %v1699 = vpop.f32.mrf.mxu0
      %v1700 = vadd.f32 %v1660, %v1699
      %1701 = vmatmul.f32.gmra.mxu0 %v1555
      %v1702 = vpop.f32.mrf.mxu0
      %v1703 = vadd.f32 %v1660, %v1702
      %1704 = vmatmul.f32.gmra.mxu0 %v1556
      %v1705 = vpop.f32.mrf.mxu0
      %v1706 = vadd.f32 %v1660, %v1705
      %1707 = vmatmul.f32.gmra.mxu0 %v1557
      %v1708 = vpop.f32.mrf.mxu0
      %v1709 = vadd.f32 %v1660, %v1708
      %1710 = vmatmul.f32.gmra.mxu0 %v1558
      %v1711 = vpop.f32.mrf.mxu0
      %v1712 = vadd.f32 %v1660, %v1711
      %1713 = vmatmul.f32.gmra.mxu0 %v1559
      %v1714 = vpop.f32.mrf.mxu0
      %v1715 = vadd.f32 %v1660, %v1714
      %1716 = vmatmul.f32.gmra.mxu0 %v1560
      %v1717 = vpop.f32.mrf.mxu0
      %v1718 = vadd.f32 %v1660, %v1717
      %1719 = vmatmul.f32.gmra.mxu0 %v1561
      %v1720 = vpop.f32.mrf.mxu0
      %v1721 = vadd.f32 %v1660, %v1720
      %1722 = vmatmul.f32.gmra.mxu0 %v1562
      %v1723 = vpop.f32.mrf.mxu0
      %v1724 = vadd.f32 %v1660, %v1723
      %1725 = vmatmul.f32.gmra.mxu0 %v1563
      %v1726 = vpop.f32.mrf.mxu0
      %v1727 = vadd.f32 %v1660, %v1726
      %1728 = vmatmul.f32.gmra.mxu0 %v1564
      %v1729 = vpop.f32.mrf.mxu0
      %v1730 = vadd.f32 %v1660, %v1729
      %1731 = vmatmul.f32.gmra.mxu0 %v1565
      %v1732 = vpop.f32.mrf.mxu0
      %v1733 = vadd.f32 %v1660, %v1732
      %1734 = vmatmul.f32.gmra.mxu0 %v1566
      %v1735 = vpop.f32.mrf.mxu0
      %v1736 = vadd.f32 %v1660, %v1735
      %1737 = vmatmul.f32.gmra.mxu0 %v1567
      %v1738 = vpop.f32.mrf.mxu0
      %v1739 = vadd.f32 %v1660, %v1738
      %1740 = vmatmul.f32.gmra.mxu0 %v1568
      %v1741 = vpop.f32.mrf.mxu0
      %v1742 = vadd.f32 %v1660, %v1741
      %1743 = vmatmul.f32.gmra.mxu0 %v1569
      %v1744 = vpop.f32.mrf.mxu0
      %v1745 = vadd.f32 %v1660, %v1744
      %1746 = vmatmul.f32.gmra.mxu0 %v1570
      %v1747 = vpop.f32.mrf.mxu0
      %v1748 = vadd.f32 %v1660, %v1747
      %1749 = vmatmul.f32.gmra.mxu0 %v1571
      %v1750 = vpop.f32.mrf.mxu0
      %v1751 = vadd.f32 %v1660, %v1750
      %1752 = vmatmul.f32.gmra.mxu0 %v1572
      %v1753 = vpop.f32.mrf.mxu0
      %v1754 = vadd.f32 %v1660, %v1753
      %1755 = vmatmul.f32.gmra.mxu0 %v1573
      %v1756 = vpop.f32.mrf.mxu0
      %v1757 = vadd.f32 %v1660, %v1756
      %1758 = vmatmul.f32.gmra.mxu0 %v1574
      %v1759 = vpop.f32.mrf.mxu0
      %v1760 = vadd.f32 %v1660, %v1759
      %1761 = vmatmul.f32.gmra.mxu0 %v1575
      %v1762 = vpop.f32.mrf.mxu0
      %v1763 = vadd.f32 %v1660, %v1762
      %1764 = vmatmul.f32.gmra.mxu0 %v1576
      %v1765 = vpop.f32.mrf.mxu0
      %v1766 = vadd.f32 %v1660, %v1765
      %1767 = vmatmul.f32.gmra.mxu0 %v1577
      %v1768 = vpop.f32.mrf.mxu0
      %v1769 = vadd.f32 %v1660, %v1768
      %1770 = vmatmul.f32.gmra.mxu0 %v1578
      %v1771 = vpop.f32.mrf.mxu0
      %v1772 = vadd.f32 %v1660, %v1771
      %1773 = vdwg.mxu0
      %v1774 = vxor.u32 %v1679, 2147483648
      %v1775 = vxor.u32 %v1682, 2147483648
      %v1776 = vxor.u32 %v1685, 2147483648
      %v1777 = vxor.u32 %v1688, 2147483648
      %v1778 = vxor.u32 %v1691, 2147483648
      %v1779 = vxor.u32 %v1694, 2147483648
      %v1780 = vxor.u32 %v1697, 2147483648
      %v1781 = vxor.u32 %v1700, 2147483648
      %v1782 = vxor.u32 %v1703, 2147483648
      %v1783 = vxor.u32 %v1706, 2147483648
      %v1784 = vxor.u32 %v1709, 2147483648
      %v1785 = vxor.u32 %v1712, 2147483648
      %v1786 = vxor.u32 %v1715, 2147483648
      %v1787 = vxor.u32 %v1718, 2147483648
      %v1788 = vxor.u32 %v1721, 2147483648
      %v1789 = vxor.u32 %v1724, 2147483648
      %v1790 = vxor.u32 %v1727, 2147483648
      %v1791 = vxor.u32 %v1730, 2147483648
      %v1792 = vxor.u32 %v1733, 2147483648
      %v1793 = vxor.u32 %v1736, 2147483648
      %v1794 = vxor.u32 %v1739, 2147483648
      %v1795 = vxor.u32 %v1742, 2147483648
      %v1796 = vxor.u32 %v1745, 2147483648
      %v1797 = vxor.u32 %v1748, 2147483648
      %v1798 = vxor.u32 %v1751, 2147483648
      %v1799 = vxor.u32 %v1754, 2147483648
      %v1800 = vxor.u32 %v1757, 2147483648
      %v1801 = vxor.u32 %v1760, 2147483648
      %v1802 = vxor.u32 %v1763, 2147483648
      %v1803 = vxor.u32 %v1766, 2147483648
      %v1804 = vxor.u32 %v1769, 2147483648
      %v1805 = vxor.u32 %v1772, 2147483648
      %v1806 = vmul.f32 %v1774, 1.442695
      %v1807 = vpow.pop %v1806
      %v1808 = vmul.f32 %v1775, 1.442695
      %v1809 = vpow.pop %v1808
      %v1810 = vmul.f32 %v1776, 1.442695
      %v1811 = vpow.pop %v1810
      %v1812 = vmul.f32 %v1777, 1.442695
      %v1813 = vpow.pop %v1812
      %v1814 = vmul.f32 %v1778, 1.442695
      %v1815 = vpow.pop %v1814
      %v1816 = vmul.f32 %v1779, 1.442695
      %v1817 = vpow.pop %v1816
      %v1818 = vmul.f32 %v1780, 1.442695
      %v1819 = vpow.pop %v1818
      %v1820 = vmul.f32 %v1781, 1.442695
      %v1821 = vpow.pop %v1820
      %v1822 = vmul.f32 %v1782, 1.442695
      %v1823 = vpow.pop %v1822
      %v1824 = vmul.f32 %v1783, 1.442695
      %v1825 = vpow.pop %v1824
      %v1826 = vmul.f32 %v1784, 1.442695
      %v1827 = vpow.pop %v1826
      %v1828 = vmul.f32 %v1785, 1.442695
      %v1829 = vpow.pop %v1828
      %v1830 = vmul.f32 %v1786, 1.442695
      %v1831 = vpow.pop %v1830
      %v1832 = vmul.f32 %v1787, 1.442695
      %v1833 = vpow.pop %v1832
      %v1834 = vmul.f32 %v1788, 1.442695
      %v1835 = vpow.pop %v1834
      %v1836 = vmul.f32 %v1789, 1.442695
      %v1837 = vpow.pop %v1836
      %v1838 = vmul.f32 %v1790, 1.442695
      %v1839 = vpow.pop %v1838
      %v1840 = vmul.f32 %v1791, 1.442695
      %v1841 = vpow.pop %v1840
      %v1842 = vmul.f32 %v1792, 1.442695
      %v1843 = vpow.pop %v1842
      %v1844 = vmul.f32 %v1793, 1.442695
      %v1845 = vpow.pop %v1844
      %v1846 = vmul.f32 %v1794, 1.442695
      %v1847 = vpow.pop %v1846
      %v1848 = vmul.f32 %v1795, 1.442695
      %v1849 = vpow.pop %v1848
      %v1850 = vmul.f32 %v1796, 1.442695
      %v1851 = vpow.pop %v1850
      %v1852 = vmul.f32 %v1797, 1.442695
      %v1853 = vpow.pop %v1852
      %v1854 = vmul.f32 %v1798, 1.442695
      %v1855 = vpow.pop %v1854
      %v1856 = vmul.f32 %v1799, 1.442695
      %v1857 = vpow.pop %v1856
      %v1858 = vmul.f32 %v1800, 1.442695
      %v1859 = vpow.pop %v1858
      %v1860 = vmul.f32 %v1801, 1.442695
      %v1861 = vpow.pop %v1860
      %v1862 = vmul.f32 %v1802, 1.442695
      %v1863 = vpow.pop %v1862
      %v1864 = vmul.f32 %v1803, 1.442695
      %v1865 = vpow.pop %v1864
      %v1866 = vmul.f32 %v1804, 1.442695
      %v1867 = vpow.pop %v1866
      %v1868 = vmul.f32 %v1805, 1.442695
      %v1869 = vpow.pop %v1868
      %v1870 = vadd.f32 %v1807, 1.0
      %v1871 = vadd.f32 %v1809, 1.0
      %v1872 = vadd.f32 %v1811, 1.0
      %v1873 = vadd.f32 %v1813, 1.0
      %v1874 = vadd.f32 %v1815, 1.0
      %v1875 = vadd.f32 %v1817, 1.0
      %v1876 = vadd.f32 %v1819, 1.0
      %v1877 = vadd.f32 %v1821, 1.0
      %v1878 = vadd.f32 %v1823, 1.0
      %v1879 = vadd.f32 %v1825, 1.0
      %v1880 = vadd.f32 %v1827, 1.0
      %v1881 = vadd.f32 %v1829, 1.0
      %v1882 = vadd.f32 %v1831, 1.0
      %v1883 = vadd.f32 %v1833, 1.0
      %v1884 = vadd.f32 %v1835, 1.0
      %v1885 = vadd.f32 %v1837, 1.0
      %v1886 = vadd.f32 %v1839, 1.0
      %v1887 = vadd.f32 %v1841, 1.0
      %v1888 = vadd.f32 %v1843, 1.0
      %v1889 = vadd.f32 %v1845, 1.0
      %v1890 = vadd.f32 %v1847, 1.0
      %v1891 = vadd.f32 %v1849, 1.0
      %v1892 = vadd.f32 %v1851, 1.0
      %v1893 = vadd.f32 %v1853, 1.0
      %v1894 = vadd.f32 %v1855, 1.0
      %v1895 = vadd.f32 %v1857, 1.0
      %v1896 = vadd.f32 %v1859, 1.0
      %v1897 = vadd.f32 %v1861, 1.0
      %v1898 = vadd.f32 %v1863, 1.0
      %v1899 = vadd.f32 %v1865, 1.0
      %v1900 = vadd.f32 %v1867, 1.0
      %v1901 = vadd.f32 %v1869, 1.0
      %v1902 = vrcp.pop %v1870
      %v1903 = vmul.f32 %v1870, %v1902
      %v1904 = vsub.f32 1.0, %v1903
      %v1905 = vmul.f32 %v1902, %v1904
      %v1906 = vadd.f32 %v1902, %v1905
      %vm1907 = vweird.f32 %v1870
      %vm1908 = vweird.f32 %v1902
      %vm1909 = vmor %vm1907, %vm1908
      %v1910 = vsel %vm1909, %v1902, %v1906
      %v1911 = vand.u32 2147483647, %v1870
      %vm1912 = vcmp.eq.f32.partialorder %v1911, 8.507059e+37
      %v1913 = vand.u32 %v1870, 2147483648
      %v1914 = vor.u32 1.1754944e-38, %v1913
      %v1915 = vsel %vm1912, %v1914, %v1910
      %v1916 = vmul.f32 1.0, %v1915
      %v1917 = vrcp.pop %v1871
      %v1918 = vmul.f32 %v1871, %v1917
      %v1919 = vsub.f32 1.0, %v1918
      %v1920 = vmul.f32 %v1917, %v1919
      %v1921 = vadd.f32 %v1917, %v1920
      %vm1922 = vweird.f32 %v1871
      %vm1923 = vweird.f32 %v1917
      %vm1924 = vmor %vm1922, %vm1923
      %v1925 = vsel %vm1924, %v1917, %v1921
      %v1926 = vand.u32 2147483647, %v1871
      %vm1927 = vcmp.eq.f32.partialorder %v1926, 8.507059e+37
      %v1928 = vand.u32 %v1871, 2147483648
      %v1929 = vor.u32 1.1754944e-38, %v1928
      %v1930 = vsel %vm1927, %v1929, %v1925
      %v1931 = vmul.f32 1.0, %v1930
      %v1932 = vrcp.pop %v1872
      %v1933 = vmul.f32 %v1872, %v1932
      %v1934 = vsub.f32 1.0, %v1933
      %v1935 = vmul.f32 %v1932, %v1934
      %v1936 = vadd.f32 %v1932, %v1935
      %vm1937 = vweird.f32 %v1872
      %vm1938 = vweird.f32 %v1932
      %vm1939 = vmor %vm1937, %vm1938
      %v1940 = vsel %vm1939, %v1932, %v1936
      %v1941 = vand.u32 2147483647, %v1872
      %vm1942 = vcmp.eq.f32.partialorder %v1941, 8.507059e+37
      %v1943 = vand.u32 %v1872, 2147483648
      %v1944 = vor.u32 1.1754944e-38, %v1943
      %v1945 = vsel %vm1942, %v1944, %v1940
      %v1946 = vmul.f32 1.0, %v1945
      %v1947 = vrcp.pop %v1873
      %v1948 = vmul.f32 %v1873, %v1947
      %v1949 = vsub.f32 1.0, %v1948
      %v1950 = vmul.f32 %v1947, %v1949
      %v1951 = vadd.f32 %v1947, %v1950
      %vm1952 = vweird.f32 %v1873
      %vm1953 = vweird.f32 %v1947
      %vm1954 = vmor %vm1952, %vm1953
      %v1955 = vsel %vm1954, %v1947, %v1951
      %v1956 = vand.u32 2147483647, %v1873
      %vm1957 = vcmp.eq.f32.partialorder %v1956, 8.507059e+37
      %v1958 = vand.u32 %v1873, 2147483648
      %v1959 = vor.u32 1.1754944e-38, %v1958
      %v1960 = vsel %vm1957, %v1959, %v1955
      %v1961 = vmul.f32 1.0, %v1960
      %v1962 = vrcp.pop %v1874
      %v1963 = vmul.f32 %v1874, %v1962
      %v1964 = vsub.f32 1.0, %v1963
      %v1965 = vmul.f32 %v1962, %v1964
      %v1966 = vadd.f32 %v1962, %v1965
      %vm1967 = vweird.f32 %v1874
      %vm1968 = vweird.f32 %v1962
      %vm1969 = vmor %vm1967, %vm1968
      %v1970 = vsel %vm1969, %v1962, %v1966
      %v1971 = vand.u32 2147483647, %v1874
      %vm1972 = vcmp.eq.f32.partialorder %v1971, 8.507059e+37
      %v1973 = vand.u32 %v1874, 2147483648
      %v1974 = vor.u32 1.1754944e-38, %v1973
      %v1975 = vsel %vm1972, %v1974, %v1970
      %v1976 = vmul.f32 1.0, %v1975
      %v1977 = vrcp.pop %v1875
      %v1978 = vmul.f32 %v1875, %v1977
      %v1979 = vsub.f32 1.0, %v1978
      %v1980 = vmul.f32 %v1977, %v1979
      %v1981 = vadd.f32 %v1977, %v1980
      %vm1982 = vweird.f32 %v1875
      %vm1983 = vweird.f32 %v1977
      %vm1984 = vmor %vm1982, %vm1983
      %v1985 = vsel %vm1984, %v1977, %v1981
      %v1986 = vand.u32 2147483647, %v1875
      %vm1987 = vcmp.eq.f32.partialorder %v1986, 8.507059e+37
      %v1988 = vand.u32 %v1875, 2147483648
      %v1989 = vor.u32 1.1754944e-38, %v1988
      %v1990 = vsel %vm1987, %v1989, %v1985
      %v1991 = vmul.f32 1.0, %v1990
      %v1992 = vrcp.pop %v1876
      %v1993 = vmul.f32 %v1876, %v1992
      %v1994 = vsub.f32 1.0, %v1993
      %v1995 = vmul.f32 %v1992, %v1994
      %v1996 = vadd.f32 %v1992, %v1995
      %vm1997 = vweird.f32 %v1876
      %vm1998 = vweird.f32 %v1992
      %vm1999 = vmor %vm1997, %vm1998
      %v2000 = vsel %vm1999, %v1992, %v1996
      %v2001 = vand.u32 2147483647, %v1876
      %vm2002 = vcmp.eq.f32.partialorder %v2001, 8.507059e+37
      %v2003 = vand.u32 %v1876, 2147483648
      %v2004 = vor.u32 1.1754944e-38, %v2003
      %v2005 = vsel %vm2002, %v2004, %v2000
      %v2006 = vmul.f32 1.0, %v2005
      %v2007 = vrcp.pop %v1877
      %v2008 = vmul.f32 %v1877, %v2007
      %v2009 = vsub.f32 1.0, %v2008
      %v2010 = vmul.f32 %v2007, %v2009
      %v2011 = vadd.f32 %v2007, %v2010
      %vm2012 = vweird.f32 %v1877
      %vm2013 = vweird.f32 %v2007
      %vm2014 = vmor %vm2012, %vm2013
      %v2015 = vsel %vm2014, %v2007, %v2011
      %v2016 = vand.u32 2147483647, %v1877
      %vm2017 = vcmp.eq.f32.partialorder %v2016, 8.507059e+37
      %v2018 = vand.u32 %v1877, 2147483648
      %v2019 = vor.u32 1.1754944e-38, %v2018
      %v2020 = vsel %vm2017, %v2019, %v2015
      %v2021 = vmul.f32 1.0, %v2020
      %v2022 = vrcp.pop %v1878
      %v2023 = vmul.f32 %v1878, %v2022
      %v2024 = vsub.f32 1.0, %v2023
      %v2025 = vmul.f32 %v2022, %v2024
      %v2026 = vadd.f32 %v2022, %v2025
      %vm2027 = vweird.f32 %v1878
      %vm2028 = vweird.f32 %v2022
      %vm2029 = vmor %vm2027, %vm2028
      %v2030 = vsel %vm2029, %v2022, %v2026
      %v2031 = vand.u32 2147483647, %v1878
      %vm2032 = vcmp.eq.f32.partialorder %v2031, 8.507059e+37
      %v2033 = vand.u32 %v1878, 2147483648
      %v2034 = vor.u32 1.1754944e-38, %v2033
      %v2035 = vsel %vm2032, %v2034, %v2030
      %v2036 = vmul.f32 1.0, %v2035
      %v2037 = vrcp.pop %v1879
      %v2038 = vmul.f32 %v1879, %v2037
      %v2039 = vsub.f32 1.0, %v2038
      %v2040 = vmul.f32 %v2037, %v2039
      %v2041 = vadd.f32 %v2037, %v2040
      %vm2042 = vweird.f32 %v1879
      %vm2043 = vweird.f32 %v2037
      %vm2044 = vmor %vm2042, %vm2043
      %v2045 = vsel %vm2044, %v2037, %v2041
      %v2046 = vand.u32 2147483647, %v1879
      %vm2047 = vcmp.eq.f32.partialorder %v2046, 8.507059e+37
      %v2048 = vand.u32 %v1879, 2147483648
      %v2049 = vor.u32 1.1754944e-38, %v2048
      %v2050 = vsel %vm2047, %v2049, %v2045
      %v2051 = vmul.f32 1.0, %v2050
      %v2052 = vrcp.pop %v1880
      %v2053 = vmul.f32 %v1880, %v2052
      %v2054 = vsub.f32 1.0, %v2053
      %v2055 = vmul.f32 %v2052, %v2054
      %v2056 = vadd.f32 %v2052, %v2055
      %vm2057 = vweird.f32 %v1880
      %vm2058 = vweird.f32 %v2052
      %vm2059 = vmor %vm2057, %vm2058
      %v2060 = vsel %vm2059, %v2052, %v2056
      %v2061 = vand.u32 2147483647, %v1880
      %vm2062 = vcmp.eq.f32.partialorder %v2061, 8.507059e+37
      %v2063 = vand.u32 %v1880, 2147483648
      %v2064 = vor.u32 1.1754944e-38, %v2063
      %v2065 = vsel %vm2062, %v2064, %v2060
      %v2066 = vmul.f32 1.0, %v2065
      %v2067 = vrcp.pop %v1881
      %v2068 = vmul.f32 %v1881, %v2067
      %v2069 = vsub.f32 1.0, %v2068
      %v2070 = vmul.f32 %v2067, %v2069
      %v2071 = vadd.f32 %v2067, %v2070
      %vm2072 = vweird.f32 %v1881
      %vm2073 = vweird.f32 %v2067
      %vm2074 = vmor %vm2072, %vm2073
      %v2075 = vsel %vm2074, %v2067, %v2071
      %v2076 = vand.u32 2147483647, %v1881
      %vm2077 = vcmp.eq.f32.partialorder %v2076, 8.507059e+37
      %v2078 = vand.u32 %v1881, 2147483648
      %v2079 = vor.u32 1.1754944e-38, %v2078
      %v2080 = vsel %vm2077, %v2079, %v2075
      %v2081 = vmul.f32 1.0, %v2080
      %v2082 = vrcp.pop %v1882
      %v2083 = vmul.f32 %v1882, %v2082
      %v2084 = vsub.f32 1.0, %v2083
      %v2085 = vmul.f32 %v2082, %v2084
      %v2086 = vadd.f32 %v2082, %v2085
      %vm2087 = vweird.f32 %v1882
      %vm2088 = vweird.f32 %v2082
      %vm2089 = vmor %vm2087, %vm2088
      %v2090 = vsel %vm2089, %v2082, %v2086
      %v2091 = vand.u32 2147483647, %v1882
      %vm2092 = vcmp.eq.f32.partialorder %v2091, 8.507059e+37
      %v2093 = vand.u32 %v1882, 2147483648
      %v2094 = vor.u32 1.1754944e-38, %v2093
      %v2095 = vsel %vm2092, %v2094, %v2090
      %v2096 = vmul.f32 1.0, %v2095
      %v2097 = vrcp.pop %v1883
      %v2098 = vmul.f32 %v1883, %v2097
      %v2099 = vsub.f32 1.0, %v2098
      %v2100 = vmul.f32 %v2097, %v2099
      %v2101 = vadd.f32 %v2097, %v2100
      %vm2102 = vweird.f32 %v1883
      %vm2103 = vweird.f32 %v2097
      %vm2104 = vmor %vm2102, %vm2103
      %v2105 = vsel %vm2104, %v2097, %v2101
      %v2106 = vand.u32 2147483647, %v1883
      %vm2107 = vcmp.eq.f32.partialorder %v2106, 8.507059e+37
      %v2108 = vand.u32 %v1883, 2147483648
      %v2109 = vor.u32 1.1754944e-38, %v2108
      %v2110 = vsel %vm2107, %v2109, %v2105
      %v2111 = vmul.f32 1.0, %v2110
      %v2112 = vrcp.pop %v1884
      %v2113 = vmul.f32 %v1884, %v2112
      %v2114 = vsub.f32 1.0, %v2113
      %v2115 = vmul.f32 %v2112, %v2114
      %v2116 = vadd.f32 %v2112, %v2115
      %vm2117 = vweird.f32 %v1884
      %vm2118 = vweird.f32 %v2112
      %vm2119 = vmor %vm2117, %vm2118
      %v2120 = vsel %vm2119, %v2112, %v2116
      %v2121 = vand.u32 2147483647, %v1884
      %vm2122 = vcmp.eq.f32.partialorder %v2121, 8.507059e+37
      %v2123 = vand.u32 %v1884, 2147483648
      %v2124 = vor.u32 1.1754944e-38, %v2123
      %v2125 = vsel %vm2122, %v2124, %v2120
      %v2126 = vmul.f32 1.0, %v2125
      %v2127 = vrcp.pop %v1885
      %v2128 = vmul.f32 %v1885, %v2127
      %v2129 = vsub.f32 1.0, %v2128
      %v2130 = vmul.f32 %v2127, %v2129
      %v2131 = vadd.f32 %v2127, %v2130
      %vm2132 = vweird.f32 %v1885
      %vm2133 = vweird.f32 %v2127
      %vm2134 = vmor %vm2132, %vm2133
      %v2135 = vsel %vm2134, %v2127, %v2131
      %v2136 = vand.u32 2147483647, %v1885
      %vm2137 = vcmp.eq.f32.partialorder %v2136, 8.507059e+37
      %v2138 = vand.u32 %v1885, 2147483648
      %v2139 = vor.u32 1.1754944e-38, %v2138
      %v2140 = vsel %vm2137, %v2139, %v2135
      %v2141 = vmul.f32 1.0, %v2140
      %v2142 = vrcp.pop %v1886
      %v2143 = vmul.f32 %v1886, %v2142
      %v2144 = vsub.f32 1.0, %v2143
      %v2145 = vmul.f32 %v2142, %v2144
      %v2146 = vadd.f32 %v2142, %v2145
      %vm2147 = vweird.f32 %v1886
      %vm2148 = vweird.f32 %v2142
      %vm2149 = vmor %vm2147, %vm2148
      %v2150 = vsel %vm2149, %v2142, %v2146
      %v2151 = vand.u32 2147483647, %v1886
      %vm2152 = vcmp.eq.f32.partialorder %v2151, 8.507059e+37
      %v2153 = vand.u32 %v1886, 2147483648
      %v2154 = vor.u32 1.1754944e-38, %v2153
      %v2155 = vsel %vm2152, %v2154, %v2150
      %v2156 = vmul.f32 1.0, %v2155
      %v2157 = vrcp.pop %v1887
      %v2158 = vmul.f32 %v1887, %v2157
      %v2159 = vsub.f32 1.0, %v2158
      %v2160 = vmul.f32 %v2157, %v2159
      %v2161 = vadd.f32 %v2157, %v2160
      %vm2162 = vweird.f32 %v1887
      %vm2163 = vweird.f32 %v2157
      %vm2164 = vmor %vm2162, %vm2163
      %v2165 = vsel %vm2164, %v2157, %v2161
      %v2166 = vand.u32 2147483647, %v1887
      %vm2167 = vcmp.eq.f32.partialorder %v2166, 8.507059e+37
      %v2168 = vand.u32 %v1887, 2147483648
      %v2169 = vor.u32 1.1754944e-38, %v2168
      %v2170 = vsel %vm2167, %v2169, %v2165
      %v2171 = vmul.f32 1.0, %v2170
      %v2172 = vrcp.pop %v1888
      %v2173 = vmul.f32 %v1888, %v2172
      %v2174 = vsub.f32 1.0, %v2173
      %v2175 = vmul.f32 %v2172, %v2174
      %v2176 = vadd.f32 %v2172, %v2175
      %vm2177 = vweird.f32 %v1888
      %vm2178 = vweird.f32 %v2172
      %vm2179 = vmor %vm2177, %vm2178
      %v2180 = vsel %vm2179, %v2172, %v2176
      %v2181 = vand.u32 2147483647, %v1888
      %vm2182 = vcmp.eq.f32.partialorder %v2181, 8.507059e+37
      %v2183 = vand.u32 %v1888, 2147483648
      %v2184 = vor.u32 1.1754944e-38, %v2183
      %v2185 = vsel %vm2182, %v2184, %v2180
      %v2186 = vmul.f32 1.0, %v2185
      %v2187 = vrcp.pop %v1889
      %v2188 = vmul.f32 %v1889, %v2187
      %v2189 = vsub.f32 1.0, %v2188
      %v2190 = vmul.f32 %v2187, %v2189
      %v2191 = vadd.f32 %v2187, %v2190
      %vm2192 = vweird.f32 %v1889
      %vm2193 = vweird.f32 %v2187
      %vm2194 = vmor %vm2192, %vm2193
      %v2195 = vsel %vm2194, %v2187, %v2191
      %v2196 = vand.u32 2147483647, %v1889
      %vm2197 = vcmp.eq.f32.partialorder %v2196, 8.507059e+37
      %v2198 = vand.u32 %v1889, 2147483648
      %v2199 = vor.u32 1.1754944e-38, %v2198
      %v2200 = vsel %vm2197, %v2199, %v2195
      %v2201 = vmul.f32 1.0, %v2200
      %v2202 = vrcp.pop %v1890
      %v2203 = vmul.f32 %v1890, %v2202
      %v2204 = vsub.f32 1.0, %v2203
      %v2205 = vmul.f32 %v2202, %v2204
      %v2206 = vadd.f32 %v2202, %v2205
      %vm2207 = vweird.f32 %v1890
      %vm2208 = vweird.f32 %v2202
      %vm2209 = vmor %vm2207, %vm2208
      %v2210 = vsel %vm2209, %v2202, %v2206
      %v2211 = vand.u32 2147483647, %v1890
      %vm2212 = vcmp.eq.f32.partialorder %v2211, 8.507059e+37
      %v2213 = vand.u32 %v1890, 2147483648
      %v2214 = vor.u32 1.1754944e-38, %v2213
      %v2215 = vsel %vm2212, %v2214, %v2210
      %v2216 = vmul.f32 1.0, %v2215
      %v2217 = vrcp.pop %v1891
      %v2218 = vmul.f32 %v1891, %v2217
      %v2219 = vsub.f32 1.0, %v2218
      %v2220 = vmul.f32 %v2217, %v2219
      %v2221 = vadd.f32 %v2217, %v2220
      %vm2222 = vweird.f32 %v1891
      %vm2223 = vweird.f32 %v2217
      %vm2224 = vmor %vm2222, %vm2223
      %v2225 = vsel %vm2224, %v2217, %v2221
      %v2226 = vand.u32 2147483647, %v1891
      %vm2227 = vcmp.eq.f32.partialorder %v2226, 8.507059e+37
      %v2228 = vand.u32 %v1891, 2147483648
      %v2229 = vor.u32 1.1754944e-38, %v2228
      %v2230 = vsel %vm2227, %v2229, %v2225
      %v2231 = vmul.f32 1.0, %v2230
      %v2232 = vrcp.pop %v1892
      %v2233 = vmul.f32 %v1892, %v2232
      %v2234 = vsub.f32 1.0, %v2233
      %v2235 = vmul.f32 %v2232, %v2234
      %v2236 = vadd.f32 %v2232, %v2235
      %vm2237 = vweird.f32 %v1892
      %vm2238 = vweird.f32 %v2232
      %vm2239 = vmor %vm2237, %vm2238
      %v2240 = vsel %vm2239, %v2232, %v2236
      %v2241 = vand.u32 2147483647, %v1892
      %vm2242 = vcmp.eq.f32.partialorder %v2241, 8.507059e+37
      %v2243 = vand.u32 %v1892, 2147483648
      %v2244 = vor.u32 1.1754944e-38, %v2243
      %v2245 = vsel %vm2242, %v2244, %v2240
      %v2246 = vmul.f32 1.0, %v2245
      %v2247 = vrcp.pop %v1893
      %v2248 = vmul.f32 %v1893, %v2247
      %v2249 = vsub.f32 1.0, %v2248
      %v2250 = vmul.f32 %v2247, %v2249
      %v2251 = vadd.f32 %v2247, %v2250
      %vm2252 = vweird.f32 %v1893
      %vm2253 = vweird.f32 %v2247
      %vm2254 = vmor %vm2252, %vm2253
      %v2255 = vsel %vm2254, %v2247, %v2251
      %v2256 = vand.u32 2147483647, %v1893
      %vm2257 = vcmp.eq.f32.partialorder %v2256, 8.507059e+37
      %v2258 = vand.u32 %v1893, 2147483648
      %v2259 = vor.u32 1.1754944e-38, %v2258
      %v2260 = vsel %vm2257, %v2259, %v2255
      %v2261 = vmul.f32 1.0, %v2260
      %v2262 = vrcp.pop %v1894
      %v2263 = vmul.f32 %v1894, %v2262
      %v2264 = vsub.f32 1.0, %v2263
      %v2265 = vmul.f32 %v2262, %v2264
      %v2266 = vadd.f32 %v2262, %v2265
      %vm2267 = vweird.f32 %v1894
      %vm2268 = vweird.f32 %v2262
      %vm2269 = vmor %vm2267, %vm2268
      %v2270 = vsel %vm2269, %v2262, %v2266
      %v2271 = vand.u32 2147483647, %v1894
      %vm2272 = vcmp.eq.f32.partialorder %v2271, 8.507059e+37
      %v2273 = vand.u32 %v1894, 2147483648
      %v2274 = vor.u32 1.1754944e-38, %v2273
      %v2275 = vsel %vm2272, %v2274, %v2270
      %v2276 = vmul.f32 1.0, %v2275
      %v2277 = vrcp.pop %v1895
      %v2278 = vmul.f32 %v1895, %v2277
      %v2279 = vsub.f32 1.0, %v2278
      %v2280 = vmul.f32 %v2277, %v2279
      %v2281 = vadd.f32 %v2277, %v2280
      %vm2282 = vweird.f32 %v1895
      %vm2283 = vweird.f32 %v2277
      %vm2284 = vmor %vm2282, %vm2283
      %v2285 = vsel %vm2284, %v2277, %v2281
      %v2286 = vand.u32 2147483647, %v1895
      %vm2287 = vcmp.eq.f32.partialorder %v2286, 8.507059e+37
      %v2288 = vand.u32 %v1895, 2147483648
      %v2289 = vor.u32 1.1754944e-38, %v2288
      %v2290 = vsel %vm2287, %v2289, %v2285
      %v2291 = vmul.f32 1.0, %v2290
      %v2292 = vrcp.pop %v1896
      %v2293 = vmul.f32 %v1896, %v2292
      %v2294 = vsub.f32 1.0, %v2293
      %v2295 = vmul.f32 %v2292, %v2294
      %v2296 = vadd.f32 %v2292, %v2295
      %vm2297 = vweird.f32 %v1896
      %vm2298 = vweird.f32 %v2292
      %vm2299 = vmor %vm2297, %vm2298
      %v2300 = vsel %vm2299, %v2292, %v2296
      %v2301 = vand.u32 2147483647, %v1896
      %vm2302 = vcmp.eq.f32.partialorder %v2301, 8.507059e+37
      %v2303 = vand.u32 %v1896, 2147483648
      %v2304 = vor.u32 1.1754944e-38, %v2303
      %v2305 = vsel %vm2302, %v2304, %v2300
      %v2306 = vmul.f32 1.0, %v2305
      %v2307 = vrcp.pop %v1897
      %v2308 = vmul.f32 %v1897, %v2307
      %v2309 = vsub.f32 1.0, %v2308
      %v2310 = vmul.f32 %v2307, %v2309
      %v2311 = vadd.f32 %v2307, %v2310
      %vm2312 = vweird.f32 %v1897
      %vm2313 = vweird.f32 %v2307
      %vm2314 = vmor %vm2312, %vm2313
      %v2315 = vsel %vm2314, %v2307, %v2311
      %v2316 = vand.u32 2147483647, %v1897
      %vm2317 = vcmp.eq.f32.partialorder %v2316, 8.507059e+37
      %v2318 = vand.u32 %v1897, 2147483648
      %v2319 = vor.u32 1.1754944e-38, %v2318
      %v2320 = vsel %vm2317, %v2319, %v2315
      %v2321 = vmul.f32 1.0, %v2320
      %v2322 = vrcp.pop %v1898
      %v2323 = vmul.f32 %v1898, %v2322
      %v2324 = vsub.f32 1.0, %v2323
      %v2325 = vmul.f32 %v2322, %v2324
      %v2326 = vadd.f32 %v2322, %v2325
      %vm2327 = vweird.f32 %v1898
      %vm2328 = vweird.f32 %v2322
      %vm2329 = vmor %vm2327, %vm2328
      %v2330 = vsel %vm2329, %v2322, %v2326
      %v2331 = vand.u32 2147483647, %v1898
      %vm2332 = vcmp.eq.f32.partialorder %v2331, 8.507059e+37
      %v2333 = vand.u32 %v1898, 2147483648
      %v2334 = vor.u32 1.1754944e-38, %v2333
      %v2335 = vsel %vm2332, %v2334, %v2330
      %v2336 = vmul.f32 1.0, %v2335
      %v2337 = vrcp.pop %v1899
      %v2338 = vmul.f32 %v1899, %v2337
      %v2339 = vsub.f32 1.0, %v2338
      %v2340 = vmul.f32 %v2337, %v2339
      %v2341 = vadd.f32 %v2337, %v2340
      %vm2342 = vweird.f32 %v1899
      %vm2343 = vweird.f32 %v2337
      %vm2344 = vmor %vm2342, %vm2343
      %v2345 = vsel %vm2344, %v2337, %v2341
      %v2346 = vand.u32 2147483647, %v1899
      %vm2347 = vcmp.eq.f32.partialorder %v2346, 8.507059e+37
      %v2348 = vand.u32 %v1899, 2147483648
      %v2349 = vor.u32 1.1754944e-38, %v2348
      %v2350 = vsel %vm2347, %v2349, %v2345
      %v2351 = vmul.f32 1.0, %v2350
      %v2352 = vrcp.pop %v1900
      %v2353 = vmul.f32 %v1900, %v2352
      %v2354 = vsub.f32 1.0, %v2353
      %v2355 = vmul.f32 %v2352, %v2354
      %v2356 = vadd.f32 %v2352, %v2355
      %vm2357 = vweird.f32 %v1900
      %vm2358 = vweird.f32 %v2352
      %vm2359 = vmor %vm2357, %vm2358
      %v2360 = vsel %vm2359, %v2352, %v2356
      %v2361 = vand.u32 2147483647, %v1900
      %vm2362 = vcmp.eq.f32.partialorder %v2361, 8.507059e+37
      %v2363 = vand.u32 %v1900, 2147483648
      %v2364 = vor.u32 1.1754944e-38, %v2363
      %v2365 = vsel %vm2362, %v2364, %v2360
      %v2366 = vmul.f32 1.0, %v2365
      %v2367 = vrcp.pop %v1901
      %v2368 = vmul.f32 %v1901, %v2367
      %v2369 = vsub.f32 1.0, %v2368
      %v2370 = vmul.f32 %v2367, %v2369
      %v2371 = vadd.f32 %v2367, %v2370
      %vm2372 = vweird.f32 %v1901
      %vm2373 = vweird.f32 %v2367
      %vm2374 = vmor %vm2372, %vm2373
      %v2375 = vsel %vm2374, %v2367, %v2371
      %v2376 = vand.u32 2147483647, %v1901
      %vm2377 = vcmp.eq.f32.partialorder %v2376, 8.507059e+37
      %v2378 = vand.u32 %v1901, 2147483648
      %v2379 = vor.u32 1.1754944e-38, %v2378
      %v2380 = vsel %vm2377, %v2379, %v2375
      %v2381 = vmul.f32 1.0, %v2380
      %2383 = vset.pattern.permute.xlu0 0
      %2384 = vperm.xlu0 %2383, %v1916
      %v2385 = vpop.permute.xlu0 %2384
      %2388 = vset.pattern.permute.xlu0 0
      %2389 = vperm.xlu0 %2388, %v1931
      %v2390 = vpop.permute.xlu0 %2389
      %2393 = vset.pattern.permute.xlu0 0
      %2394 = vperm.xlu0 %2393, %v1946
      %v2395 = vpop.permute.xlu0 %2394
      %2398 = vset.pattern.permute.xlu0 0
      %2399 = vperm.xlu0 %2398, %v1961
      %v2400 = vpop.permute.xlu0 %2399
      %2403 = vset.pattern.permute.xlu0 0
      %2404 = vperm.xlu0 %2403, %v1976
      %v2405 = vpop.permute.xlu0 %2404
      %2408 = vset.pattern.permute.xlu0 0
      %2409 = vperm.xlu0 %2408, %v1991
      %v2410 = vpop.permute.xlu0 %2409
      %2413 = vset.pattern.permute.xlu0 0
      %2414 = vperm.xlu0 %2413, %v2006
      %v2415 = vpop.permute.xlu0 %2414
      %2418 = vset.pattern.permute.xlu0 0
      %2419 = vperm.xlu0 %2418, %v2021
      %v2420 = vpop.permute.xlu0 %2419
      %2423 = vset.pattern.permute.xlu0 0
      %2424 = vperm.xlu0 %2423, %v2036
      %v2425 = vpop.permute.xlu0 %2424
      %2428 = vset.pattern.permute.xlu0 0
      %2429 = vperm.xlu0 %2428, %v2051
      %v2430 = vpop.permute.xlu0 %2429
      %2433 = vset.pattern.permute.xlu0 0
      %2434 = vperm.xlu0 %2433, %v2066
      %v2435 = vpop.permute.xlu0 %2434
      %2438 = vset.pattern.permute.xlu0 0
      %2439 = vperm.xlu0 %2438, %v2081
      %v2440 = vpop.permute.xlu0 %2439
      %2443 = vset.pattern.permute.xlu0 0
      %2444 = vperm.xlu0 %2443, %v2096
      %v2445 = vpop.permute.xlu0 %2444
      %2448 = vset.pattern.permute.xlu0 0
      %2449 = vperm.xlu0 %2448, %v2111
      %v2450 = vpop.permute.xlu0 %2449
      %2453 = vset.pattern.permute.xlu0 0
      %2454 = vperm.xlu0 %2453, %v2126
      %v2455 = vpop.permute.xlu0 %2454
      %2458 = vset.pattern.permute.xlu0 0
      %2459 = vperm.xlu0 %2458, %v2141
      %v2460 = vpop.permute.xlu0 %2459
      %2463 = vset.pattern.permute.xlu0 0
      %2464 = vperm.xlu0 %2463, %v2156
      %v2465 = vpop.permute.xlu0 %2464
      %2468 = vset.pattern.permute.xlu0 0
      %2469 = vperm.xlu0 %2468, %v2171
      %v2470 = vpop.permute.xlu0 %2469
      %2473 = vset.pattern.permute.xlu0 0
      %2474 = vperm.xlu0 %2473, %v2186
      %v2475 = vpop.permute.xlu0 %2474
      %2478 = vset.pattern.permute.xlu0 0
      %2479 = vperm.xlu0 %2478, %v2201
      %v2480 = vpop.permute.xlu0 %2479
      %2483 = vset.pattern.permute.xlu0 0
      %2484 = vperm.xlu0 %2483, %v2216
      %v2485 = vpop.permute.xlu0 %2484
      %2488 = vset.pattern.permute.xlu0 0
      %2489 = vperm.xlu0 %2488, %v2231
      %v2490 = vpop.permute.xlu0 %2489
      %2493 = vset.pattern.permute.xlu0 0
      %2494 = vperm.xlu0 %2493, %v2246
      %v2495 = vpop.permute.xlu0 %2494
      %2498 = vset.pattern.permute.xlu0 0
      %2499 = vperm.xlu0 %2498, %v2261
      %v2500 = vpop.permute.xlu0 %2499
      %2503 = vset.pattern.permute.xlu0 0
      %2504 = vperm.xlu0 %2503, %v2276
      %v2505 = vpop.permute.xlu0 %2504
      %2508 = vset.pattern.permute.xlu0 0
      %2509 = vperm.xlu0 %2508, %v2291
      %v2510 = vpop.permute.xlu0 %2509
      %2513 = vset.pattern.permute.xlu0 0
      %2514 = vperm.xlu0 %2513, %v2306
      %v2515 = vpop.permute.xlu0 %2514
      %2518 = vset.pattern.permute.xlu0 0
      %2519 = vperm.xlu0 %2518, %v2321
      %v2520 = vpop.permute.xlu0 %2519
      %2523 = vset.pattern.permute.xlu0 0
      %2524 = vperm.xlu0 %2523, %v2336
      %v2525 = vpop.permute.xlu0 %2524
      %2528 = vset.pattern.permute.xlu0 0
      %2529 = vperm.xlu0 %2528, %v2351
      %v2530 = vpop.permute.xlu0 %2529
      %2533 = vset.pattern.permute.xlu0 0
      %2534 = vperm.xlu0 %2533, %v2366
      %v2535 = vpop.permute.xlu0 %2534
      %2538 = vset.pattern.permute.xlu0 0
      %2539 = vperm.xlu0 %2538, %v2381
      %v2540 = vpop.permute.xlu0 %2539
      %v2542 = vmul.f32 %v1547, %v2385
      %v2543 = vmul.f32 %v1548, %v2390
      %v2544 = vmul.f32 %v1549, %v2395
      %v2545 = vmul.f32 %v1550, %v2400
      %v2546 = vmul.f32 %v1551, %v2405
      %v2547 = vmul.f32 %v1552, %v2410
      %v2548 = vmul.f32 %v1553, %v2415
      %v2549 = vmul.f32 %v1554, %v2420
      %v2550 = vmul.f32 %v1555, %v2425
      %v2551 = vmul.f32 %v1556, %v2430
      %v2552 = vmul.f32 %v1557, %v2435
      %v2553 = vmul.f32 %v1558, %v2440
      %v2554 = vmul.f32 %v1559, %v2445
      %v2555 = vmul.f32 %v1560, %v2450
      %v2556 = vmul.f32 %v1561, %v2455
      %v2557 = vmul.f32 %v1562, %v2460
      %v2558 = vmul.f32 %v1563, %v2465
      %v2559 = vmul.f32 %v1564, %v2470
      %v2560 = vmul.f32 %v1565, %v2475
      %v2561 = vmul.f32 %v1566, %v2480
      %v2562 = vmul.f32 %v1567, %v2485
      %v2563 = vmul.f32 %v1568, %v2490
      %v2564 = vmul.f32 %v1569, %v2495
      %v2565 = vmul.f32 %v1570, %v2500
      %v2566 = vmul.f32 %v1571, %v2505
      %v2567 = vmul.f32 %v1572, %v2510
      %v2568 = vmul.f32 %v1573, %v2515
      %v2569 = vmul.f32 %v1574, %v2520
      %v2570 = vmul.f32 %v1575, %v2525
      %v2571 = vmul.f32 %v1576, %v2530
      %v2572 = vmul.f32 %v1577, %v2535
      %v2573 = vmul.f32 %v1578, %v2540
      %2574 = vst [vmem:[%s447] sm:$0xff] %v2542
      %2575 = vst [vmem:[%s447 + $0x8] sm:$0xff] %v2543
      %2576 = vst [vmem:[%s447 + $0x10] sm:$0xff] %v2544
      %2577 = vst [vmem:[%s447 + $0x18] sm:$0xff] %v2545
      %2578 = vst [vmem:[%s447 + $0x20] sm:$0xff] %v2546
      %2579 = vst [vmem:[%s447 + $0x28] sm:$0xff] %v2547
      %2580 = vst [vmem:[%s447 + $0x30] sm:$0xff] %v2548
      %2581 = vst [vmem:[%s447 + $0x38] sm:$0xff] %v2549
      %2582 = vst [vmem:[%s447 + $0x40] sm:$0xff] %v2550
      %2583 = vst [vmem:[%s447 + $0x48] sm:$0xff] %v2551
      %2584 = vst [vmem:[%s447 + $0x50] sm:$0xff] %v2552
      %2585 = vst [vmem:[%s447 + $0x58] sm:$0xff] %v2553
      %2586 = vst [vmem:[%s447 + $0x60] sm:$0xff] %v2554
      %2587 = vst [vmem:[%s447 + $0x68] sm:$0xff] %v2555
      %2588 = vst [vmem:[%s447 + $0x70] sm:$0xff] %v2556
      %2589 = vst [vmem:[%s447 + $0x78] sm:$0xff] %v2557
      %2590 = vst [vmem:[%s447 + $0x80] sm:$0xff] %v2558
      %2591 = vst [vmem:[%s447 + $0x88] sm:$0xff] %v2559
      %2592 = vst [vmem:[%s447 + $0x90] sm:$0xff] %v2560
      %2593 = vst [vmem:[%s447 + $0x98] sm:$0xff] %v2561
      %2594 = vst [vmem:[%s447 + $0xa0] sm:$0xff] %v2562
      %2595 = vst [vmem:[%s447 + $0xa8] sm:$0xff] %v2563
      %2596 = vst [vmem:[%s447 + $0xb0] sm:$0xff] %v2564
      %2597 = vst [vmem:[%s447 + $0xb8] sm:$0xff] %v2565
      %2598 = vst [vmem:[%s447 + $0xc0] sm:$0xff] %v2566
      %2599 = vst [vmem:[%s447 + $0xc8] sm:$0xff] %v2567
      %2600 = vst [vmem:[%s447 + $0xd0] sm:$0xff] %v2568
      %2601 = vst [vmem:[%s447 + $0xd8] sm:$0xff] %v2569
      %2602 = vst [vmem:[%s447 + $0xe0] sm:$0xff] %v2570
      %2603 = vst [vmem:[%s447 + $0xe8] sm:$0xff] %v2571
      %2604 = vst [vmem:[%s447 + $0xf0] sm:$0xff] %v2572
      %2605 = vst [vmem:[%s447 + $0xf8] sm:$0xff] %v2573
      %s2606 = smul.u32 32, %s24
      %p2607 = scmp.lt.s32.totalorder %s2606, 63
      %s2608 = scalar_select %p2607, %s2606, 63
      %s2609 = smul.addr %s2608, 8
      %s2610 = scalar_lea.vmem %s10, %s2609
      %s2611 = smul.u32 32, %s24
      %p2612 = scmp.lt.s32.totalorder %s2611, 63
      %s2613 = scalar_select %p2612, %s2611, 63
      %s2614 = smul.addr %s2613, 8
      %s2615 = scalar_lea.vmem %s11, %s2614
      // Predicated region
      $region61: #{net3d_layer_pallas.4} parent=59 // pred_check
        %p2616 = pneg %p267
      $region62: #{net3d_layer_pallas.4} parent=59 // pred_check_branch
        %2618 = sbr.rel (%p2616) target = $region64
      $region63: #{net3d_layer_pallas.4} parent=59 // pred_region
        %s2619 = smul.u32 32, %s24
      $region64: #{net3d_layer_pallas.4} parent=59 // pred_fallthru
        _
      // Predicated region
      $region65: #{net3d_layer_pallas.4} parent=59 // pred_check
        %p2620 = pneg %p293
      $region66: #{net3d_layer_pallas.4} parent=59 // pred_check_branch
        %2622 = sbr.rel (%p2620) target = $region68
      $region67: #{net3d_layer_pallas.4} parent=59 // pred_region
        %s2623 = smul.u32 32, %s24
      $region68: #{net3d_layer_pallas.4} parent=59 // pred_fallthru
        _
    $region60: #{net3d_layer_pallas.4} parent=5 // pred_fallthru
      _
    %p2624 = scmp.le.s32.totalorder 2, %s19
    // Predicated region
    $region69: #{net3d_layer_pallas.4} parent=5 // pred_check
      %p2625 = pneg %p2624
    $region70: #{net3d_layer_pallas.4} parent=5 // pred_check_branch
      %2627 = sbr.rel (%p2625) target = $region72
    $region71: #{net3d_layer_pallas.4} parent=5 // pred_region
      %s2628 = ssub.s32 %s19, 2
      // Predicated region
      $region73: #{net3d_layer_pallas.4} parent=71 // pred_check
        %p2629 = pneg %p273
      $region74: #{net3d_layer_pallas.4} parent=71 // pred_check_branch
        %2631 = sbr.rel (%p2629) target = $region76
      $region75: #{net3d_layer_pallas.4} parent=71 // pred_region
        %s2632 = smul.u32 32, %s25
        %p2633 = scmp.lt.s32.totalorder %s2632, 63
        %s2634 = scalar_select %p2633, %s2632, 63
        %s2635 = smul.addr %s2634, 8
        %s2636 = scalar_lea.vmem %s10, %s2635
      $region76: #{net3d_layer_pallas.4} parent=71 // pred_fallthru
        _
      // Predicated region
      $region77: #{net3d_layer_pallas.4} parent=71 // pred_check
        %p2637 = pneg %p299
      $region78: #{net3d_layer_pallas.4} parent=71 // pred_check_branch
        %2639 = sbr.rel (%p2637) target = $region80
      $region79: #{net3d_layer_pallas.4} parent=71 // pred_region
        %s2640 = smul.u32 32, %s25
        %p2641 = scmp.lt.s32.totalorder %s2640, 63
        %s2642 = scalar_select %p2641, %s2640, 63
        %s2643 = smul.addr %s2642, 8
        %s2644 = scalar_lea.vmem %s11, %s2643
      $region80: #{net3d_layer_pallas.4} parent=71 // pred_fallthru
        _
    $region72: #{net3d_layer_pallas.4} parent=5 // pred_fallthru
      _
  $region6: #{net3d_layer_pallas.4} parent=0 // loop_footer
    %s23 = sadd.s32 1, %s19
  $region7: #{net3d_layer_pallas.4} parent=0 // loop_footer_branch
    %18 = sbr.rel target = $region3
  $region8: #{net3d_layer_pallas.4} parent=0 // loop_exit
    _

// kernel: net3d_layer_pallas.5
$region0: #{net3d_layer_pallas.5}
  #allocation0 [shape = 'u32[]', space=smem, size = 0x4, offset = 0x4, fixed_abs, tag = 'smem constant byte address 0x4 - core index']
  #allocation1 [shape = 'u32[72,128]{1,0:T(1,128)}', space=vmem, size = 0x9000, scoped, tag = 'internal scratch']
  #allocation2 [shape = 'f32[128,128]{1,0:T(8,128)}', space=vmem, size = 0x10000, scoped, tag = 'scratch operand']
  %s0 = inlined_call_operand.vmem [shape: s32[1,512], index: 0, kind: input, shape index: {}]
  %s1 = inlined_call_operand.vmem [shape: f32[512,128], index: 1, kind: input, shape index: {}]
  %s2 = inlined_call_operand.vmem [shape: f32[128,128], index: 2, kind: input, shape index: {}]
  %s3 = inlined_call_operand.vmem [shape: f32[128,128], index: 3, kind: input, shape index: {}]
  %s4 = inlined_call_operand.vmem [shape: f32[128,128], index: 4, kind: input, shape index: {}]
  %s5 = inlined_call_operand.vmem [shape: f32[2,128], index: 5, kind: input, shape index: {}]
  %s6 = inlined_call_operand.vmem [shape: f32[128,128], index: 6, kind: output, shape index: {}]
  %s7 = sld [smem:[#allocation0]]
  $region65: #{net3d_layer_pallas.5} parent=0
    _
  %s9 = ssub.s32 1, %s7
  %s10 = scalar_select 0, %s9, %s7
  loop: start=0, step=1, limit=4
  $region2: #{net3d_layer_pallas.5} parent=0 // loop_pre_header
    _
  $region3: #{net3d_layer_pallas.5} parent=0 // loop_header
    %s12 = sphi 0, %s16
    %p13 = scmp.ge.s32.totalorder %s12, 4
    %s19 = sphi 0, %s31
    %s20 = sphi 0, %s27
    %s21 = sphi 0, %s19
    %s22 = sphi 0, %s20
    %s23 = sphi 0, %s21
    %s24 = sphi 0, %s22
    %s34 = sphi 0, %s36
    %s37 = sphi 0, %s34
    %s38 = sphi 0, %s37
    %s54 = sphi 0, %s38
    %s60 = sphi 0, %s62
    %s63 = sphi 0, %s60
    %s64 = sphi 0, %s63
    %s80 = sphi 0, %s64
    %s86 = sphi 0, %s88
    %s89 = sphi 0, %s86
    %s90 = sphi 0, %s89
    %s106 = sphi 0, %s90
    %s110 = sphi 0, %s110
    %s112 = sphi 0, %s110
    %s113 = sphi 0, %s112
    %s127 = sphi 0, %s113
    %s131 = sphi 0, %s131
    %s133 = sphi 0, %s131
    %s134 = sphi 0, %s133
    %s148 = sphi 0, %s134
    %s152 = sphi 0, %s152
    %s154 = sphi 0, %s152
    %s155 = sphi 0, %s154
    %s169 = sphi 0, %s155
    %s175 = sphi 0, %s177
    %s178 = sphi 0, %s175
    %s179 = sphi 0, %s178
    %s195 = sphi 0, %s179
  $region4: #{net3d_layer_pallas.5} parent=0 // loop_header_branch
    %15 = sbr.rel (%p13) target = $region8
  $region5: #{net3d_layer_pallas.5} parent=0 // loop_body
    %s17 = ssub.s32 %s12, 1
    %s18 = ssub.s32 %s12, 2
    %s25 = sadd.s32 1, %s20
    %p26 = scmp.ge.s32.totalorder %s25, 2
    %s27 = scalar_select %p26, 0, %s25
    %s28 = sadd.s32 1, %s19
    %s29 = scalar_select %p26, %s28, %s19
    %p30 = scmp.ge.s32.totalorder %s29, 1
    %s31 = scalar_select %p30, 0, %s29
    %s32 = ssub.s32 %s20, %s27
    %p33 = scmp.eq.s32.totalorder %s32, 0
    %s35 = sadd.s32 %s34, 1
    %s36 = scalar_select %p33, %s34, %s35
    %p39 = pneg %p33
    %p40 = scmp.eq.s32.totalorder %s12, 1
    %p41 = por %p39, %p40
    %p42 = scmp.ne.s32.totalorder %s34, %s37
    %p43 = scmp.eq.s32.totalorder %s12, 0
    %p44 = por %p42, %p43
    %p45 = scmp.ne.s32.totalorder %s34, %s37
    %p46 = scmp.eq.s32.totalorder %s17, 1
    %p47 = por %p45, %p46
    %p48 = scmp.ne.s32.totalorder %s37, %s38
    %p49 = scmp.eq.s32.totalorder %s17, 0
    %p50 = por %p48, %p49
    %p51 = scmp.ne.s32.totalorder %s37, %s38
    %p52 = scmp.eq.s32.totalorder %s18, 1
    %p53 = por %p51, %p52
    %p55 = scmp.ne.s32.totalorder %s38, %s54
    %p56 = scmp.eq.s32.totalorder %s18, 0
    %p57 = por %p55, %p56
    %s58 = ssub.s32 %s20, %s27
    %p59 = scmp.eq.s32.totalorder %s58, 0
    %s61 = sadd.s32 %s60, 1
    %s62 = scalar_select %p59, %s60, %s61
    %p65 = pneg %p59
    %p66 = scmp.eq.s32.totalorder %s12, 1
    %p67 = por %p65, %p66
    %p68 = scmp.ne.s32.totalorder %s60, %s63
    %p69 = scmp.eq.s32.totalorder %s12, 0
    %p70 = por %p68, %p69
    %p71 = scmp.ne.s32.totalorder %s60, %s63
    %p72 = scmp.eq.s32.totalorder %s17, 1
    %p73 = por %p71, %p72
    %p74 = scmp.ne.s32.totalorder %s63, %s64
    %p75 = scmp.eq.s32.totalorder %s17, 0
    %p76 = por %p74, %p75
    %p77 = scmp.ne.s32.totalorder %s63, %s64
    %p78 = scmp.eq.s32.totalorder %s18, 1
    %p79 = por %p77, %p78
    %p81 = scmp.ne.s32.totalorder %s64, %s80
    %p82 = scmp.eq.s32.totalorder %s18, 0
    %p83 = por %p81, %p82
    %s84 = ssub.s32 %s19, %s31
    %p85 = scmp.eq.s32.totalorder %s84, 0
    %s87 = sadd.s32 %s86, 1
    %s88 = scalar_select %p85, %s86, %s87
    %p91 = pneg %p85
    %p92 = scmp.eq.s32.totalorder %s12, 1
    %p93 = por %p91, %p92
    %p94 = scmp.ne.s32.totalorder %s86, %s89
    %p95 = scmp.eq.s32.totalorder %s12, 0
    %p96 = por %p94, %p95
    %p97 = scmp.ne.s32.totalorder %s86, %s89
    %p98 = scmp.eq.s32.totalorder %s17, 1
    %p99 = por %p97, %p98
    %p100 = scmp.ne.s32.totalorder %s89, %s90
    %p101 = scmp.eq.s32.totalorder %s17, 0
    %p102 = por %p100, %p101
    %p103 = scmp.ne.s32.totalorder %s89, %s90
    %p104 = scmp.eq.s32.totalorder %s18, 1
    %p105 = por %p103, %p104
    %p107 = scmp.ne.s32.totalorder %s90, %s106
    %p108 = scmp.eq.s32.totalorder %s18, 0
    %p109 = por %p107, %p108
    %s111 = sadd.s32 %s110, 1
    %p114 = scmp.eq.s32.totalorder %s12, 1
    %p115 = scmp.ne.s32.totalorder %s110, %s112
    %p116 = scmp.eq.s32.totalorder %s12, 0
    %p117 = por %p115, %p116
    %p118 = scmp.ne.s32.totalorder %s110, %s112
    %p119 = scmp.eq.s32.totalorder %s17, 1
    %p120 = por %p118, %p119
    %p121 = scmp.ne.s32.totalorder %s112, %s113
    %p122 = scmp.eq.s32.totalorder %s17, 0
    %p123 = por %p121, %p122
    %p124 = scmp.ne.s32.totalorder %s112, %s113
    %p125 = scmp.eq.s32.totalorder %s18, 1
    %p126 = por %p124, %p125
    %p128 = scmp.ne.s32.totalorder %s113, %s127
    %p129 = scmp.eq.s32.totalorder %s18, 0
    %p130 = por %p128, %p129
    %s132 = sadd.s32 %s131, 1
    %p135 = scmp.eq.s32.totalorder %s12, 1
    %p136 = scmp.ne.s32.totalorder %s131, %s133
    %p137 = scmp.eq.s32.totalorder %s12, 0
    %p138 = por %p136, %p137
    %p139 = scmp.ne.s32.totalorder %s131, %s133
    %p140 = scmp.eq.s32.totalorder %s17, 1
    %p141 = por %p139, %p140
    %p142 = scmp.ne.s32.totalorder %s133, %s134
    %p143 = scmp.eq.s32.totalorder %s17, 0
    %p144 = por %p142, %p143
    %p145 = scmp.ne.s32.totalorder %s133, %s134
    %p146 = scmp.eq.s32.totalorder %s18, 1
    %p147 = por %p145, %p146
    %p149 = scmp.ne.s32.totalorder %s134, %s148
    %p150 = scmp.eq.s32.totalorder %s18, 0
    %p151 = por %p149, %p150
    %s153 = sadd.s32 %s152, 1
    %p156 = scmp.eq.s32.totalorder %s12, 1
    %p157 = scmp.ne.s32.totalorder %s152, %s154
    %p158 = scmp.eq.s32.totalorder %s12, 0
    %p159 = por %p157, %p158
    %p160 = scmp.ne.s32.totalorder %s152, %s154
    %p161 = scmp.eq.s32.totalorder %s17, 1
    %p162 = por %p160, %p161
    %p163 = scmp.ne.s32.totalorder %s154, %s155
    %p164 = scmp.eq.s32.totalorder %s17, 0
    %p165 = por %p163, %p164
    %p166 = scmp.ne.s32.totalorder %s154, %s155
    %p167 = scmp.eq.s32.totalorder %s18, 1
    %p168 = por %p166, %p167
    %p170 = scmp.ne.s32.totalorder %s155, %s169
    %p171 = scmp.eq.s32.totalorder %s18, 0
    %p172 = por %p170, %p171
    %s173 = ssub.s32 %s19, %s31
    %p174 = scmp.eq.s32.totalorder %s173, 0
    %s176 = sadd.s32 %s175, 1
    %s177 = scalar_select %p174, %s175, %s176
    %p180 = pneg %p174
    %p181 = scmp.eq.s32.totalorder %s12, 1
    %p182 = por %p180, %p181
    %p183 = scmp.ne.s32.totalorder %s175, %s178
    %p184 = scmp.eq.s32.totalorder %s12, 0
    %p185 = por %p183, %p184
    %p186 = scmp.ne.s32.totalorder %s175, %s178
    %p187 = scmp.eq.s32.totalorder %s17, 1
    %p188 = por %p186, %p187
    %p189 = scmp.ne.s32.totalorder %s178, %s179
    %p190 = scmp.eq.s32.totalorder %s17, 0
    %p191 = por %p189, %p190
    %p192 = scmp.ne.s32.totalorder %s178, %s179
    %p193 = scmp.eq.s32.totalorder %s18, 1
    %p194 = por %p192, %p193
    %p196 = scmp.ne.s32.totalorder %s179, %s195
    %p197 = scmp.eq.s32.totalorder %s18, 0
    %p198 = por %p196, %p197
    %p199 = scmp.le.s32.totalorder 1, %s12
    %p200 = scmp.lt.s32.totalorder %s12, 3
    %p201 = pnand %p199, %p200
    %p202 = pneg %p201
    // Predicated region
    $region9: #{net3d_layer_pallas.5} parent=5 // pred_check
      _
    $region10: #{net3d_layer_pallas.5} parent=5 // pred_check_branch
      %204 = sbr.rel (%p201) target = $region12
    $region11: #{net3d_layer_pallas.5} parent=5 // pred_region
      %s205 = ssub.s32 %s12, 1
      // Predicated region
      $region13: #{net3d_layer_pallas.5} parent=11 // pred_check
        %p206 = pneg %p102
      $region14: #{net3d_layer_pallas.5} parent=11 // pred_check_branch
        %208 = sbr.rel (%p206) target = $region16
      $region15: #{net3d_layer_pallas.5} parent=11 // pred_region
        %s209 = smul.u32 16, %s21
        %p210 = scmp.lt.s32.totalorder %s209, 15
        %s211 = scalar_select %p210, %s209, 15
        %s212 = smul.addr %s211, 8
        %s213 = scalar_lea.vmem %s2, %s212
        %s214 = smul.u32 16, %s21
      $region16: #{net3d_layer_pallas.5} parent=11 // pred_fallthru
        _
      // Predicated region
      $region17: #{net3d_layer_pallas.5} parent=11 // pred_check
        %p215 = pneg %p123
      $region18: #{net3d_layer_pallas.5} parent=11 // pred_check_branch
        %217 = sbr.rel (%p215) target = $region20
      $region19: #{net3d_layer_pallas.5} parent=11 // pred_region
        _
      $region20: #{net3d_layer_pallas.5} parent=11 // pred_fallthru
        _
      // Predicated region
      $region21: #{net3d_layer_pallas.5} parent=11 // pred_check
        %p218 = pneg %p144
      $region22: #{net3d_layer_pallas.5} parent=11 // pred_check_branch
        %220 = sbr.rel (%p218) target = $region24
      $region23: #{net3d_layer_pallas.5} parent=11 // pred_region
        _
      $region24: #{net3d_layer_pallas.5} parent=11 // pred_fallthru
        _
      // Predicated region
      $region25: #{net3d_layer_pallas.5} parent=11 // pred_check
        %p221 = pneg %p165
      $region26: #{net3d_layer_pallas.5} parent=11 // pred_check_branch
        %223 = sbr.rel (%p221) target = $region28
      $region27: #{net3d_layer_pallas.5} parent=11 // pred_region
        _
      $region28: #{net3d_layer_pallas.5} parent=11 // pred_fallthru
        _
    $region12: #{net3d_layer_pallas.5} parent=5 // pred_fallthru
      _
    %p224 = scmp.lt.s32.totalorder %s12, 2
    // Predicated region
    $region29: #{net3d_layer_pallas.5} parent=5 // pred_check
      %p225 = pneg %p224
    $region30: #{net3d_layer_pallas.5} parent=5 // pred_check_branch
      %227 = sbr.rel (%p225) target = $region32
    $region31: #{net3d_layer_pallas.5} parent=5 // pred_region
      // Predicated region
      $region33: #{net3d_layer_pallas.5} parent=31 // pred_check
        %p228 = pneg %p44
      $region34: #{net3d_layer_pallas.5} parent=31 // pred_check_branch
        %230 = sbr.rel (%p228) target = $region36
      $region35: #{net3d_layer_pallas.5} parent=31 // pred_region
        %s231 = smul.u32 2, %s20
        %p232 = scmp.lt.s32.totalorder %s231, 3
        %s233 = scalar_select %p232, %s231, 3
        %s234 = scalar_lea.vmem %s0, %s233
        %s235 = smul.u32 2, %s20
      $region36: #{net3d_layer_pallas.5} parent=31 // pred_fallthru
        _
      // Predicated region
      $region37: #{net3d_layer_pallas.5} parent=31 // pred_check
        %p236 = pneg %p70
      $region38: #{net3d_layer_pallas.5} parent=31 // pred_check_branch
        %238 = sbr.rel (%p236) target = $region40
      $region39: #{net3d_layer_pallas.5} parent=31 // pred_region
        %s239 = smul.u32 32, %s20
        %p240 = scmp.lt.s32.totalorder %s239, 63
        %s241 = scalar_select %p240, %s239, 63
        %s242 = smul.addr %s241, 8
        %s243 = scalar_lea.vmem %s1, %s242
        %s244 = smul.u32 32, %s20
      $region40: #{net3d_layer_pallas.5} parent=31 // pred_fallthru
        _
    $region32: #{net3d_layer_pallas.5} parent=5 // pred_fallthru
      _
    %p245 = scmp.le.s32.totalorder 1, %s12
    %p246 = scmp.lt.s32.totalorder %s12, 3
    %p247 = pnand %p245, %p246
    %p248 = pneg %p247
    // Predicated region
    $region41: #{net3d_layer_pallas.5} parent=5 // pred_check
      _
    $region42: #{net3d_layer_pallas.5} parent=5 // pred_check_branch
      %250 = sbr.rel (%p247) target = $region44
    $region43: #{net3d_layer_pallas.5} parent=5 // pred_region
      %s251 = ssub.s32 %s12, 1
      %s252 = smul.u32 2, %s22
      %p253 = scmp.lt.s32.totalorder %s252, 3
      %s254 = scalar_select %p253, %s252, 3
      %s255 = scalar_lea.vmem %s0, %s254
      %p256 = pneg %p50
      %p257 = pneg %p47
      %s258 = smul.u32 32, %s22
      %p259 = scmp.lt.s32.totalorder %s258, 63
      %s260 = scalar_select %p259, %s258, 63
      %s261 = smul.addr %s260, 8
      %s262 = scalar_lea.vmem %s1, %s261
      %p263 = pneg %p76
      %p264 = pneg %p73
      %s265 = smul.u32 16, %s21
      %p266 = scmp.lt.s32.totalorder %s265, 15
      %s267 = scalar_select %p266, %s265, 15
      %s268 = smul.addr %s267, 8
      %s269 = scalar_lea.vmem %s2, %s268
      %p270 = pneg %p102
      %p271 = pneg %p99
      %p272 = pneg %p123
      %p273 = pneg %p120
      %p274 = pneg %p144
      %p275 = pneg %p141
      %p276 = pneg %p165
      %p277 = pneg %p162
      %p278 = pneg %p191
      %p279 = pneg %p188
      %s280 = smul.u32 16, %s21
      %p281 = scmp.lt.s32.totalorder %s280, 15
      %s282 = scalar_select %p281, %s280, 15
      %s283 = smul.addr %s282, 8
      %s284 = scalar_lea.vmem %s6, %s283
      %s285 = smul.u32 2, %s22
      %p286 = scmp.lt.s32.totalorder %s285, 3
      %s287 = scalar_select %p286, %s285, 3
      %s288 = scalar_lea.vmem %s0, %s287
      %s289 = smul.u32 2, %s22
      %s290 = smul.u32 32, %s22
      %p291 = scmp.lt.s32.totalorder %s290, 63
      %s292 = scalar_select %p291, %s290, 63
      %s293 = smul.addr %s292, 8
      %s294 = scalar_lea.vmem %s1, %s293
      %s295 = smul.u32 32, %s22
      %s296 = smul.u32 16, %s21
      %p297 = scmp.lt.s32.totalorder %s296, 15
      %s298 = scalar_select %p297, %s296, 15
      %s299 = smul.addr %s298, 8
      %s300 = scalar_lea.vmem %s2, %s299
      %s301 = smul.u32 16, %s21
      %s302 = smul.u32 16, %s21
      %p303 = scmp.lt.s32.totalorder %s302, 15
      %s304 = scalar_select %p303, %s302, 15
      %s305 = smul.addr %s304, 8
      %s306 = scalar_lea.vmem %s6, %s305
      %s307 = smul.u32 16, %s21
      %p308 = scmp.eq.s32.totalorder %s22, 0
      // Predicated region
      $region45: #{net3d_layer_pallas.5} parent=43 // pred_check
        %p309 = pneg %p308
      $region46: #{net3d_layer_pallas.5} parent=43 // pred_check_branch
        %311 = sbr.rel (%p309) target = $region48
      $region47: #{net3d_layer_pallas.5} parent=43 // pred_region
        %312 = vst [vmem:[#allocation2] sm:$0xff] 0.0
        %313 = vst [vmem:[#allocation2 + $0x8] sm:$0xff] 0.0
        %314 = vst [vmem:[#allocation2 + $0x10] sm:$0xff] 0.0
        %315 = vst [vmem:[#allocation2 + $0x18] sm:$0xff] 0.0
        %316 = vst [vmem:[#allocation2 + $0x20] sm:$0xff] 0.0
        %317 = vst [vmem:[#allocation2 + $0x28] sm:$0xff] 0.0
        %318 = vst [vmem:[#allocation2 + $0x30] sm:$0xff] 0.0
        %319 = vst [vmem:[#allocation2 + $0x38] sm:$0xff] 0.0
        %320 = vst [vmem:[#allocation2 + $0x40] sm:$0xff] 0.0
        %321 = vst [vmem:[#allocation2 + $0x48] sm:$0xff] 0.0
        %322 = vst [vmem:[#allocation2 + $0x50] sm:$0xff] 0.0
        %323 = vst [vmem:[#allocation2 + $0x58] sm:$0xff] 0.0
        %324 = vst [vmem:[#allocation2 + $0x60] sm:$0xff] 0.0
        %325 = vst [vmem:[#allocation2 + $0x68] sm:$0xff] 0.0
        %326 = vst [vmem:[#allocation2 + $0x70] sm:$0xff] 0.0
        %327 = vst [vmem:[#allocation2 + $0x78] sm:$0xff] 0.0
      $region48: #{net3d_layer_pallas.5} parent=43 // pred_fallthru
        _
      %s328 = smul.u32 %s21, 128
      %v329 = vlaneseq
      %v330 = vshrl.u32 %v329, 7
      %v331 = vadd.s32 %v330, 8
      %v332 = vadd.s32 %v330, 16
      %v333 = vadd.s32 %v330, 24
      %v334 = vadd.s32 %v330, 32
      %v335 = vadd.s32 %v330, 40
      %v336 = vadd.s32 %v330, 48
      %v337 = vadd.s32 %v330, 56
      %v338 = vadd.s32 %v330, 64
      %v339 = vadd.s32 %v330, 72
      %v340 = vadd.s32 %v330, 80
      %v341 = vadd.s32 %v330, 88
      %v342 = vadd.s32 %v330, 96
      %v343 = vadd.s32 %v330, 104
      %v344 = vadd.s32 %v330, 112
      %v345 = vadd.s32 %v330, 120
      %v346 = vstv %s328
      %v347 = vadd.s32 %v346, %v330
      %v348 = vadd.s32 %v346, %v331
      %v349 = vadd.s32 %v346, %v332
      %v350 = vadd.s32 %v346, %v333
      %v351 = vadd.s32 %v346, %v334
      %v352 = vadd.s32 %v346, %v335
      %v353 = vadd.s32 %v346, %v336
      %v354 = vadd.s32 %v346, %v337
      %v355 = vadd.s32 %v346, %v338
      %v356 = vadd.s32 %v346, %v339
      %v357 = vadd.s32 %v346, %v340
      %v358 = vadd.s32 %v346, %v341
      %v359 = vadd.s32 %v346, %v342
      %v360 = vadd.s32 %v346, %v343
      %v361 = vadd.s32 %v346, %v344
      %v362 = vadd.s32 %v346, %v345
      %v363 = vld [vmem:[%s288] sm:$0x3]
      %v364 = vperm.slane %v363, 0
      %v365 = vperm.slane %v363, 1
      %vm366 = vcmp.eq.s32.totalorder %v347, %v364
      %vm367 = vcmp.eq.s32.totalorder %v347, %v365
      %vm368 = vcmp.eq.s32.totalorder %v348, %v364
      %vm369 = vcmp.eq.s32.totalorder %v348, %v365
      %vm370 = vcmp.eq.s32.totalorder %v349, %v364
      %vm371 = vcmp.eq.s32.totalorder %v349, %v365
      %vm372 = vcmp.eq.s32.totalorder %v350, %v364
      %vm373 = vcmp.eq.s32.totalorder %v350, %v365
      %vm374 = vcmp.eq.s32.totalorder %v351, %v364
      %vm375 = vcmp.eq.s32.totalorder %v351, %v365
      %vm376 = vcmp.eq.s32.totalorder %v352, %v364
      %vm377 = vcmp.eq.s32.totalorder %v352, %v365
      %vm378 = vcmp.eq.s32.totalorder %v353, %v364
      %vm379 = vcmp.eq.s32.totalorder %v353, %v365
      %vm380 = vcmp.eq.s32.totalorder %v354, %v364
      %vm381 = vcmp.eq.s32.totalorder %v354, %v365
      %vm382 = vcmp.eq.s32.totalorder %v355, %v364
      %vm383 = vcmp.eq.s32.totalorder %v355, %v365
      %vm384 = vcmp.eq.s32.totalorder %v356, %v364
      %vm385 = vcmp.eq.s32.totalorder %v356, %v365
      %vm386 = vcmp.eq.s32.totalorder %v357, %v364
      %vm387 = vcmp.eq.s32.totalorder %v357, %v365
      %vm388 = vcmp.eq.s32.totalorder %v358, %v364
      %vm389 = vcmp.eq.s32.totalorder %v358, %v365
      %vm390 = vcmp.eq.s32.totalorder %v359, %v364
      %vm391 = vcmp.eq.s32.totalorder %v359, %v365
      %vm392 = vcmp.eq.s32.totalorder %v360, %v364
      %vm393 = vcmp.eq.s32.totalorder %v360, %v365
      %vm394 = vcmp.eq.s32.totalorder %v361, %v364
      %vm395 = vcmp.eq.s32.totalorder %v361, %v365
      %vm396 = vcmp.eq.s32.totalorder %v362, %v364
      %vm397 = vcmp.eq.s32.totalorder %v362, %v365
      %v398 = vsel %vm366, 1, 0
      %v399 = vsel %vm367, 1, 0
      %v400 = vsel %vm368, 1, 0
      %v401 = vsel %vm369, 1, 0
      %v402 = vsel %vm370, 1, 0
      %v403 = vsel %vm371, 1, 0
      %v404 = vsel %vm372, 1, 0
      %v405 = vsel %vm373, 1, 0
      %v406 = vsel %vm374, 1, 0
      %v407 = vsel %vm375, 1, 0
      %v408 = vsel %vm376, 1, 0
      %v409 = vsel %vm377, 1, 0
      %v410 = vsel %vm378, 1, 0
      %v411 = vsel %vm379, 1, 0
      %v412 = vsel %vm380, 1, 0
      %v413 = vsel %vm381, 1, 0
      %v414 = vsel %vm382, 1, 0
      %v415 = vsel %vm383, 1, 0
      %v416 = vsel %vm384, 1, 0
      %v417 = vsel %vm385, 1, 0
      %v418 = vsel %vm386, 1, 0
      %v419 = vsel %vm387, 1, 0
      %v420 = vsel %vm388, 1, 0
      %v421 = vsel %vm389, 1, 0
      %v422 = vsel %vm390, 1, 0
      %v423 = vsel %vm391, 1, 0
      %v424 = vsel %vm392, 1, 0
      %v425 = vsel %vm393, 1, 0
      %v426 = vsel %vm394, 1, 0
      %v427 = vsel %vm395, 1, 0
      %v428 = vsel %vm396, 1, 0
      %v429 = vsel %vm397, 1, 0
      %v430 = vcvt.s32.f32 %v398
      %v431 = vcvt.s32.f32 %v399
      %v432 = vcvt.s32.f32 %v400
      %v433 = vcvt.s32.f32 %v401
      %v434 = vcvt.s32.f32 %v402
      %v435 = vcvt.s32.f32 %v403
      %v436 = vcvt.s32.f32 %v404
      %v437 = vcvt.s32.f32 %v405
      %v438 = vcvt.s32.f32 %v406
      %v439 = vcvt.s32.f32 %v407
      %v440 = vcvt.s32.f32 %v408
      %v441 = vcvt.s32.f32 %v409
      %v442 = vcvt.s32.f32 %v410
      %v443 = vcvt.s32.f32 %v411
      %v444 = vcvt.s32.f32 %v412
      %v445 = vcvt.s32.f32 %v413
      %v446 = vcvt.s32.f32 %v414
      %v447 = vcvt.s32.f32 %v415
      %v448 = vcvt.s32.f32 %v416
      %v449 = vcvt.s32.f32 %v417
      %v450 = vcvt.s32.f32 %v418
      %v451 = vcvt.s32.f32 %v419
      %v452 = vcvt.s32.f32 %v420
      %v453 = vcvt.s32.f32 %v421
      %v454 = vcvt.s32.f32 %v422
      %v455 = vcvt.s32.f32 %v423
      %v456 = vcvt.s32.f32 %v424
      %v457 = vcvt.s32.f32 %v425
      %v458 = vcvt.s32.f32 %v426
      %v459 = vcvt.s32.f32 %v427
      %v460 = vcvt.s32.f32 %v428
      %v461 = vcvt.s32.f32 %v429
      %v462 = vld [vmem:[#allocation2] sm:$0xff]
      %v463 = vld [vmem:[#allocation2 + $0x8] sm:$0xff]
      %v464 = vld [vmem:[#allocation2 + $0x10] sm:$0xff]
      %v465 = vld [vmem:[#allocation2 + $0x18] sm:$0xff]
      %v466 = vld [vmem:[#allocation2 + $0x20] sm:$0xff]
      %v467 = vld [vmem:[#allocation2 + $0x28] sm:$0xff]
      %v468 = vld [vmem:[#allocation2 + $0x30] sm:$0xff]
      %v469 = vld [vmem:[#allocation2 + $0x38] sm:$0xff]
      %v470 = vld [vmem:[#allocation2 + $0x40] sm:$0xff]
      %v471 = vld [vmem:[#allocation2 + $0x48] sm:$0xff]
      %v472 = vld [vmem:[#allocation2 + $0x50] sm:$0xff]
      %v473 = vld [vmem:[#allocation2 + $0x58] sm:$0xff]
      %v474 = vld [vmem:[#allocation2 + $0x60] sm:$0xff]
      %v475 = vld [vmem:[#allocation2 + $0x68] sm:$0xff]
      %v476 = vld [vmem:[#allocation2 + $0x70] sm:$0xff]
      %v477 = vld [vmem:[#allocation2 + $0x78] sm:$0xff]
      %v478 = vld [vmem:[%s294] sm:$0xff]
      %v479 = vld [vmem:[%s294 + $0x8] sm:$0xff]
      %v480 = vld [vmem:[%s294 + $0x10] sm:$0xff]
      %v481 = vld [vmem:[%s294 + $0x18] sm:$0xff]
      %v482 = vld [vmem:[%s294 + $0x20] sm:$0xff]
      %v483 = vld [vmem:[%s294 + $0x28] sm:$0xff]
      %v484 = vld [vmem:[%s294 + $0x30] sm:$0xff]
      %v485 = vld [vmem:[%s294 + $0x38] sm:$0xff]
      %v486 = vld [vmem:[%s294 + $0x40] sm:$0xff]
      %v487 = vld [vmem:[%s294 + $0x48] sm:$0xff]
      %v488 = vld [vmem:[%s294 + $0x50] sm:$0xff]
      %v489 = vld [vmem:[%s294 + $0x58] sm:$0xff]
      %v490 = vld [vmem:[%s294 + $0x60] sm:$0xff]
      %v491 = vld [vmem:[%s294 + $0x68] sm:$0xff]
      %v492 = vld [vmem:[%s294 + $0x70] sm:$0xff]
      %v493 = vld [vmem:[%s294 + $0x78] sm:$0xff]
      %v494 = vld [vmem:[%s294 + $0x80] sm:$0xff]
      %v495 = vld [vmem:[%s294 + $0x88] sm:$0xff]
      %v496 = vld [vmem:[%s294 + $0x90] sm:$0xff]
      %v497 = vld [vmem:[%s294 + $0x98] sm:$0xff]
      %v498 = vld [vmem:[%s294 + $0xa0] sm:$0xff]
      %v499 = vld [vmem:[%s294 + $0xa8] sm:$0xff]
      %v500 = vld [vmem:[%s294 + $0xb0] sm:$0xff]
      %v501 = vld [vmem:[%s294 + $0xb8] sm:$0xff]
      %v502 = vld [vmem:[%s294 + $0xc0] sm:$0xff]
      %v503 = vld [vmem:[%s294 + $0xc8] sm:$0xff]
      %v504 = vld [vmem:[%s294 + $0xd0] sm:$0xff]
      %v505 = vld [vmem:[%s294 + $0xd8] sm:$0xff]
      %v506 = vld [vmem:[%s294 + $0xe0] sm:$0xff]
      %v507 = vld [vmem:[%s294 + $0xe8] sm:$0xff]
      %v508 = vld [vmem:[%s294 + $0xf0] sm:$0xff]
      %v509 = vld [vmem:[%s294 + $0xf8] sm:$0xff]
      %510 = vmatpush.msra.mxu0 %v493
      %511 = vmatpush.msra.mxu0 %v492
      %512 = vmatpush.msra.mxu0 %v491
      %513 = vmatpush.msra.mxu0 %v490
      %514 = vmatpush.msra.mxu0 %v489
      %515 = vmatpush.msra.mxu0 %v488
      %516 = vmatpush.msra.mxu0 %v487
      %517 = vmatpush.msra.mxu0 %v486
      %518 = vmatpush.msra.mxu0 %v485
      %519 = vmatpush.msra.mxu0 %v484
      %520 = vmatpush.msra.mxu0 %v483
      %521 = vmatpush.msra.mxu0 %v482
      %522 = vmatpush.msra.mxu0 %v481
      %523 = vmatpush.msra.mxu0 %v480
      %524 = vmatpush.msra.mxu0 %v479
      %525 = vmatpush.msra.mxu0 %v478
      %526 = vmatmul.f32.gmra.mxu0 %v430
      %v527 = vpop.f32.mrf.mxu0
      %v528 = vadd.f32 0.0, %v527
      %529 = vmatmul.f32.gmra.mxu0 %v432
      %v530 = vpop.f32.mrf.mxu0
      %v531 = vadd.f32 0.0, %v530
      %532 = vmatmul.f32.gmra.mxu0 %v434
      %v533 = vpop.f32.mrf.mxu0
      %v534 = vadd.f32 0.0, %v533
      %535 = vmatmul.f32.gmra.mxu0 %v436
      %v536 = vpop.f32.mrf.mxu0
      %v537 = vadd.f32 0.0, %v536
      %538 = vmatmul.f32.gmra.mxu0 %v438
      %v539 = vpop.f32.mrf.mxu0
      %v540 = vadd.f32 0.0, %v539
      %541 = vmatmul.f32.gmra.mxu0 %v440
      %v542 = vpop.f32.mrf.mxu0
      %v543 = vadd.f32 0.0, %v542
      %544 = vmatmul.f32.gmra.mxu0 %v442
      %v545 = vpop.f32.mrf.mxu0
      %v546 = vadd.f32 0.0, %v545
      %547 = vmatmul.f32.gmra.mxu0 %v444
      %v548 = vpop.f32.mrf.mxu0
      %v549 = vadd.f32 0.0, %v548
      %550 = vmatmul.f32.gmra.mxu0 %v446
      %v551 = vpop.f32.mrf.mxu0
      %v552 = vadd.f32 0.0, %v551
      %553 = vmatmul.f32.gmra.mxu0 %v448
      %v554 = vpop.f32.mrf.mxu0
      %v555 = vadd.f32 0.0, %v554
      %556 = vmatmul.f32.gmra.mxu0 %v450
      %v557 = vpop.f32.mrf.mxu0
      %v558 = vadd.f32 0.0, %v557
      %559 = vmatmul.f32.gmra.mxu0 %v452
      %v560 = vpop.f32.mrf.mxu0
      %v561 = vadd.f32 0.0, %v560
      %562 = vmatmul.f32.gmra.mxu0 %v454
      %v563 = vpop.f32.mrf.mxu0
      %v564 = vadd.f32 0.0, %v563
      %565 = vmatmul.f32.gmra.mxu0 %v456
      %v566 = vpop.f32.mrf.mxu0
      %v567 = vadd.f32 0.0, %v566
      %568 = vmatmul.f32.gmra.mxu0 %v458
      %v569 = vpop.f32.mrf.mxu0
      %v570 = vadd.f32 0.0, %v569
      %571 = vmatmul.f32.gmra.mxu0 %v460
      %v572 = vpop.f32.mrf.mxu0
      %v573 = vadd.f32 0.0, %v572
      %574 = vdwg.mxu0
      %575 = vmatpush.msra.mxu0 %v509
      %576 = vmatpush.msra.mxu0 %v508
      %577 = vmatpush.msra.mxu0 %v507
      %578 = vmatpush.msra.mxu0 %v506
      %579 = vmatpush.msra.mxu0 %v505
      %580 = vmatpush.msra.mxu0 %v504
      %581 = vmatpush.msra.mxu0 %v503
      %582 = vmatpush.msra.mxu0 %v502
      %583 = vmatpush.msra.mxu0 %v501
      %584 = vmatpush.msra.mxu0 %v500
      %585 = vmatpush.msra.mxu0 %v499
      %586 = vmatpush.msra.mxu0 %v498
      %587 = vmatpush.msra.mxu0 %v497
      %588 = vmatpush.msra.mxu0 %v496
      %589 = vmatpush.msra.mxu0 %v495
      %590 = vmatpush.msra.mxu0 %v494
      %591 = vmatmul.f32.gmra.mxu0 %v431
      %v592 = vpop.f32.mrf.mxu0
      %v593 = vadd.f32 %v528, %v592
      %594 = vmatmul.f32.gmra.mxu0 %v433
      %v595 = vpop.f32.mrf.mxu0
      %v596 = vadd.f32 %v531, %v595
      %597 = vmatmul.f32.gmra.mxu0 %v435
      %v598 = vpop.f32.mrf.mxu0
      %v599 = vadd.f32 %v534, %v598
      %600 = vmatmul.f32.gmra.mxu0 %v437
      %v601 = vpop.f32.mrf.mxu0
      %v602 = vadd.f32 %v537, %v601
      %603 = vmatmul.f32.gmra.mxu0 %v439
      %v604 = vpop.f32.mrf.mxu0
      %v605 = vadd.f32 %v540, %v604
      %606 = vmatmul.f32.gmra.mxu0 %v441
      %v607 = vpop.f32.mrf.mxu0
      %v608 = vadd.f32 %v543, %v607
      %609 = vmatmul.f32.gmra.mxu0 %v443
      %v610 = vpop.f32.mrf.mxu0
      %v611 = vadd.f32 %v546, %v610
      %612 = vmatmul.f32.gmra.mxu0 %v445
      %v613 = vpop.f32.mrf.mxu0
      %v614 = vadd.f32 %v549, %v613
      %615 = vmatmul.f32.gmra.mxu0 %v447
      %v616 = vpop.f32.mrf.mxu0
      %v617 = vadd.f32 %v552, %v616
      %618 = vmatmul.f32.gmra.mxu0 %v449
      %v619 = vpop.f32.mrf.mxu0
      %v620 = vadd.f32 %v555, %v619
      %621 = vmatmul.f32.gmra.mxu0 %v451
      %v622 = vpop.f32.mrf.mxu0
      %v623 = vadd.f32 %v558, %v622
      %624 = vmatmul.f32.gmra.mxu0 %v453
      %v625 = vpop.f32.mrf.mxu0
      %v626 = vadd.f32 %v561, %v625
      %627 = vmatmul.f32.gmra.mxu0 %v455
      %v628 = vpop.f32.mrf.mxu0
      %v629 = vadd.f32 %v564, %v628
      %630 = vmatmul.f32.gmra.mxu0 %v457
      %v631 = vpop.f32.mrf.mxu0
      %v632 = vadd.f32 %v567, %v631
      %633 = vmatmul.f32.gmra.mxu0 %v459
      %v634 = vpop.f32.mrf.mxu0
      %v635 = vadd.f32 %v570, %v634
      %636 = vmatmul.f32.gmra.mxu0 %v461
      %v637 = vpop.f32.mrf.mxu0
      %v638 = vadd.f32 %v573, %v637
      %639 = vdwg.mxu0
      %v640 = vadd.f32 %v462, %v593
      %v641 = vadd.f32 %v463, %v596
      %v642 = vadd.f32 %v464, %v599
      %v643 = vadd.f32 %v465, %v602
      %v644 = vadd.f32 %v466, %v605
      %v645 = vadd.f32 %v467, %v608
      %v646 = vadd.f32 %v468, %v611
      %v647 = vadd.f32 %v469, %v614
      %v648 = vadd.f32 %v470, %v617
      %v649 = vadd.f32 %v471, %v620
      %v650 = vadd.f32 %v472, %v623
      %v651 = vadd.f32 %v473, %v626
      %v652 = vadd.f32 %v474, %v629
      %v653 = vadd.f32 %v475, %v632
      %v654 = vadd.f32 %v476, %v635
      %v655 = vadd.f32 %v477, %v638
      %656 = vst [vmem:[#allocation2] sm:$0xff] %v640
      %657 = vst [vmem:[#allocation2 + $0x8] sm:$0xff] %v641
      %658 = vst [vmem:[#allocation2 + $0x10] sm:$0xff] %v642
      %659 = vst [vmem:[#allocation2 + $0x18] sm:$0xff] %v643
      %660 = vst [vmem:[#allocation2 + $0x20] sm:$0xff] %v644
      %661 = vst [vmem:[#allocation2 + $0x28] sm:$0xff] %v645
      %662 = vst [vmem:[#allocation2 + $0x30] sm:$0xff] %v646
      %663 = vst [vmem:[#allocation2 + $0x38] sm:$0xff] %v647
      %664 = vst [vmem:[#allocation2 + $0x40] sm:$0xff] %v648
      %665 = vst [vmem:[#allocation2 + $0x48] sm:$0xff] %v649
      %666 = vst [vmem:[#allocation2 + $0x50] sm:$0xff] %v650
      %667 = vst [vmem:[#allocation2 + $0x58] sm:$0xff] %v651
      %668 = vst [vmem:[#allocation2 + $0x60] sm:$0xff] %v652
      %669 = vst [vmem:[#allocation2 + $0x68] sm:$0xff] %v653
      %670 = vst [vmem:[#allocation2 + $0x70] sm:$0xff] %v654
      %671 = vst [vmem:[#allocation2 + $0x78] sm:$0xff] %v655
      %p672 = scmp.eq.s32.totalorder %s22, 1
      // Predicated region
      $region49: #{net3d_layer_pallas.5} parent=43 // pred_check
        %p673 = pneg %p672
      $region50: #{net3d_layer_pallas.5} parent=43 // pred_check_branch
        %675 = sbr.rel (%p673) target = $region52
      $region51: #{net3d_layer_pallas.5} parent=43 // pred_region
        %v676 = vld [vmem:[%s300] sm:$0xff]
        %v677 = vld [vmem:[%s300 + $0x8] sm:$0xff]
        %v678 = vld [vmem:[%s300 + $0x10] sm:$0xff]
        %v679 = vld [vmem:[%s300 + $0x18] sm:$0xff]
        %v680 = vld [vmem:[%s300 + $0x20] sm:$0xff]
        %v681 = vld [vmem:[%s300 + $0x28] sm:$0xff]
        %v682 = vld [vmem:[%s300 + $0x30] sm:$0xff]
        %v683 = vld [vmem:[%s300 + $0x38] sm:$0xff]
        %v684 = vld [vmem:[%s300 + $0x40] sm:$0xff]
        %v685 = vld [vmem:[%s300 + $0x48] sm:$0xff]
        %v686 = vld [vmem:[%s300 + $0x50] sm:$0xff]
        %v687 = vld [vmem:[%s300 + $0x58] sm:$0xff]
        %v688 = vld [vmem:[%s300 + $0x60] sm:$0xff]
        %v689 = vld [vmem:[%s300 + $0x68] sm:$0xff]
        %v690 = vld [vmem:[%s300 + $0x70] sm:$0xff]
        %v691 = vld [vmem:[%s300 + $0x78] sm:$0xff]
        %v692 = vld [vmem:[#allocation2] sm:$0xff]
        %v693 = vld [vmem:[#allocation2 + $0x8] sm:$0xff]
        %v694 = vld [vmem:[#allocation2 + $0x10] sm:$0xff]
        %v695 = vld [vmem:[#allocation2 + $0x18] sm:$0xff]
        %v696 = vld [vmem:[#allocation2 + $0x20] sm:$0xff]
        %v697 = vld [vmem:[#allocation2 + $0x28] sm:$0xff]
        %v698 = vld [vmem:[#allocation2 + $0x30] sm:$0xff]
        %v699 = vld [vmem:[#allocation2 + $0x38] sm:$0xff]
        %v700 = vld [vmem:[#allocation2 + $0x40] sm:$0xff]
        %v701 = vld [vmem:[#allocation2 + $0x48] sm:$0xff]
        %v702 = vld [vmem:[#allocation2 + $0x50] sm:$0xff]
        %v703 = vld [vmem:[#allocation2 + $0x58] sm:$0xff]
        %v704 = vld [vmem:[#allocation2 + $0x60] sm:$0xff]
        %v705 = vld [vmem:[#allocation2 + $0x68] sm:$0xff]
        %v706 = vld [vmem:[#allocation2 + $0x70] sm:$0xff]
        %v707 = vld [vmem:[#allocation2 + $0x78] sm:$0xff]
        %v708 = vadd.f32 %v692, %v676
        %v709 = vadd.f32 %v693, %v677
        %v710 = vadd.f32 %v694, %v678
        %v711 = vadd.f32 %v695, %v679
        %v712 = vadd.f32 %v696, %v680
        %v713 = vadd.f32 %v697, %v681
        %v714 = vadd.f32 %v698, %v682
        %v715 = vadd.f32 %v699, %v683
        %v716 = vadd.f32 %v700, %v684
        %v717 = vadd.f32 %v701, %v685
        %v718 = vadd.f32 %v702, %v686
        %v719 = vadd.f32 %v703, %v687
        %v720 = vadd.f32 %v704, %v688
        %v721 = vadd.f32 %v705, %v689
        %v722 = vadd.f32 %v706, %v690
        %v723 = vadd.f32 %v707, %v691
        %v724 = vld [vmem:[%s3] sm:$0xff]
        %v725 = vld [vmem:[%s3 + $0x8] sm:$0xff]
        %v726 = vld [vmem:[%s3 + $0x10] sm:$0xff]
        %v727 = vld [vmem:[%s3 + $0x18] sm:$0xff]
        %v728 = vld [vmem:[%s3 + $0x20] sm:$0xff]
        %v729 = vld [vmem:[%s3 + $0x28] sm:$0xff]
        %v730 = vld [vmem:[%s3 + $0x30] sm:$0xff]
        %v731 = vld [vmem:[%s3 + $0x38] sm:$0xff]
        %v732 = vld [vmem:[%s3 + $0x40] sm:$0xff]
        %v733 = vld [vmem:[%s3 + $0x48] sm:$0xff]
        %v734 = vld [vmem:[%s3 + $0x50] sm:$0xff]
        %v735 = vld [vmem:[%s3 + $0x58] sm:$0xff]
        %v736 = vld [vmem:[%s3 + $0x60] sm:$0xff]
        %v737 = vld [vmem:[%s3 + $0x68] sm:$0xff]
        %v738 = vld [vmem:[%s3 + $0x70] sm:$0xff]
        %v739 = vld [vmem:[%s3 + $0x78] sm:$0xff]
        %v740 = vld [vmem:[%s5] sm:$0x1]
        %v741 = vperm.slane %v740, 0
        %742 = vmatpush.msra.mxu0 %v739
        %743 = vmatpush.msra.mxu0 %v738
        %744 = vmatpush.msra.mxu0 %v737
        %745 = vmatpush.msra.mxu0 %v736
        %746 = vmatpush.msra.mxu0 %v735
        %747 = vmatpush.msra.mxu0 %v734
        %748 = vmatpush.msra.mxu0 %v733
        %749 = vmatpush.msra.mxu0 %v732
        %750 = vmatpush.msra.mxu0 %v731
        %751 = vmatpush.msra.mxu0 %v730
        %752 = vmatpush.msra.mxu0 %v729
        %753 = vmatpush.msra.mxu0 %v728
        %754 = vmatpush.msra.mxu0 %v727
        %755 = vmatpush.msra.mxu0 %v726
        %756 = vmatpush.msra.mxu0 %v725
        %757 = vmatpush.msra.mxu0 %v724
        %758 = vmatmul.f32.gmra.mxu0 %v708
        %v759 = vpop.f32.mrf.mxu0
        %v760 = vadd.f32 %v741, %v759
        %761 = vmatmul.f32.gmra.mxu0 %v709
        %v762 = vpop.f32.mrf.mxu0
        %v763 = vadd.f32 %v741, %v762
        %764 = vmatmul.f32.gmra.mxu0 %v710
        %v765 = vpop.f32.mrf.mxu0
        %v766 = vadd.f32 %v741, %v765
        %767 = vmatmul.f32.gmra.mxu0 %v711
        %v768 = vpop.f32.mrf.mxu0
        %v769 = vadd.f32 %v741, %v768
        %770 = vmatmul.f32.gmra.mxu0 %v712
        %v771 = vpop.f32.mrf.mxu0
        %v772 = vadd.f32 %v741, %v771
        %773 = vmatmul.f32.gmra.mxu0 %v713
        %v774 = vpop.f32.mrf.mxu0
        %v775 = vadd.f32 %v741, %v774
        %776 = vmatmul.f32.gmra.mxu0 %v714
        %v777 = vpop.f32.mrf.mxu0
        %v778 = vadd.f32 %v741, %v777
        %779 = vmatmul.f32.gmra.mxu0 %v715
        %v780 = vpop.f32.mrf.mxu0
        %v781 = vadd.f32 %v741, %v780
        %782 = vmatmul.f32.gmra.mxu0 %v716
        %v783 = vpop.f32.mrf.mxu0
        %v784 = vadd.f32 %v741, %v783
        %785 = vmatmul.f32.gmra.mxu0 %v717
        %v786 = vpop.f32.mrf.mxu0
        %v787 = vadd.f32 %v741, %v786
        %788 = vmatmul.f32.gmra.mxu0 %v718
        %v789 = vpop.f32.mrf.mxu0
        %v790 = vadd.f32 %v741, %v789
        %791 = vmatmul.f32.gmra.mxu0 %v719
        %v792 = vpop.f32.mrf.mxu0
        %v793 = vadd.f32 %v741, %v792
        %794 = vmatmul.f32.gmra.mxu0 %v720
        %v795 = vpop.f32.mrf.mxu0
        %v796 = vadd.f32 %v741, %v795
        %797 = vmatmul.f32.gmra.mxu0 %v721
        %v798 = vpop.f32.mrf.mxu0
        %v799 = vadd.f32 %v741, %v798
        %800 = vmatmul.f32.gmra.mxu0 %v722
        %v801 = vpop.f32.mrf.mxu0
        %v802 = vadd.f32 %v741, %v801
        %803 = vmatmul.f32.gmra.mxu0 %v723
        %v804 = vpop.f32.mrf.mxu0
        %v805 = vadd.f32 %v741, %v804
        %806 = vdwg.mxu0
        %v807 = vmax.f32 %v760, 0.0
        %v808 = vmax.f32 %v763, 0.0
        %v809 = vmax.f32 %v766, 0.0
        %v810 = vmax.f32 %v769, 0.0
        %v811 = vmax.f32 %v772, 0.0
        %v812 = vmax.f32 %v775, 0.0
        %v813 = vmax.f32 %v778, 0.0
        %v814 = vmax.f32 %v781, 0.0
        %v815 = vmax.f32 %v784, 0.0
        %v816 = vmax.f32 %v787, 0.0
        %v817 = vmax.f32 %v790, 0.0
        %v818 = vmax.f32 %v793, 0.0
        %v819 = vmax.f32 %v796, 0.0
        %v820 = vmax.f32 %v799, 0.0
        %v821 = vmax.f32 %v802, 0.0
        %v822 = vmax.f32 %v805, 0.0
        %v823 = vld [vmem:[%s4] sm:$0xff]
        %v824 = vld [vmem:[%s4 + $0x8] sm:$0xff]
        %v825 = vld [vmem:[%s4 + $0x10] sm:$0xff]
        %v826 = vld [vmem:[%s4 + $0x18] sm:$0xff]
        %v827 = vld [vmem:[%s4 + $0x20] sm:$0xff]
        %v828 = vld [vmem:[%s4 + $0x28] sm:$0xff]
        %v829 = vld [vmem:[%s4 + $0x30] sm:$0xff]
        %v830 = vld [vmem:[%s4 + $0x38] sm:$0xff]
        %v831 = vld [vmem:[%s4 + $0x40] sm:$0xff]
        %v832 = vld [vmem:[%s4 + $0x48] sm:$0xff]
        %v833 = vld [vmem:[%s4 + $0x50] sm:$0xff]
        %v834 = vld [vmem:[%s4 + $0x58] sm:$0xff]
        %v835 = vld [vmem:[%s4 + $0x60] sm:$0xff]
        %v836 = vld [vmem:[%s4 + $0x68] sm:$0xff]
        %v837 = vld [vmem:[%s4 + $0x70] sm:$0xff]
        %v838 = vld [vmem:[%s4 + $0x78] sm:$0xff]
        %v839 = vld [vmem:[%s5 + $0x1] sm:$0x1]
        %v840 = vperm.slane %v839, 0
        %841 = vmatpush.msra.mxu0 %v838
        %842 = vmatpush.msra.mxu0 %v837
        %843 = vmatpush.msra.mxu0 %v836
        %844 = vmatpush.msra.mxu0 %v835
        %845 = vmatpush.msra.mxu0 %v834
        %846 = vmatpush.msra.mxu0 %v833
        %847 = vmatpush.msra.mxu0 %v832
        %848 = vmatpush.msra.mxu0 %v831
        %849 = vmatpush.msra.mxu0 %v830
        %850 = vmatpush.msra.mxu0 %v829
        %851 = vmatpush.msra.mxu0 %v828
        %852 = vmatpush.msra.mxu0 %v827
        %853 = vmatpush.msra.mxu0 %v826
        %854 = vmatpush.msra.mxu0 %v825
        %855 = vmatpush.msra.mxu0 %v824
        %856 = vmatpush.msra.mxu0 %v823
        %857 = vmatmul.f32.gmra.mxu0 %v807
        %v858 = vpop.f32.mrf.mxu0
        %v859 = vadd.f32 %v840, %v858
        %860 = vmatmul.f32.gmra.mxu0 %v808
        %v861 = vpop.f32.mrf.mxu0
        %v862 = vadd.f32 %v840, %v861
        %863 = vmatmul.f32.gmra.mxu0 %v809
        %v864 = vpop.f32.mrf.mxu0
        %v865 = vadd.f32 %v840, %v864
        %866 = vmatmul.f32.gmra.mxu0 %v810
        %v867 = vpop.f32.mrf.mxu0
        %v868 = vadd.f32 %v840, %v867
        %869 = vmatmul.f32.gmra.mxu0 %v811
        %v870 = vpop.f32.mrf.mxu0
        %v871 = vadd.f32 %v840, %v870
        %872 = vmatmul.f32.gmra.mxu0 %v812
        %v873 = vpop.f32.mrf.mxu0
        %v874 = vadd.f32 %v840, %v873
        %875 = vmatmul.f32.gmra.mxu0 %v813
        %v876 = vpop.f32.mrf.mxu0
        %v877 = vadd.f32 %v840, %v876
        %878 = vmatmul.f32.gmra.mxu0 %v814
        %v879 = vpop.f32.mrf.mxu0
        %v880 = vadd.f32 %v840, %v879
        %881 = vmatmul.f32.gmra.mxu0 %v815
        %v882 = vpop.f32.mrf.mxu0
        %v883 = vadd.f32 %v840, %v882
        %884 = vmatmul.f32.gmra.mxu0 %v816
        %v885 = vpop.f32.mrf.mxu0
        %v886 = vadd.f32 %v840, %v885
        %887 = vmatmul.f32.gmra.mxu0 %v817
        %v888 = vpop.f32.mrf.mxu0
        %v889 = vadd.f32 %v840, %v888
        %890 = vmatmul.f32.gmra.mxu0 %v818
        %v891 = vpop.f32.mrf.mxu0
        %v892 = vadd.f32 %v840, %v891
        %893 = vmatmul.f32.gmra.mxu0 %v819
        %v894 = vpop.f32.mrf.mxu0
        %v895 = vadd.f32 %v840, %v894
        %896 = vmatmul.f32.gmra.mxu0 %v820
        %v897 = vpop.f32.mrf.mxu0
        %v898 = vadd.f32 %v840, %v897
        %899 = vmatmul.f32.gmra.mxu0 %v821
        %v900 = vpop.f32.mrf.mxu0
        %v901 = vadd.f32 %v840, %v900
        %902 = vmatmul.f32.gmra.mxu0 %v822
        %v903 = vpop.f32.mrf.mxu0
        %v904 = vadd.f32 %v840, %v903
        %905 = vdwg.mxu0
        %v906 = vadd.f32 %v859, %v676
        %v907 = vadd.f32 %v862, %v677
        %v908 = vadd.f32 %v865, %v678
        %v909 = vadd.f32 %v868, %v679
        %v910 = vadd.f32 %v871, %v680
        %v911 = vadd.f32 %v874, %v681
        %v912 = vadd.f32 %v877, %v682
        %v913 = vadd.f32 %v880, %v683
        %v914 = vadd.f32 %v883, %v684
        %v915 = vadd.f32 %v886, %v685
        %v916 = vadd.f32 %v889, %v686
        %v917 = vadd.f32 %v892, %v687
        %v918 = vadd.f32 %v895, %v688
        %v919 = vadd.f32 %v898, %v689
        %v920 = vadd.f32 %v901, %v690
        %v921 = vadd.f32 %v904, %v691
        %922 = vst [vmem:[%s306] sm:$0xff] %v906
        %923 = vst [vmem:[%s306 + $0x8] sm:$0xff] %v907
        %924 = vst [vmem:[%s306 + $0x10] sm:$0xff] %v908
        %925 = vst [vmem:[%s306 + $0x18] sm:$0xff] %v909
        %926 = vst [vmem:[%s306 + $0x20] sm:$0xff] %v910
        %927 = vst [vmem:[%s306 + $0x28] sm:$0xff] %v911
        %928 = vst [vmem:[%s306 + $0x30] sm:$0xff] %v912
        %929 = vst [vmem:[%s306 + $0x38] sm:$0xff] %v913
        %930 = vst [vmem:[%s306 + $0x40] sm:$0xff] %v914
        %931 = vst [vmem:[%s306 + $0x48] sm:$0xff] %v915
        %932 = vst [vmem:[%s306 + $0x50] sm:$0xff] %v916
        %933 = vst [vmem:[%s306 + $0x58] sm:$0xff] %v917
        %934 = vst [vmem:[%s306 + $0x60] sm:$0xff] %v918
        %935 = vst [vmem:[%s306 + $0x68] sm:$0xff] %v919
        %936 = vst [vmem:[%s306 + $0x70] sm:$0xff] %v920
        %937 = vst [vmem:[%s306 + $0x78] sm:$0xff] %v921
      $region52: #{net3d_layer_pallas.5} parent=43 // pred_fallthru
        _
      %s938 = smul.u32 16, %s21
      %p939 = scmp.lt.s32.totalorder %s938, 15
      %s940 = scalar_select %p939, %s938, 15
      %s941 = smul.addr %s940, 8
      %s942 = scalar_lea.vmem %s6, %s941
      // Predicated region
      $region53: #{net3d_layer_pallas.5} parent=43 // pred_check
        %p943 = pneg %p188
      $region54: #{net3d_layer_pallas.5} parent=43 // pred_check_branch
        %945 = sbr.rel (%p943) target = $region56
      $region55: #{net3d_layer_pallas.5} parent=43 // pred_region
        %s946 = smul.u32 16, %s21
      $region56: #{net3d_layer_pallas.5} parent=43 // pred_fallthru
        _
      // Predicated region
      $region57: #{net3d_layer_pallas.5} parent=43 // pred_check
        %p947 = pneg %p188
      $region58: #{net3d_layer_pallas.5} parent=43 // pred_check_branch
        %949 = sbr.rel (%p947) target = $region60
      $region59: #{net3d_layer_pallas.5} parent=43 // pred_region
        %s950 = smul.u32 16, %s21
        %p951 = scmp.lt.s32.totalorder %s950, 15
        %s952 = scalar_select %p951, %s950, 15
        %s953 = smul.addr %s952, 8
        %s954 = scalar_lea.vmem %s6, %s953
      $region60: #{net3d_layer_pallas.5} parent=43 // pred_fallthru
        _
    $region44: #{net3d_layer_pallas.5} parent=5 // pred_fallthru
      _
    %p955 = scmp.le.s32.totalorder 2, %s12
    // Predicated region
    $region61: #{net3d_layer_pallas.5} parent=5 // pred_check
      %p956 = pneg %p955
    $region62: #{net3d_layer_pallas.5} parent=5 // pred_check_branch
      %958 = sbr.rel (%p956) target = $region64
    $region63: #{net3d_layer_pallas.5} parent=5 // pred_region
      %s959 = ssub.s32 %s12, 2
    $region64: #{net3d_layer_pallas.5} parent=5 // pred_fallthru
      _
  $region6: #{net3d_layer_pallas.5} parent=0 // loop_footer
    %s16 = sadd.s32 1, %s12
  $region7: #{net3d_layer_pallas.5} parent=0 // loop_footer_branch
    %11 = sbr.rel target = $region3
  $region8: #{net3d_layer_pallas.5} parent=0 // loop_exit
    _

</llo_original>
